<compile_context>
chip_gen: v7x
topology: tpu7x:2x2x1
jax: 0.10.0
libtpu: 0.0.40
codegen_flags: <defaults>
</compile_context>

<pallas_src>
import functools

import jax
import jax.numpy as jnp
from jax.experimental import pallas as pl
from jax.experimental.pallas import tpu as pltpu


# ----------------------------- kernel bodies ----------------------------------


def _value_permute_outproj(xap_ref, wv_ref, bv_ref, wo_ref, bo_ref, y_ref,
                           v_sc, wv_sc, *, n_head):
    """y = permute(value(xa)) @ Wo + bo, fully fused.

    xap_ref carries xa with rows pre-permuted by the wrapper,
        xa_perm[b*A + a, :] = xa[n_head*a + b, :]        (A = S_kv // n_head)
    so the projected value satisfies
        v_sc[b*A + a, h*hd + d] = v[n_head*a + b, h*hd + d]
    and the reference's reshape/permute/reshape of v is the block transpose
        wv[h*A + a, b*hd + d] = v_sc[b*A + a, h*hd + d],
    realised with n_head^2 contiguous [A, hd] block copies into wv_sc followed by
    a single [S_kv, D] @ [D, D] MXU matmul (f32 accumulation).
    """
    s_kv, d = v_sc.shape
    a_rows = s_kv // n_head
    hd = d // n_head

    v = jnp.dot(xap_ref[...], wv_ref[...],
                preferred_element_type=jnp.float32) + bv_ref[...]
    v_sc[...] = v.astype(v_sc.dtype)          # compute-dtype scratch (bf16 default)

    for h in range(n_head):
        for b in range(n_head):
            wv_sc[h * a_rows:(h + 1) * a_rows, b * hd:(b + 1) * hd] = (
                v_sc[b * a_rows:(b + 1) * a_rows, h * hd:(h + 1) * hd])

    y = jnp.dot(wv_sc[...], wo_ref[...],
                preferred_element_type=jnp.float32) + bo_ref[...]
    y_ref[...] = y.astype(y_ref.dtype)


def _mha_fast_kernel(xap_ref, wv_ref, bv_ref, wo_ref, bo_ref, y_ref, v_sc, wv_sc,
                     *, n_head):
    """Fast path: the softmax scores never feed the returned output, so only the
    value projection + head permute + output projection are computed."""
    _value_permute_outproj(xap_ref, wv_ref, bv_ref, wo_ref, bo_ref, y_ref,
                           v_sc, wv_sc, n_head=n_head)


def _mha_scores_kernel(x_ref, xa_ref, xap_ref, wq_ref, bq_ref, wk_ref, wv_ref,
                       bv_ref, wo_ref, bo_ref, y_ref, score_ref, v_sc, wv_sc,
                       *, n_head, scale, approx_recip):
    """Faithful path: additionally emits softmax(q k^T * scale) per head exactly as
    the reference computes it (the scores stay unused by y)."""
    q = jnp.dot(x_ref[...], wq_ref[...],
                preferred_element_type=jnp.float32) + bq_ref[...]
    k = jnp.dot(xa_ref[...], wk_ref[...],
                preferred_element_type=jnp.float32)           # key has no bias
    cd = wq_ref.dtype
    q = q.astype(cd)                                          # cast once, not per head
    k = k.astype(cd)

    hd = q.shape[-1] // n_head
    for h in range(n_head):
        qk = jax.lax.dot_general(q[:, h * hd:(h + 1) * hd],
                                 k[:, h * hd:(h + 1) * hd],
                                 (((1,), (1,)), ((), ())),
                                 preferred_element_type=jnp.float32)
        s = qk * scale
        m = jnp.max(s, axis=-1, keepdims=True)
        e = jnp.exp(s - m)
        denom = jnp.sum(e, axis=-1, keepdims=True)
        if approx_recip:
            sm = e * pl.reciprocal(denom, approx=True)        # EUP slot (bf16 path)
        else:
            sm = e / denom                                    # exact (f32 verification)
        score_ref[h] = sm.astype(score_ref.dtype)             # lane-dense store

    _value_permute_outproj(xap_ref, wv_ref, bv_ref, wo_ref, bo_ref, y_ref,
                           v_sc, wv_sc, n_head=n_head)


# ----------------------------- host-side wrappers ------------------------------


def prepare_params(params, compute_dtype=jnp.bfloat16):
    """One-time weight prep (do this once and cache): transpose nn.Linear [out,in]
    weights to [in,out] and cast to the MXU compute dtype; biases stay f32 rows."""
    cd = compute_dtype
    d = params["wv"].shape[0]
    f32 = jnp.float32
    return {
        "wq_t": jnp.asarray(params["wq"]).T.astype(cd),
        "bq": jnp.asarray(params["bq"]).reshape(1, d).astype(f32),
        "wk_t": jnp.asarray(params["wk"]).T.astype(cd),
        "wv_t": jnp.asarray(params["wv"]).T.astype(cd),
        "bv": jnp.asarray(params["bv"]).reshape(1, d).astype(f32),
        "wo_t": jnp.asarray(params["wo"]).T.astype(cd),
        "bo": jnp.asarray(params["bo"]).reshape(1, d).astype(f32),
    }


@functools.partial(jax.jit,
                   static_argnames=("n_head", "return_scores", "out_dtype"))
def ait_mha_forward(x, xa, prepped, n_head, return_scores=False,
                    out_dtype=jnp.float32):
    """Pallas implementation of AITMultiHeadAttention1.forward(x, xa)."""
    S, D = x.shape
    S_kv = xa.shape[0]
    assert D % n_head == 0 and S_kv % n_head == 0
    hd = D // n_head
    a_rows = S_kv // n_head
    # NOTE: the AIT module applies scale = head_dim**-0.25 ONCE to q@k^T (net
    # 1/hd**0.25), unlike Whisper which scales q and k each; kept faithful to spec.
    scale = float(hd) ** (-0.25)
    cd = prepped["wv_t"].dtype
    approx = cd != jnp.float32
    cd_item = jnp.dtype(cd).itemsize
    out_item = jnp.dtype(out_dtype).itemsize

    # Fold the head/row permutation of the value path into the (already needed)
    # xa cast: one fused XLA pass over xa, no strided sublane reads in-kernel.
    xa_perm = (xa.reshape(a_rows, n_head, D).transpose(1, 0, 2)
               .reshape(S_kv, D).astype(cd))

    vmem = pl.BlockSpec(memory_space=pltpu.MemorySpace.VMEM)
    scratches = [pltpu.VMEM((S_kv, D), cd), pltpu.VMEM((S_kv, D), cd)]

    if not return_scores:
        flops = 4 * S_kv * D * D
        bytes_accessed = ((S_kv * D + 2 * D * D) * cd_item + 2 * D * 4
                          + S_kv * D * out_item)
        return pl.pallas_call(
            functools.partial(_mha_fast_kernel, n_head=n_head),
            out_shape=jax.ShapeDtypeStruct((S_kv, D), out_dtype),
            in_specs=[vmem] * 5,
            out_specs=vmem,
            scratch_shapes=scratches,
            cost_estimate=pl.CostEstimate(flops=flops, transcendentals=0,
                                          bytes_accessed=bytes_accessed),
        )(xa_perm, prepped["wv_t"], prepped["bv"], prepped["wo_t"], prepped["bo"])

    x_c = x.astype(cd)
    xa_c = xa.astype(cd)
    flops = (2 * S * D * D + 2 * S_kv * D * D + 2 * S_kv * D * D
             + 2 * n_head * S * S_kv * hd + 2 * S_kv * D * D)
    transcendentals = n_head * S * S_kv
    bytes_accessed = ((S + 2 * S_kv) * D * cd_item + 4 * D * D * cd_item
                      + 3 * D * 4 + S_kv * D * out_item
                      + n_head * S * S_kv * out_item)
    y, score = pl.pallas_call(
        functools.partial(_mha_scores_kernel, n_head=n_head, scale=scale,
                          approx_recip=approx),
        out_shape=(jax.ShapeDtypeStruct((S_kv, D), out_dtype),
                   jax.ShapeDtypeStruct((n_head, S, S_kv), out_dtype)),
        in_specs=[vmem] * 10,
        out_specs=(vmem, vmem),
        scratch_shapes=scratches,
        cost_estimate=pl.CostEstimate(flops=flops,
                                      transcendentals=transcendentals,
                                      bytes_accessed=bytes_accessed),
    )(x_c, xa_c, xa_perm, prepped["wq_t"], prepped["bq"], prepped["wk_t"],
      prepped["wv_t"], prepped["bv"], prepped["wo_t"], prepped["bo"])
    return y, score


# ----------------------------- reference --------------------------------------


def _reference(x, xa, params, n_head):
    S, D = x.shape
    S_kv = xa.shape[0]
    hd = D // n_head
    scale = float(hd) ** (-0.25)
    q = x @ params["wq"].T + params["bq"]
    k = xa @ params["wk"].T
    v = xa @ params["wv"].T + params["bv"]
    qh = q.reshape(S, n_head, hd).transpose(1, 0, 2)           # [H, S, hd]
    kh = k.reshape(S_kv, n_head, hd).transpose(1, 2, 0)        # [H, hd, S_kv]
    s = jnp.einsum("hsd,hdt->hst", qh, kh) * scale
    m = jnp.max(s, axis=-1, keepdims=True)
    e = jnp.exp(s - m)
    score = e / jnp.sum(e, axis=-1, keepdims=True)
    wv = v.reshape(S_kv, n_head, hd).transpose(1, 0, 2).reshape(S_kv, D)
    y = wv @ params["wo"].T + params["bo"]
    return y, score


# ----------------------------- main --------------------------------------------


def _init_linear(kw, kb, n_in, n_out, bias=True):
    bound = 1.0 / (n_in ** 0.5)
    w = jax.random.uniform(kw, (n_out, n_in), jnp.float32, -bound, bound)
    b = (jax.random.uniform(kb, (n_out,), jnp.float32, -bound, bound)
         if bias else None)
    return w, b


if __name__ == "__main__":
    # The reference module hardcodes seqlen = n_state = 384 in qkv_attention.
    n_state, n_head, seq = 384, 6, 384

    key = jax.random.PRNGKey(0)
    kq_w, kq_b, kk_w, kv_w, kv_b, ko_w, ko_b, kx, kxa = jax.random.split(key, 9)

    wq, bq = _init_linear(kq_w, kq_b, n_state, n_state, bias=True)
    wk, _ = _init_linear(kk_w, kk_w, n_state, n_state, bias=False)
    wv, bv = _init_linear(kv_w, kv_b, n_state, n_state, bias=True)
    wo, bo = _init_linear(ko_w, ko_b, n_state, n_state, bias=True)
    params = dict(wq=wq, bq=bq, wk=wk, wv=wv, bv=bv, wo=wo, bo=bo)

    x = jax.random.normal(kx, (seq, n_state), jnp.float32)
    xa = jax.random.normal(kxa, (seq, n_state), jnp.float32)

    y_ref, score_ref = _reference(x, xa, params, n_head)

    # 1) Fast path (default): dead score compute skipped, bf16 MXU operands,
    #    weights prepped once outside the jitted per-call path.
    prepped_bf16 = prepare_params(params, compute_dtype=jnp.bfloat16)
    y_fast = jax.block_until_ready(ait_mha_forward(x, xa, prepped_bf16,
                                                   n_head=n_head))
    assert jnp.allclose(y_fast, y_ref, atol=2e-2, rtol=2e-2), "fast-path y mismatch"

    # 2) Faithful path: also emits the (unused-downstream) attention scores.
    #    Run in f32 (exact softmax division) for a tight numerical check.
    prepped_f32 = prepare_params(params, compute_dtype=jnp.float32)
    y_full, score = ait_mha_forward(x, xa, prepped_f32, n_head=n_head,
                                    return_scores=True)
    y_full = jax.block_until_ready(y_full)
    score = jax.block_until_ready(score)
    assert jnp.allclose(y_full, y_ref, atol=1e-3, rtol=1e-3), "output mismatch"
    assert jnp.allclose(score, score_ref, atol=5e-3, rtol=5e-3), "score mismatch"

    print("KERNEL_OK")
</pallas_src>

<mosaic_0001>
module attributes {stable_mosaic.version = 11 : i64} {
  func.func @_mha_fast_kernel(%arg0: memref<384x384xbf16, #tpu.memory_space<vmem>>, %arg1: memref<384x384xbf16, #tpu.memory_space<vmem>>, %arg2: memref<1x384xf32, #tpu.memory_space<vmem>>, %arg3: memref<384x384xbf16, #tpu.memory_space<vmem>>, %arg4: memref<1x384xf32, #tpu.memory_space<vmem>>, %arg5: memref<384x384xf32, #tpu.memory_space<vmem>>, %arg6: memref<384x384xbf16, #tpu.memory_space<vmem>>, %arg7: memref<384x384xbf16, #tpu.memory_space<vmem>>) attributes {dimension_semantics = [], scalar_prefetch = 0 : i64, scratch_operands = 2 : i64, tpu.core_type = #tpu.core_type<tc>} {
    %c0 = arith.constant 0 : index
    %c0_0 = arith.constant 0 : index
    %0 = vector.load %arg0[%c0, %c0_0] : memref<384x384xbf16, #tpu.memory_space<vmem>>, vector<384x384xbf16>
    %c0_1 = arith.constant 0 : index
    %c0_2 = arith.constant 0 : index
    %1 = vector.load %arg1[%c0_1, %c0_2] : memref<384x384xbf16, #tpu.memory_space<vmem>>, vector<384x384xbf16>
    %cst = arith.constant dense<0.000000e+00> : vector<384x384xf32>
    %2 = tpu.matmul %0, %1, %cst {dimension_numbers = #tpu.dot_dimension_numbers<[1], [0], [0], [1], [0, 0, 1, 1], [], []>} : vector<384x384xbf16>, vector<384x384xbf16>, vector<384x384xf32> -> vector<384x384xf32>
    %c0_3 = arith.constant 0 : index
    %c0_4 = arith.constant 0 : index
    %3 = vector.load %arg2[%c0_3, %c0_4] : memref<1x384xf32, #tpu.memory_space<vmem>>, vector<1x384xf32>
    %4 = vector.broadcast %3 : vector<1x384xf32> to vector<384x384xf32>
    %5 = arith.addf %2, %4 : vector<384x384xf32>
    %6 = arith.truncf %5 : vector<384x384xf32> to vector<384x384xbf16>
    %c0_5 = arith.constant 0 : index
    %c0_6 = arith.constant 0 : index
    %7 = vector.load %arg6[%c0_5, %c0_6] : memref<384x384xbf16, #tpu.memory_space<vmem>>, vector<384x384xbf16>
    tpu.vector_store %arg6[%c0_5, %c0_6], %6 {strides = array<i32>} : memref<384x384xbf16, #tpu.memory_space<vmem>>, vector<384x384xbf16>,
    %c0_7 = arith.constant 0 : index
    %c0_8 = arith.constant 0 : index
    %8 = vector.load %arg6[%c0_7, %c0_8] : memref<384x384xbf16, #tpu.memory_space<vmem>>, vector<64x64xbf16>
    %c0_9 = arith.constant 0 : index
    %c0_10 = arith.constant 0 : index
    %9 = vector.load %arg7[%c0_9, %c0_10] : memref<384x384xbf16, #tpu.memory_space<vmem>>, vector<64x64xbf16>
    tpu.vector_store %arg7[%c0_9, %c0_10], %8 {strides = array<i32>} : memref<384x384xbf16, #tpu.memory_space<vmem>>, vector<64x64xbf16>,
    %c64 = arith.constant 64 : index
    %c0_11 = arith.constant 0 : index
    %10 = vector.load %arg6[%c64, %c0_11] : memref<384x384xbf16, #tpu.memory_space<vmem>>, vector<64x64xbf16>
    %c0_12 = arith.constant 0 : index
    %c64_13 = arith.constant 64 : index
    %11 = vector.load %arg7[%c0_12, %c64_13] : memref<384x384xbf16, #tpu.memory_space<vmem>>, vector<64x64xbf16>
    tpu.vector_store %arg7[%c0_12, %c64_13], %10 {strides = array<i32>} : memref<384x384xbf16, #tpu.memory_space<vmem>>, vector<64x64xbf16>,
    %c128 = arith.constant 128 : index
    %c0_14 = arith.constant 0 : index
    %12 = vector.load %arg6[%c128, %c0_14] : memref<384x384xbf16, #tpu.memory_space<vmem>>, vector<64x64xbf16>
    %c0_15 = arith.constant 0 : index
    %c128_16 = arith.constant 128 : index
    %13 = vector.load %arg7[%c0_15, %c128_16] : memref<384x384xbf16, #tpu.memory_space<vmem>>, vector<64x64xbf16>
    tpu.vector_store %arg7[%c0_15, %c128_16], %12 {strides = array<i32>} : memref<384x384xbf16, #tpu.memory_space<vmem>>, vector<64x64xbf16>,
    %c192 = arith.constant 192 : index
    %c0_17 = arith.constant 0 : index
    %14 = vector.load %arg6[%c192, %c0_17] : memref<384x384xbf16, #tpu.memory_space<vmem>>, vector<64x64xbf16>
    %c0_18 = arith.constant 0 : index
    %c192_19 = arith.constant 192 : index
    %15 = vector.load %arg7[%c0_18, %c192_19] : memref<384x384xbf16, #tpu.memory_space<vmem>>, vector<64x64xbf16>
    tpu.vector_store %arg7[%c0_18, %c192_19], %14 {strides = array<i32>} : memref<384x384xbf16, #tpu.memory_space<vmem>>, vector<64x64xbf16>,
    %c256 = arith.constant 256 : index
    %c0_20 = arith.constant 0 : index
    %16 = vector.load %arg6[%c256, %c0_20] : memref<384x384xbf16, #tpu.memory_space<vmem>>, vector<64x64xbf16>
    %c0_21 = arith.constant 0 : index
    %c256_22 = arith.constant 256 : index
    %17 = vector.load %arg7[%c0_21, %c256_22] : memref<384x384xbf16, #tpu.memory_space<vmem>>, vector<64x64xbf16>
    tpu.vector_store %arg7[%c0_21, %c256_22], %16 {strides = array<i32>} : memref<384x384xbf16, #tpu.memory_space<vmem>>, vector<64x64xbf16>,
    %c320 = arith.constant 320 : index
    %c0_23 = arith.constant 0 : index
    %18 = vector.load %arg6[%c320, %c0_23] : memref<384x384xbf16, #tpu.memory_space<vmem>>, vector<64x64xbf16>
    %c0_24 = arith.constant 0 : index
    %c320_25 = arith.constant 320 : index
    %19 = vector.load %arg7[%c0_24, %c320_25] : memref<384x384xbf16, #tpu.memory_space<vmem>>, vector<64x64xbf16>
    tpu.vector_store %arg7[%c0_24, %c320_25], %18 {strides = array<i32>} : memref<384x384xbf16, #tpu.memory_space<vmem>>, vector<64x64xbf16>,
    %c0_26 = arith.constant 0 : index
    %c64_27 = arith.constant 64 : index
    %20 = vector.load %arg6[%c0_26, %c64_27] : memref<384x384xbf16, #tpu.memory_space<vmem>>, vector<64x64xbf16>
    %c64_28 = arith.constant 64 : index
    %c0_29 = arith.constant 0 : index
    %21 = vector.load %arg7[%c64_28, %c0_29] : memref<384x384xbf16, #tpu.memory_space<vmem>>, vector<64x64xbf16>
    tpu.vector_store %arg7[%c64_28, %c0_29], %20 {strides = array<i32>} : memref<384x384xbf16, #tpu.memory_space<vmem>>, vector<64x64xbf16>,
    %c64_30 = arith.constant 64 : index
    %c64_31 = arith.constant 64 : index
    %22 = vector.load %arg6[%c64_30, %c64_31] : memref<384x384xbf16, #tpu.memory_space<vmem>>, vector<64x64xbf16>
    %c64_32 = arith.constant 64 : index
    %c64_33 = arith.constant 64 : index
    %23 = vector.load %arg7[%c64_32, %c64_33] : memref<384x384xbf16, #tpu.memory_space<vmem>>, vector<64x64xbf16>
    tpu.vector_store %arg7[%c64_32, %c64_33], %22 {strides = array<i32>} : memref<384x384xbf16, #tpu.memory_space<vmem>>, vector<64x64xbf16>,
    %c128_34 = arith.constant 128 : index
    %c64_35 = arith.constant 64 : index
    %24 = vector.load %arg6[%c128_34, %c64_35] : memref<384x384xbf16, #tpu.memory_space<vmem>>, vector<64x64xbf16>
    %c64_36 = arith.constant 64 : index
    %c128_37 = arith.constant 128 : index
    %25 = vector.load %arg7[%c64_36, %c128_37] : memref<384x384xbf16, #tpu.memory_space<vmem>>, vector<64x64xbf16>
    tpu.vector_store %arg7[%c64_36, %c128_37], %24 {strides = array<i32>} : memref<384x384xbf16, #tpu.memory_space<vmem>>, vector<64x64xbf16>,
    %c192_38 = arith.constant 192 : index
    %c64_39 = arith.constant 64 : index
    %26 = vector.load %arg6[%c192_38, %c64_39] : memref<384x384xbf16, #tpu.memory_space<vmem>>, vector<64x64xbf16>
    %c64_40 = arith.constant 64 : index
    %c192_41 = arith.constant 192 : index
    %27 = vector.load %arg7[%c64_40, %c192_41] : memref<384x384xbf16, #tpu.memory_space<vmem>>, vector<64x64xbf16>
    tpu.vector_store %arg7[%c64_40, %c192_41], %26 {strides = array<i32>} : memref<384x384xbf16, #tpu.memory_space<vmem>>, vector<64x64xbf16>,
    %c256_42 = arith.constant 256 : index
    %c64_43 = arith.constant 64 : index
    %28 = vector.load %arg6[%c256_42, %c64_43] : memref<384x384xbf16, #tpu.memory_space<vmem>>, vector<64x64xbf16>
    %c64_44 = arith.constant 64 : index
    %c256_45 = arith.constant 256 : index
    %29 = vector.load %arg7[%c64_44, %c256_45] : memref<384x384xbf16, #tpu.memory_space<vmem>>, vector<64x64xbf16>
    tpu.vector_store %arg7[%c64_44, %c256_45], %28 {strides = array<i32>} : memref<384x384xbf16, #tpu.memory_space<vmem>>, vector<64x64xbf16>,
    %c320_46 = arith.constant 320 : index
    %c64_47 = arith.constant 64 : index
    %30 = vector.load %arg6[%c320_46, %c64_47] : memref<384x384xbf16, #tpu.memory_space<vmem>>, vector<64x64xbf16>
    %c64_48 = arith.constant 64 : index
    %c320_49 = arith.constant 320 : index
    %31 = vector.load %arg7[%c64_48, %c320_49] : memref<384x384xbf16, #tpu.memory_space<vmem>>, vector<64x64xbf16>
    tpu.vector_store %arg7[%c64_48, %c320_49], %30 {strides = array<i32>} : memref<384x384xbf16, #tpu.memory_space<vmem>>, vector<64x64xbf16>,
    %c0_50 = arith.constant 0 : index
    %c128_51 = arith.constant 128 : index
    %32 = vector.load %arg6[%c0_50, %c128_51] : memref<384x384xbf16, #tpu.memory_space<vmem>>, vector<64x64xbf16>
    %c128_52 = arith.constant 128 : index
    %c0_53 = arith.constant 0 : index
    %33 = vector.load %arg7[%c128_52, %c0_53] : memref<384x384xbf16, #tpu.memory_space<vmem>>, vector<64x64xbf16>
    tpu.vector_store %arg7[%c128_52, %c0_53], %32 {strides = array<i32>} : memref<384x384xbf16, #tpu.memory_space<vmem>>, vector<64x64xbf16>,
    %c64_54 = arith.constant 64 : index
    %c128_55 = arith.constant 128 : index
    %34 = vector.load %arg6[%c64_54, %c128_55] : memref<384x384xbf16, #tpu.memory_space<vmem>>, vector<64x64xbf16>
    %c128_56 = arith.constant 128 : index
    %c64_57 = arith.constant 64 : index
    %35 = vector.load %arg7[%c128_56, %c64_57] : memref<384x384xbf16, #tpu.memory_space<vmem>>, vector<64x64xbf16>
    tpu.vector_store %arg7[%c128_56, %c64_57], %34 {strides = array<i32>} : memref<384x384xbf16, #tpu.memory_space<vmem>>, vector<64x64xbf16>,
    %c128_58 = arith.constant 128 : index
    %c128_59 = arith.constant 128 : index
    %36 = vector.load %arg6[%c128_58, %c128_59] : memref<384x384xbf16, #tpu.memory_space<vmem>>, vector<64x64xbf16>
    %c128_60 = arith.constant 128 : index
    %c128_61 = arith.constant 128 : index
    %37 = vector.load %arg7[%c128_60, %c128_61] : memref<384x384xbf16, #tpu.memory_space<vmem>>, vector<64x64xbf16>
    tpu.vector_store %arg7[%c128_60, %c128_61], %36 {strides = array<i32>} : memref<384x384xbf16, #tpu.memory_space<vmem>>, vector<64x64xbf16>,
    %c192_62 = arith.constant 192 : index
    %c128_63 = arith.constant 128 : index
    %38 = vector.load %arg6[%c192_62, %c128_63] : memref<384x384xbf16, #tpu.memory_space<vmem>>, vector<64x64xbf16>
    %c128_64 = arith.constant 128 : index
    %c192_65 = arith.constant 192 : index
    %39 = vector.load %arg7[%c128_64, %c192_65] : memref<384x384xbf16, #tpu.memory_space<vmem>>, vector<64x64xbf16>
    tpu.vector_store %arg7[%c128_64, %c192_65], %38 {strides = array<i32>} : memref<384x384xbf16, #tpu.memory_space<vmem>>, vector<64x64xbf16>,
    %c256_66 = arith.constant 256 : index
    %c128_67 = arith.constant 128 : index
    %40 = vector.load %arg6[%c256_66, %c128_67] : memref<384x384xbf16, #tpu.memory_space<vmem>>, vector<64x64xbf16>
    %c128_68 = arith.constant 128 : index
    %c256_69 = arith.constant 256 : index
    %41 = vector.load %arg7[%c128_68, %c256_69] : memref<384x384xbf16, #tpu.memory_space<vmem>>, vector<64x64xbf16>
    tpu.vector_store %arg7[%c128_68, %c256_69], %40 {strides = array<i32>} : memref<384x384xbf16, #tpu.memory_space<vmem>>, vector<64x64xbf16>,
    %c320_70 = arith.constant 320 : index
    %c128_71 = arith.constant 128 : index
    %42 = vector.load %arg6[%c320_70, %c128_71] : memref<384x384xbf16, #tpu.memory_space<vmem>>, vector<64x64xbf16>
    %c128_72 = arith.constant 128 : index
    %c320_73 = arith.constant 320 : index
    %43 = vector.load %arg7[%c128_72, %c320_73] : memref<384x384xbf16, #tpu.memory_space<vmem>>, vector<64x64xbf16>
    tpu.vector_store %arg7[%c128_72, %c320_73], %42 {strides = array<i32>} : memref<384x384xbf16, #tpu.memory_space<vmem>>, vector<64x64xbf16>,
    %c0_74 = arith.constant 0 : index
    %c192_75 = arith.constant 192 : index
    %44 = vector.load %arg6[%c0_74, %c192_75] : memref<384x384xbf16, #tpu.memory_space<vmem>>, vector<64x64xbf16>
    %c192_76 = arith.constant 192 : index
    %c0_77 = arith.constant 0 : index
    %45 = vector.load %arg7[%c192_76, %c0_77] : memref<384x384xbf16, #tpu.memory_space<vmem>>, vector<64x64xbf16>
    tpu.vector_store %arg7[%c192_76, %c0_77], %44 {strides = array<i32>} : memref<384x384xbf16, #tpu.memory_space<vmem>>, vector<64x64xbf16>,
    %c64_78 = arith.constant 64 : index
    %c192_79 = arith.constant 192 : index
    %46 = vector.load %arg6[%c64_78, %c192_79] : memref<384x384xbf16, #tpu.memory_space<vmem>>, vector<64x64xbf16>
    %c192_80 = arith.constant 192 : index
    %c64_81 = arith.constant 64 : index
    %47 = vector.load %arg7[%c192_80, %c64_81] : memref<384x384xbf16, #tpu.memory_space<vmem>>, vector<64x64xbf16>
    tpu.vector_store %arg7[%c192_80, %c64_81], %46 {strides = array<i32>} : memref<384x384xbf16, #tpu.memory_space<vmem>>, vector<64x64xbf16>,
    %c128_82 = arith.constant 128 : index
    %c192_83 = arith.constant 192 : index
    %48 = vector.load %arg6[%c128_82, %c192_83] : memref<384x384xbf16, #tpu.memory_space<vmem>>, vector<64x64xbf16>
    %c192_84 = arith.constant 192 : index
    %c128_85 = arith.constant 128 : index
    %49 = vector.load %arg7[%c192_84, %c128_85] : memref<384x384xbf16, #tpu.memory_space<vmem>>, vector<64x64xbf16>
    tpu.vector_store %arg7[%c192_84, %c128_85], %48 {strides = array<i32>} : memref<384x384xbf16, #tpu.memory_space<vmem>>, vector<64x64xbf16>,
    %c192_86 = arith.constant 192 : index
    %c192_87 = arith.constant 192 : index
    %50 = vector.load %arg6[%c192_86, %c192_87] : memref<384x384xbf16, #tpu.memory_space<vmem>>, vector<64x64xbf16>
    %c192_88 = arith.constant 192 : index
    %c192_89 = arith.constant 192 : index
    %51 = vector.load %arg7[%c192_88, %c192_89] : memref<384x384xbf16, #tpu.memory_space<vmem>>, vector<64x64xbf16>
    tpu.vector_store %arg7[%c192_88, %c192_89], %50 {strides = array<i32>} : memref<384x384xbf16, #tpu.memory_space<vmem>>, vector<64x64xbf16>,
    %c256_90 = arith.constant 256 : index
    %c192_91 = arith.constant 192 : index
    %52 = vector.load %arg6[%c256_90, %c192_91] : memref<384x384xbf16, #tpu.memory_space<vmem>>, vector<64x64xbf16>
    %c192_92 = arith.constant 192 : index
    %c256_93 = arith.constant 256 : index
    %53 = vector.load %arg7[%c192_92, %c256_93] : memref<384x384xbf16, #tpu.memory_space<vmem>>, vector<64x64xbf16>
    tpu.vector_store %arg7[%c192_92, %c256_93], %52 {strides = array<i32>} : memref<384x384xbf16, #tpu.memory_space<vmem>>, vector<64x64xbf16>,
    %c320_94 = arith.constant 320 : index
    %c192_95 = arith.constant 192 : index
    %54 = vector.load %arg6[%c320_94, %c192_95] : memref<384x384xbf16, #tpu.memory_space<vmem>>, vector<64x64xbf16>
    %c192_96 = arith.constant 192 : index
    %c320_97 = arith.constant 320 : index
    %55 = vector.load %arg7[%c192_96, %c320_97] : memref<384x384xbf16, #tpu.memory_space<vmem>>, vector<64x64xbf16>
    tpu.vector_store %arg7[%c192_96, %c320_97], %54 {strides = array<i32>} : memref<384x384xbf16, #tpu.memory_space<vmem>>, vector<64x64xbf16>,
    %c0_98 = arith.constant 0 : index
    %c256_99 = arith.constant 256 : index
    %56 = vector.load %arg6[%c0_98, %c256_99] : memref<384x384xbf16, #tpu.memory_space<vmem>>, vector<64x64xbf16>
    %c256_100 = arith.constant 256 : index
    %c0_101 = arith.constant 0 : index
    %57 = vector.load %arg7[%c256_100, %c0_101] : memref<384x384xbf16, #tpu.memory_space<vmem>>, vector<64x64xbf16>
    tpu.vector_store %arg7[%c256_100, %c0_101], %56 {strides = array<i32>} : memref<384x384xbf16, #tpu.memory_space<vmem>>, vector<64x64xbf16>,
    %c64_102 = arith.constant 64 : index
    %c256_103 = arith.constant 256 : index
    %58 = vector.load %arg6[%c64_102, %c256_103] : memref<384x384xbf16, #tpu.memory_space<vmem>>, vector<64x64xbf16>
    %c256_104 = arith.constant 256 : index
    %c64_105 = arith.constant 64 : index
    %59 = vector.load %arg7[%c256_104, %c64_105] : memref<384x384xbf16, #tpu.memory_space<vmem>>, vector<64x64xbf16>
    tpu.vector_store %arg7[%c256_104, %c64_105], %58 {strides = array<i32>} : memref<384x384xbf16, #tpu.memory_space<vmem>>, vector<64x64xbf16>,
    %c128_106 = arith.constant 128 : index
    %c256_107 = arith.constant 256 : index
    %60 = vector.load %arg6[%c128_106, %c256_107] : memref<384x384xbf16, #tpu.memory_space<vmem>>, vector<64x64xbf16>
    %c256_108 = arith.constant 256 : index
    %c128_109 = arith.constant 128 : index
    %61 = vector.load %arg7[%c256_108, %c128_109] : memref<384x384xbf16, #tpu.memory_space<vmem>>, vector<64x64xbf16>
    tpu.vector_store %arg7[%c256_108, %c128_109], %60 {strides = array<i32>} : memref<384x384xbf16, #tpu.memory_space<vmem>>, vector<64x64xbf16>,
    %c192_110 = arith.constant 192 : index
    %c256_111 = arith.constant 256 : index
    %62 = vector.load %arg6[%c192_110, %c256_111] : memref<384x384xbf16, #tpu.memory_space<vmem>>, vector<64x64xbf16>
    %c256_112 = arith.constant 256 : index
    %c192_113 = arith.constant 192 : index
    %63 = vector.load %arg7[%c256_112, %c192_113] : memref<384x384xbf16, #tpu.memory_space<vmem>>, vector<64x64xbf16>
    tpu.vector_store %arg7[%c256_112, %c192_113], %62 {strides = array<i32>} : memref<384x384xbf16, #tpu.memory_space<vmem>>, vector<64x64xbf16>,
    %c256_114 = arith.constant 256 : index
    %c256_115 = arith.constant 256 : index
    %64 = vector.load %arg6[%c256_114, %c256_115] : memref<384x384xbf16, #tpu.memory_space<vmem>>, vector<64x64xbf16>
    %c256_116 = arith.constant 256 : index
    %c256_117 = arith.constant 256 : index
    %65 = vector.load %arg7[%c256_116, %c256_117] : memref<384x384xbf16, #tpu.memory_space<vmem>>, vector<64x64xbf16>
    tpu.vector_store %arg7[%c256_116, %c256_117], %64 {strides = array<i32>} : memref<384x384xbf16, #tpu.memory_space<vmem>>, vector<64x64xbf16>,
    %c320_118 = arith.constant 320 : index
    %c256_119 = arith.constant 256 : index
    %66 = vector.load %arg6[%c320_118, %c256_119] : memref<384x384xbf16, #tpu.memory_space<vmem>>, vector<64x64xbf16>
    %c256_120 = arith.constant 256 : index
    %c320_121 = arith.constant 320 : index
    %67 = vector.load %arg7[%c256_120, %c320_121] : memref<384x384xbf16, #tpu.memory_space<vmem>>, vector<64x64xbf16>
    tpu.vector_store %arg7[%c256_120, %c320_121], %66 {strides = array<i32>} : memref<384x384xbf16, #tpu.memory_space<vmem>>, vector<64x64xbf16>,
    %c0_122 = arith.constant 0 : index
    %c320_123 = arith.constant 320 : index
    %68 = vector.load %arg6[%c0_122, %c320_123] : memref<384x384xbf16, #tpu.memory_space<vmem>>, vector<64x64xbf16>
    %c320_124 = arith.constant 320 : index
    %c0_125 = arith.constant 0 : index
    %69 = vector.load %arg7[%c320_124, %c0_125] : memref<384x384xbf16, #tpu.memory_space<vmem>>, vector<64x64xbf16>
    tpu.vector_store %arg7[%c320_124, %c0_125], %68 {strides = array<i32>} : memref<384x384xbf16, #tpu.memory_space<vmem>>, vector<64x64xbf16>,
    %c64_126 = arith.constant 64 : index
    %c320_127 = arith.constant 320 : index
    %70 = vector.load %arg6[%c64_126, %c320_127] : memref<384x384xbf16, #tpu.memory_space<vmem>>, vector<64x64xbf16>
    %c320_128 = arith.constant 320 : index
    %c64_129 = arith.constant 64 : index
    %71 = vector.load %arg7[%c320_128, %c64_129] : memref<384x384xbf16, #tpu.memory_space<vmem>>, vector<64x64xbf16>
    tpu.vector_store %arg7[%c320_128, %c64_129], %70 {strides = array<i32>} : memref<384x384xbf16, #tpu.memory_space<vmem>>, vector<64x64xbf16>,
    %c128_130 = arith.constant 128 : index
    %c320_131 = arith.constant 320 : index
    %72 = vector.load %arg6[%c128_130, %c320_131] : memref<384x384xbf16, #tpu.memory_space<vmem>>, vector<64x64xbf16>
    %c320_132 = arith.constant 320 : index
    %c128_133 = arith.constant 128 : index
    %73 = vector.load %arg7[%c320_132, %c128_133] : memref<384x384xbf16, #tpu.memory_space<vmem>>, vector<64x64xbf16>
    tpu.vector_store %arg7[%c320_132, %c128_133], %72 {strides = array<i32>} : memref<384x384xbf16, #tpu.memory_space<vmem>>, vector<64x64xbf16>,
    %c192_134 = arith.constant 192 : index
    %c320_135 = arith.constant 320 : index
    %74 = vector.load %arg6[%c192_134, %c320_135] : memref<384x384xbf16, #tpu.memory_space<vmem>>, vector<64x64xbf16>
    %c320_136 = arith.constant 320 : index
    %c192_137 = arith.constant 192 : index
    %75 = vector.load %arg7[%c320_136, %c192_137] : memref<384x384xbf16, #tpu.memory_space<vmem>>, vector<64x64xbf16>
    tpu.vector_store %arg7[%c320_136, %c192_137], %74 {strides = array<i32>} : memref<384x384xbf16, #tpu.memory_space<vmem>>, vector<64x64xbf16>,
    %c256_138 = arith.constant 256 : index
    %c320_139 = arith.constant 320 : index
    %76 = vector.load %arg6[%c256_138, %c320_139] : memref<384x384xbf16, #tpu.memory_space<vmem>>, vector<64x64xbf16>
    %c320_140 = arith.constant 320 : index
    %c256_141 = arith.constant 256 : index
    %77 = vector.load %arg7[%c320_140, %c256_141] : memref<384x384xbf16, #tpu.memory_space<vmem>>, vector<64x64xbf16>
    tpu.vector_store %arg7[%c320_140, %c256_141], %76 {strides = array<i32>} : memref<384x384xbf16, #tpu.memory_space<vmem>>, vector<64x64xbf16>,
    %c320_142 = arith.constant 320 : index
    %c320_143 = arith.constant 320 : index
    %78 = vector.load %arg6[%c320_142, %c320_143] : memref<384x384xbf16, #tpu.memory_space<vmem>>, vector<64x64xbf16>
    %c320_144 = arith.constant 320 : index
    %c320_145 = arith.constant 320 : index
    %79 = vector.load %arg7[%c320_144, %c320_145] : memref<384x384xbf16, #tpu.memory_space<vmem>>, vector<64x64xbf16>
    tpu.vector_store %arg7[%c320_144, %c320_145], %78 {strides = array<i32>} : memref<384x384xbf16, #tpu.memory_space<vmem>>, vector<64x64xbf16>,
    %c0_146 = arith.constant 0 : index
    %c0_147 = arith.constant 0 : index
    %80 = vector.load %arg7[%c0_146, %c0_147] : memref<384x384xbf16, #tpu.memory_space<vmem>>, vector<384x384xbf16>
    %c0_148 = arith.constant 0 : index
    %c0_149 = arith.constant 0 : index
    %81 = vector.load %arg3[%c0_148, %c0_149] : memref<384x384xbf16, #tpu.memory_space<vmem>>, vector<384x384xbf16>
    %cst_150 = arith.constant dense<0.000000e+00> : vector<384x384xf32>
    %82 = tpu.matmul %80, %81, %cst_150 {dimension_numbers = #tpu.dot_dimension_numbers<[1], [0], [0], [1], [0, 0, 1, 1], [], []>} : vector<384x384xbf16>, vector<384x384xbf16>, vector<384x384xf32> -> vector<384x384xf32>
    %c0_151 = arith.constant 0 : index
    %c0_152 = arith.constant 0 : index
    %83 = vector.load %arg4[%c0_151, %c0_152] : memref<1x384xf32, #tpu.memory_space<vmem>>, vector<1x384xf32>
    %84 = vector.broadcast %83 : vector<1x384xf32> to vector<384x384xf32>
    %85 = arith.addf %82, %84 : vector<384x384xf32>
    %c0_153 = arith.constant 0 : index
    %c0_154 = arith.constant 0 : index
    %86 = vector.load %arg5[%c0_153, %c0_154] : memref<384x384xf32, #tpu.memory_space<vmem>>, vector<384x384xf32>
    tpu.vector_store %arg5[%c0_153, %c0_154], %85 {strides = array<i32>} : memref<384x384xf32, #tpu.memory_space<vmem>>, vector<384x384xf32>,
    return
  }
}

</mosaic_0001>

<llo_original>
// kernel: ait_mha_forward.1
$region0: #{ait_mha_forward.1}
  #allocation0 [shape = 'u32[]', space=smem, size = 0x4, offset = 0x4, fixed_abs, tag = 'smem constant byte address 0x4 - core index']
  #allocation1 [shape = 'u32[144,128]{1,0:T(1,128)}', space=vmem, size = 0x12000, scoped, tag = 'internal scratch']
  #allocation2 [shape = 'bf16[384,384]{1,0:T(16,128)(2,1)}', space=vmem, size = 0x48000, scoped, tag = 'scratch operand']
  #allocation3 [shape = 'bf16[384,384]{1,0:T(16,128)(2,1)}', space=vmem, size = 0x48000, scoped, tag = 'scratch operand']
  %s0 = inlined_call_operand.vmem [shape: bf16[384,384], index: 0, kind: input, shape index: {}]
  %s1 = inlined_call_operand.vmem [shape: bf16[384,384], index: 1, kind: input, shape index: {}]
  %s2 = inlined_call_operand.vmem [shape: f32[1,384], index: 2, kind: input, shape index: {}]
  %s3 = inlined_call_operand.vmem [shape: bf16[384,384], index: 3, kind: input, shape index: {}]
  %s4 = inlined_call_operand.vmem [shape: f32[1,384], index: 4, kind: input, shape index: {}]
  %s5 = inlined_call_operand.hbm [shape: f32[384,384], index: 5, kind: output, shape index: {}]
  %s6 = sld [smem:[#allocation0]]
  $region30: #{ait_mha_forward.1} parent=0
    _
  %s8 = ssub.s32 1, %s6
  %s9 = scalar_select 0, %s8, %s6
  $region1: #{ait_mha_forward.1} parent=0
    #allocation4 [shape = 'u8[589824]{0}', space=vmem, size = 0x90000, scoped, tag = 'output window, operand 0, single buffered']
    #allocation5 [shape = 's32[1]{0}', space=sflag, size = 0x4, scoped, tag = 'scoped memory for ait_mha_forward.1']
    %10 = vsyncpa [#allocation5], 0
    // Predicated region
    $region2: #{ait_mha_forward.1} parent=1 // pred_check
      _
    $region3: #{ait_mha_forward.1} parent=1 // pred_check_branch
      %12 = sbr.rel (0) target = $region5
    $region4: #{ait_mha_forward.1} parent=1 // pred_region
      _
    $region5: #{ait_mha_forward.1} parent=1 // pred_fallthru
      _
    // Predicated region
    $region6: #{ait_mha_forward.1} parent=1 // pred_check
      _
    $region7: #{ait_mha_forward.1} parent=1 // pred_check_branch
      %14 = sbr.rel (0) target = $region9
    $region8: #{ait_mha_forward.1} parent=1 // pred_region
      _
    $region9: #{ait_mha_forward.1} parent=1 // pred_fallthru
      _
    // Predicated region
    $region10: #{ait_mha_forward.1} parent=1 // pred_check
      _
    $region11: #{ait_mha_forward.1} parent=1 // pred_check_branch
      %16 = sbr.rel (0) target = $region13
    $region12: #{ait_mha_forward.1} parent=1 // pred_region
      _
    $region13: #{ait_mha_forward.1} parent=1 // pred_fallthru
      _
    // Predicated region
    $region14: #{ait_mha_forward.1} parent=1 // pred_check
      _
    $region15: #{ait_mha_forward.1} parent=1 // pred_check_branch
      %18 = sbr.rel (0) target = $region17
    $region16: #{ait_mha_forward.1} parent=1 // pred_region
      _
    $region17: #{ait_mha_forward.1} parent=1 // pred_fallthru
      _
    // Predicated region
    $region18: #{ait_mha_forward.1} parent=1 // pred_check
      _
    $region19: #{ait_mha_forward.1} parent=1 // pred_check_branch
      %20 = sbr.rel (0) target = $region21
    $region20: #{ait_mha_forward.1} parent=1 // pred_region
      _
    $region21: #{ait_mha_forward.1} parent=1 // pred_fallthru
      _
    %v22 = vld [vmem:[%s0] sm:$0xff]
    %v23 = vld [vmem:[%s0 + $0x8] sm:$0xf]
    %v24 = vld [vmem:[%s0 + $0xc] sm:$0xff]
    %v25 = vld [vmem:[%s0 + $0x14] sm:$0xf]
    %v26 = vld [vmem:[%s0 + $0x18] sm:$0xff]
    %v27 = vld [vmem:[%s0 + $0x20] sm:$0xf]
    %v28 = vld [vmem:[%s0 + $0x24] sm:$0xff]
    %v29 = vld [vmem:[%s0 + $0x2c] sm:$0xf]
    %v30 = vld [vmem:[%s0 + $0x30] sm:$0xff]
    %v31 = vld [vmem:[%s0 + $0x38] sm:$0xf]
    %v32 = vld [vmem:[%s0 + $0x3c] sm:$0xff]
    %v33 = vld [vmem:[%s0 + $0x44] sm:$0xf]
    %v34 = vld [vmem:[%s0 + $0x48] sm:$0xff]
    %v35 = vld [vmem:[%s0 + $0x50] sm:$0xf]
    %v36 = vld [vmem:[%s0 + $0x54] sm:$0xff]
    %v37 = vld [vmem:[%s0 + $0x5c] sm:$0xf]
    %v38 = vld [vmem:[%s0 + $0x60] sm:$0xff]
    %v39 = vld [vmem:[%s0 + $0x68] sm:$0xf]
    %v40 = vld [vmem:[%s0 + $0x6c] sm:$0xff]
    %v41 = vld [vmem:[%s0 + $0x74] sm:$0xf]
    %v42 = vld [vmem:[%s0 + $0x78] sm:$0xff]
    %v43 = vld [vmem:[%s0 + $0x80] sm:$0xf]
    %v44 = vld [vmem:[%s0 + $0x84] sm:$0xff]
    %v45 = vld [vmem:[%s0 + $0x8c] sm:$0xf]
    %v46 = vld [vmem:[%s0 + $0x90] sm:$0xff]
    %v47 = vld [vmem:[%s0 + $0x98] sm:$0xf]
    %v48 = vld [vmem:[%s0 + $0x9c] sm:$0xff]
    %v49 = vld [vmem:[%s0 + $0xa4] sm:$0xf]
    %v50 = vld [vmem:[%s0 + $0xa8] sm:$0xff]
    %v51 = vld [vmem:[%s0 + $0xb0] sm:$0xf]
    %v52 = vld [vmem:[%s0 + $0xb4] sm:$0xff]
    %v53 = vld [vmem:[%s0 + $0xbc] sm:$0xf]
    %v54 = vld [vmem:[%s0 + $0xc0] sm:$0xff]
    %v55 = vld [vmem:[%s0 + $0xc8] sm:$0xf]
    %v56 = vld [vmem:[%s0 + $0xcc] sm:$0xff]
    %v57 = vld [vmem:[%s0 + $0xd4] sm:$0xf]
    %v58 = vld [vmem:[%s0 + $0xd8] sm:$0xff]
    %v59 = vld [vmem:[%s0 + $0xe0] sm:$0xf]
    %v60 = vld [vmem:[%s0 + $0xe4] sm:$0xff]
    %v61 = vld [vmem:[%s0 + $0xec] sm:$0xf]
    %v62 = vld [vmem:[%s0 + $0xf0] sm:$0xff]
    %v63 = vld [vmem:[%s0 + $0xf8] sm:$0xf]
    %v64 = vld [vmem:[%s0 + $0xfc] sm:$0xff]
    %v65 = vld [vmem:[%s0 + $0x104] sm:$0xf]
    %v66 = vld [vmem:[%s0 + $0x108] sm:$0xff]
    %v67 = vld [vmem:[%s0 + $0x110] sm:$0xf]
    %v68 = vld [vmem:[%s0 + $0x114] sm:$0xff]
    %v69 = vld [vmem:[%s0 + $0x11c] sm:$0xf]
    %v70 = vld [vmem:[%s0 + $0x120] sm:$0xff]
    %v71 = vld [vmem:[%s0 + $0x128] sm:$0xf]
    %v72 = vld [vmem:[%s0 + $0x12c] sm:$0xff]
    %v73 = vld [vmem:[%s0 + $0x134] sm:$0xf]
    %v74 = vld [vmem:[%s0 + $0x138] sm:$0xff]
    %v75 = vld [vmem:[%s0 + $0x140] sm:$0xf]
    %v76 = vld [vmem:[%s0 + $0x144] sm:$0xff]
    %v77 = vld [vmem:[%s0 + $0x14c] sm:$0xf]
    %v78 = vld [vmem:[%s0 + $0x150] sm:$0xff]
    %v79 = vld [vmem:[%s0 + $0x158] sm:$0xf]
    %v80 = vld [vmem:[%s0 + $0x15c] sm:$0xff]
    %v81 = vld [vmem:[%s0 + $0x164] sm:$0xf]
    %v82 = vld [vmem:[%s0 + $0x168] sm:$0xff]
    %v83 = vld [vmem:[%s0 + $0x170] sm:$0xf]
    %v84 = vld [vmem:[%s0 + $0x174] sm:$0xff]
    %v85 = vld [vmem:[%s0 + $0x17c] sm:$0xf]
    %v86 = vld [vmem:[%s0 + $0x180] sm:$0xff]
    %v87 = vld [vmem:[%s0 + $0x188] sm:$0xf]
    %v88 = vld [vmem:[%s0 + $0x18c] sm:$0xff]
    %v89 = vld [vmem:[%s0 + $0x194] sm:$0xf]
    %v90 = vld [vmem:[%s0 + $0x198] sm:$0xff]
    %v91 = vld [vmem:[%s0 + $0x1a0] sm:$0xf]
    %v92 = vld [vmem:[%s0 + $0x1a4] sm:$0xff]
    %v93 = vld [vmem:[%s0 + $0x1ac] sm:$0xf]
    %v94 = vld [vmem:[%s0 + $0x1b0] sm:$0xff]
    %v95 = vld [vmem:[%s0 + $0x1b8] sm:$0xf]
    %v96 = vld [vmem:[%s0 + $0x1bc] sm:$0xff]
    %v97 = vld [vmem:[%s0 + $0x1c4] sm:$0xf]
    %v98 = vld [vmem:[%s0 + $0x1c8] sm:$0xff]
    %v99 = vld [vmem:[%s0 + $0x1d0] sm:$0xf]
    %v100 = vld [vmem:[%s0 + $0x1d4] sm:$0xff]
    %v101 = vld [vmem:[%s0 + $0x1dc] sm:$0xf]
    %v102 = vld [vmem:[%s0 + $0x1e0] sm:$0xff]
    %v103 = vld [vmem:[%s0 + $0x1e8] sm:$0xf]
    %v104 = vld [vmem:[%s0 + $0x1ec] sm:$0xff]
    %v105 = vld [vmem:[%s0 + $0x1f4] sm:$0xf]
    %v106 = vld [vmem:[%s0 + $0x1f8] sm:$0xff]
    %v107 = vld [vmem:[%s0 + $0x200] sm:$0xf]
    %v108 = vld [vmem:[%s0 + $0x204] sm:$0xff]
    %v109 = vld [vmem:[%s0 + $0x20c] sm:$0xf]
    %v110 = vld [vmem:[%s0 + $0x210] sm:$0xff]
    %v111 = vld [vmem:[%s0 + $0x218] sm:$0xf]
    %v112 = vld [vmem:[%s0 + $0x21c] sm:$0xff]
    %v113 = vld [vmem:[%s0 + $0x224] sm:$0xf]
    %v114 = vld [vmem:[%s0 + $0x228] sm:$0xff]
    %v115 = vld [vmem:[%s0 + $0x230] sm:$0xf]
    %v116 = vld [vmem:[%s0 + $0x234] sm:$0xff]
    %v117 = vld [vmem:[%s0 + $0x23c] sm:$0xf]
    %v118 = vld [vmem:[%s1] sm:$0xff]
    %v119 = vld [vmem:[%s1 + $0x8] sm:$0xf]
    %v120 = vld [vmem:[%s1 + $0xc] sm:$0xff]
    %v121 = vld [vmem:[%s1 + $0x14] sm:$0xf]
    %v122 = vld [vmem:[%s1 + $0x18] sm:$0xff]
    %v123 = vld [vmem:[%s1 + $0x20] sm:$0xf]
    %v124 = vld [vmem:[%s1 + $0x24] sm:$0xff]
    %v125 = vld [vmem:[%s1 + $0x2c] sm:$0xf]
    %v126 = vld [vmem:[%s1 + $0x30] sm:$0xff]
    %v127 = vld [vmem:[%s1 + $0x38] sm:$0xf]
    %v128 = vld [vmem:[%s1 + $0x3c] sm:$0xff]
    %v129 = vld [vmem:[%s1 + $0x44] sm:$0xf]
    %v130 = vld [vmem:[%s1 + $0x48] sm:$0xff]
    %v131 = vld [vmem:[%s1 + $0x50] sm:$0xf]
    %v132 = vld [vmem:[%s1 + $0x54] sm:$0xff]
    %v133 = vld [vmem:[%s1 + $0x5c] sm:$0xf]
    %v134 = vld [vmem:[%s1 + $0x60] sm:$0xff]
    %v135 = vld [vmem:[%s1 + $0x68] sm:$0xf]
    %v136 = vld [vmem:[%s1 + $0x6c] sm:$0xff]
    %v137 = vld [vmem:[%s1 + $0x74] sm:$0xf]
    %v138 = vld [vmem:[%s1 + $0x78] sm:$0xff]
    %v139 = vld [vmem:[%s1 + $0x80] sm:$0xf]
    %v140 = vld [vmem:[%s1 + $0x84] sm:$0xff]
    %v141 = vld [vmem:[%s1 + $0x8c] sm:$0xf]
    %v142 = vld [vmem:[%s1 + $0x90] sm:$0xff]
    %v143 = vld [vmem:[%s1 + $0x98] sm:$0xf]
    %v144 = vld [vmem:[%s1 + $0x9c] sm:$0xff]
    %v145 = vld [vmem:[%s1 + $0xa4] sm:$0xf]
    %v146 = vld [vmem:[%s1 + $0xa8] sm:$0xff]
    %v147 = vld [vmem:[%s1 + $0xb0] sm:$0xf]
    %v148 = vld [vmem:[%s1 + $0xb4] sm:$0xff]
    %v149 = vld [vmem:[%s1 + $0xbc] sm:$0xf]
    %v150 = vld [vmem:[%s1 + $0xc0] sm:$0xff]
    %v151 = vld [vmem:[%s1 + $0xc8] sm:$0xf]
    %v152 = vld [vmem:[%s1 + $0xcc] sm:$0xff]
    %v153 = vld [vmem:[%s1 + $0xd4] sm:$0xf]
    %v154 = vld [vmem:[%s1 + $0xd8] sm:$0xff]
    %v155 = vld [vmem:[%s1 + $0xe0] sm:$0xf]
    %v156 = vld [vmem:[%s1 + $0xe4] sm:$0xff]
    %v157 = vld [vmem:[%s1 + $0xec] sm:$0xf]
    %v158 = vld [vmem:[%s1 + $0xf0] sm:$0xff]
    %v159 = vld [vmem:[%s1 + $0xf8] sm:$0xf]
    %v160 = vld [vmem:[%s1 + $0xfc] sm:$0xff]
    %v161 = vld [vmem:[%s1 + $0x104] sm:$0xf]
    %v162 = vld [vmem:[%s1 + $0x108] sm:$0xff]
    %v163 = vld [vmem:[%s1 + $0x110] sm:$0xf]
    %v164 = vld [vmem:[%s1 + $0x114] sm:$0xff]
    %v165 = vld [vmem:[%s1 + $0x11c] sm:$0xf]
    %v166 = vld [vmem:[%s1 + $0x120] sm:$0xff]
    %v167 = vld [vmem:[%s1 + $0x128] sm:$0xf]
    %v168 = vld [vmem:[%s1 + $0x12c] sm:$0xff]
    %v169 = vld [vmem:[%s1 + $0x134] sm:$0xf]
    %v170 = vld [vmem:[%s1 + $0x138] sm:$0xff]
    %v171 = vld [vmem:[%s1 + $0x140] sm:$0xf]
    %v172 = vld [vmem:[%s1 + $0x144] sm:$0xff]
    %v173 = vld [vmem:[%s1 + $0x14c] sm:$0xf]
    %v174 = vld [vmem:[%s1 + $0x150] sm:$0xff]
    %v175 = vld [vmem:[%s1 + $0x158] sm:$0xf]
    %v176 = vld [vmem:[%s1 + $0x15c] sm:$0xff]
    %v177 = vld [vmem:[%s1 + $0x164] sm:$0xf]
    %v178 = vld [vmem:[%s1 + $0x168] sm:$0xff]
    %v179 = vld [vmem:[%s1 + $0x170] sm:$0xf]
    %v180 = vld [vmem:[%s1 + $0x174] sm:$0xff]
    %v181 = vld [vmem:[%s1 + $0x17c] sm:$0xf]
    %v182 = vld [vmem:[%s1 + $0x180] sm:$0xff]
    %v183 = vld [vmem:[%s1 + $0x188] sm:$0xf]
    %v184 = vld [vmem:[%s1 + $0x18c] sm:$0xff]
    %v185 = vld [vmem:[%s1 + $0x194] sm:$0xf]
    %v186 = vld [vmem:[%s1 + $0x198] sm:$0xff]
    %v187 = vld [vmem:[%s1 + $0x1a0] sm:$0xf]
    %v188 = vld [vmem:[%s1 + $0x1a4] sm:$0xff]
    %v189 = vld [vmem:[%s1 + $0x1ac] sm:$0xf]
    %v190 = vld [vmem:[%s1 + $0x1b0] sm:$0xff]
    %v191 = vld [vmem:[%s1 + $0x1b8] sm:$0xf]
    %v192 = vld [vmem:[%s1 + $0x1bc] sm:$0xff]
    %v193 = vld [vmem:[%s1 + $0x1c4] sm:$0xf]
    %v194 = vld [vmem:[%s1 + $0x1c8] sm:$0xff]
    %v195 = vld [vmem:[%s1 + $0x1d0] sm:$0xf]
    %v196 = vld [vmem:[%s1 + $0x1d4] sm:$0xff]
    %v197 = vld [vmem:[%s1 + $0x1dc] sm:$0xf]
    %v198 = vld [vmem:[%s1 + $0x1e0] sm:$0xff]
    %v199 = vld [vmem:[%s1 + $0x1e8] sm:$0xf]
    %v200 = vld [vmem:[%s1 + $0x1ec] sm:$0xff]
    %v201 = vld [vmem:[%s1 + $0x1f4] sm:$0xf]
    %v202 = vld [vmem:[%s1 + $0x1f8] sm:$0xff]
    %v203 = vld [vmem:[%s1 + $0x200] sm:$0xf]
    %v204 = vld [vmem:[%s1 + $0x204] sm:$0xff]
    %v205 = vld [vmem:[%s1 + $0x20c] sm:$0xf]
    %v206 = vld [vmem:[%s1 + $0x210] sm:$0xff]
    %v207 = vld [vmem:[%s1 + $0x218] sm:$0xf]
    %v208 = vld [vmem:[%s1 + $0x21c] sm:$0xff]
    %v209 = vld [vmem:[%s1 + $0x224] sm:$0xf]
    %v210 = vld [vmem:[%s1 + $0x228] sm:$0xff]
    %v211 = vld [vmem:[%s1 + $0x230] sm:$0xf]
    %v212 = vld [vmem:[%s1 + $0x234] sm:$0xff]
    %v213 = vld [vmem:[%s1 + $0x23c] sm:$0xf]
    %v214 = vld [vmem:[%s2] sm:$0x7]
    %v216 = vlaneseq
    %v217 = vshrl.u32 %v216, 7
    %v218 = vsub.s32 0, %v217
    %v219 = vrot.slane %v214, %v218
    %v220 = vlaneseq
    %v221 = vshrl.u32 %v220, 7
    %v222 = vsub.s32 1, %v221
    %v223 = vrot.slane %v214, %v222
    %v224 = vlaneseq
    %v225 = vshrl.u32 %v224, 7
    %v226 = vsub.s32 2, %v225
    %v227 = vrot.slane %v214, %v226
    %v327 = vunpack.c.l.b16 %v22
    %v328 = vunpack.c.h.b16 %v22
    %v329 = vunpack.c.l.b16 %v23
    %v330 = vunpack.c.l.b16 %v24
    %v331 = vunpack.c.h.b16 %v24
    %v332 = vunpack.c.l.b16 %v25
    %v333 = vunpack.c.l.b16 %v26
    %v334 = vunpack.c.h.b16 %v26
    %v335 = vunpack.c.l.b16 %v27
    %v336 = vunpack.c.l.b16 %v28
    %v337 = vunpack.c.h.b16 %v28
    %v338 = vunpack.c.l.b16 %v29
    %v339 = vunpack.c.l.b16 %v30
    %v340 = vunpack.c.h.b16 %v30
    %v341 = vunpack.c.l.b16 %v31
    %v342 = vunpack.c.l.b16 %v32
    %v343 = vunpack.c.h.b16 %v32
    %v344 = vunpack.c.l.b16 %v33
    %v345 = vunpack.c.l.b16 %v34
    %v346 = vunpack.c.h.b16 %v34
    %v347 = vunpack.c.l.b16 %v35
    %v348 = vunpack.c.l.b16 %v36
    %v349 = vunpack.c.h.b16 %v36
    %v350 = vunpack.c.l.b16 %v37
    %v351 = vunpack.c.l.b16 %v38
    %v352 = vunpack.c.h.b16 %v38
    %v353 = vunpack.c.l.b16 %v39
    %v354 = vunpack.c.l.b16 %v40
    %v355 = vunpack.c.h.b16 %v40
    %v356 = vunpack.c.l.b16 %v41
    %v357 = vunpack.c.l.b16 %v42
    %v358 = vunpack.c.h.b16 %v42
    %v359 = vunpack.c.l.b16 %v43
    %v360 = vunpack.c.l.b16 %v44
    %v361 = vunpack.c.h.b16 %v44
    %v362 = vunpack.c.l.b16 %v45
    %v363 = vunpack.c.l.b16 %v46
    %v364 = vunpack.c.h.b16 %v46
    %v365 = vunpack.c.l.b16 %v47
    %v366 = vunpack.c.l.b16 %v48
    %v367 = vunpack.c.h.b16 %v48
    %v368 = vunpack.c.l.b16 %v49
    %v369 = vunpack.c.l.b16 %v50
    %v370 = vunpack.c.h.b16 %v50
    %v371 = vunpack.c.l.b16 %v51
    %v372 = vunpack.c.l.b16 %v52
    %v373 = vunpack.c.h.b16 %v52
    %v374 = vunpack.c.l.b16 %v53
    %v375 = vunpack.c.l.b16 %v54
    %v376 = vunpack.c.h.b16 %v54
    %v377 = vunpack.c.l.b16 %v55
    %v378 = vunpack.c.l.b16 %v56
    %v379 = vunpack.c.h.b16 %v56
    %v380 = vunpack.c.l.b16 %v57
    %v381 = vunpack.c.l.b16 %v58
    %v382 = vunpack.c.h.b16 %v58
    %v383 = vunpack.c.l.b16 %v59
    %v384 = vunpack.c.l.b16 %v60
    %v385 = vunpack.c.h.b16 %v60
    %v386 = vunpack.c.l.b16 %v61
    %v387 = vunpack.c.l.b16 %v62
    %v388 = vunpack.c.h.b16 %v62
    %v389 = vunpack.c.l.b16 %v63
    %v390 = vunpack.c.l.b16 %v64
    %v391 = vunpack.c.h.b16 %v64
    %v392 = vunpack.c.l.b16 %v65
    %v393 = vunpack.c.l.b16 %v66
    %v394 = vunpack.c.h.b16 %v66
    %v395 = vunpack.c.l.b16 %v67
    %v396 = vunpack.c.l.b16 %v68
    %v397 = vunpack.c.h.b16 %v68
    %v398 = vunpack.c.l.b16 %v69
    %v399 = vunpack.c.l.b16 %v70
    %v400 = vunpack.c.h.b16 %v70
    %v401 = vunpack.c.l.b16 %v71
    %v402 = vunpack.c.l.b16 %v72
    %v403 = vunpack.c.h.b16 %v72
    %v404 = vunpack.c.l.b16 %v73
    %v405 = vunpack.c.l.b16 %v74
    %v406 = vunpack.c.h.b16 %v74
    %v407 = vunpack.c.l.b16 %v75
    %v408 = vunpack.c.l.b16 %v76
    %v409 = vunpack.c.h.b16 %v76
    %v410 = vunpack.c.l.b16 %v77
    %v411 = vunpack.c.l.b16 %v78
    %v412 = vunpack.c.h.b16 %v78
    %v413 = vunpack.c.l.b16 %v79
    %v414 = vunpack.c.l.b16 %v80
    %v415 = vunpack.c.h.b16 %v80
    %v416 = vunpack.c.l.b16 %v81
    %v417 = vunpack.c.l.b16 %v82
    %v418 = vunpack.c.h.b16 %v82
    %v419 = vunpack.c.l.b16 %v83
    %v420 = vunpack.c.l.b16 %v84
    %v421 = vunpack.c.h.b16 %v84
    %v422 = vunpack.c.l.b16 %v85
    %v423 = vunpack.c.l.b16 %v86
    %v424 = vunpack.c.h.b16 %v86
    %v425 = vunpack.c.l.b16 %v87
    %v426 = vunpack.c.l.b16 %v88
    %v427 = vunpack.c.h.b16 %v88
    %v428 = vunpack.c.l.b16 %v89
    %v429 = vunpack.c.l.b16 %v90
    %v430 = vunpack.c.h.b16 %v90
    %v431 = vunpack.c.l.b16 %v91
    %v432 = vunpack.c.l.b16 %v92
    %v433 = vunpack.c.h.b16 %v92
    %v434 = vunpack.c.l.b16 %v93
    %v435 = vunpack.c.l.b16 %v94
    %v436 = vunpack.c.h.b16 %v94
    %v437 = vunpack.c.l.b16 %v95
    %v438 = vunpack.c.l.b16 %v96
    %v439 = vunpack.c.h.b16 %v96
    %v440 = vunpack.c.l.b16 %v97
    %v441 = vunpack.c.l.b16 %v98
    %v442 = vunpack.c.h.b16 %v98
    %v443 = vunpack.c.l.b16 %v99
    %v444 = vunpack.c.l.b16 %v100
    %v445 = vunpack.c.h.b16 %v100
    %v446 = vunpack.c.l.b16 %v101
    %v447 = vunpack.c.l.b16 %v102
    %v448 = vunpack.c.h.b16 %v102
    %v449 = vunpack.c.l.b16 %v103
    %v450 = vunpack.c.l.b16 %v104
    %v451 = vunpack.c.h.b16 %v104
    %v452 = vunpack.c.l.b16 %v105
    %v453 = vunpack.c.l.b16 %v106
    %v454 = vunpack.c.h.b16 %v106
    %v455 = vunpack.c.l.b16 %v107
    %v456 = vunpack.c.l.b16 %v108
    %v457 = vunpack.c.h.b16 %v108
    %v458 = vunpack.c.l.b16 %v109
    %v459 = vunpack.c.l.b16 %v110
    %v460 = vunpack.c.h.b16 %v110
    %v461 = vunpack.c.l.b16 %v111
    %v462 = vunpack.c.l.b16 %v112
    %v463 = vunpack.c.h.b16 %v112
    %v464 = vunpack.c.l.b16 %v113
    %v465 = vunpack.c.l.b16 %v114
    %v466 = vunpack.c.h.b16 %v114
    %v467 = vunpack.c.l.b16 %v115
    %v468 = vunpack.c.l.b16 %v116
    %v469 = vunpack.c.h.b16 %v116
    %v470 = vunpack.c.l.b16 %v117
    %v471 = vpack.c.b16 %v330, %v327
    %v472 = vpack.c.b16 %v331, %v328
    %v473 = vpack.c.b16 %v332, %v329
    %v474 = vpack.c.b16 %v336, %v333
    %v475 = vpack.c.b16 %v337, %v334
    %v476 = vpack.c.b16 %v338, %v335
    %v477 = vpack.c.b16 %v342, %v339
    %v478 = vpack.c.b16 %v343, %v340
    %v479 = vpack.c.b16 %v344, %v341
    %v480 = vpack.c.b16 %v348, %v345
    %v481 = vpack.c.b16 %v349, %v346
    %v482 = vpack.c.b16 %v350, %v347
    %v483 = vpack.c.b16 %v354, %v351
    %v484 = vpack.c.b16 %v355, %v352
    %v485 = vpack.c.b16 %v356, %v353
    %v486 = vpack.c.b16 %v360, %v357
    %v487 = vpack.c.b16 %v361, %v358
    %v488 = vpack.c.b16 %v362, %v359
    %v489 = vpack.c.b16 %v366, %v363
    %v490 = vpack.c.b16 %v367, %v364
    %v491 = vpack.c.b16 %v368, %v365
    %v492 = vpack.c.b16 %v372, %v369
    %v493 = vpack.c.b16 %v373, %v370
    %v494 = vpack.c.b16 %v374, %v371
    %v495 = vpack.c.b16 %v378, %v375
    %v496 = vpack.c.b16 %v379, %v376
    %v497 = vpack.c.b16 %v380, %v377
    %v498 = vpack.c.b16 %v384, %v381
    %v499 = vpack.c.b16 %v385, %v382
    %v500 = vpack.c.b16 %v386, %v383
    %v501 = vpack.c.b16 %v390, %v387
    %v502 = vpack.c.b16 %v391, %v388
    %v503 = vpack.c.b16 %v392, %v389
    %v504 = vpack.c.b16 %v396, %v393
    %v505 = vpack.c.b16 %v397, %v394
    %v506 = vpack.c.b16 %v398, %v395
    %v507 = vpack.c.b16 %v402, %v399
    %v508 = vpack.c.b16 %v403, %v400
    %v509 = vpack.c.b16 %v404, %v401
    %v510 = vpack.c.b16 %v408, %v405
    %v511 = vpack.c.b16 %v409, %v406
    %v512 = vpack.c.b16 %v410, %v407
    %v513 = vpack.c.b16 %v414, %v411
    %v514 = vpack.c.b16 %v415, %v412
    %v515 = vpack.c.b16 %v416, %v413
    %v516 = vpack.c.b16 %v420, %v417
    %v517 = vpack.c.b16 %v421, %v418
    %v518 = vpack.c.b16 %v422, %v419
    %v519 = vpack.c.b16 %v426, %v423
    %v520 = vpack.c.b16 %v427, %v424
    %v521 = vpack.c.b16 %v428, %v425
    %v522 = vpack.c.b16 %v432, %v429
    %v523 = vpack.c.b16 %v433, %v430
    %v524 = vpack.c.b16 %v434, %v431
    %v525 = vpack.c.b16 %v438, %v435
    %v526 = vpack.c.b16 %v439, %v436
    %v527 = vpack.c.b16 %v440, %v437
    %v528 = vpack.c.b16 %v444, %v441
    %v529 = vpack.c.b16 %v445, %v442
    %v530 = vpack.c.b16 %v446, %v443
    %v531 = vpack.c.b16 %v450, %v447
    %v532 = vpack.c.b16 %v451, %v448
    %v533 = vpack.c.b16 %v452, %v449
    %v534 = vpack.c.b16 %v456, %v453
    %v535 = vpack.c.b16 %v457, %v454
    %v536 = vpack.c.b16 %v458, %v455
    %v537 = vpack.c.b16 %v462, %v459
    %v538 = vpack.c.b16 %v463, %v460
    %v539 = vpack.c.b16 %v464, %v461
    %v540 = vpack.c.b16 %v468, %v465
    %v541 = vpack.c.b16 %v469, %v466
    %v542 = vpack.c.b16 %v470, %v467
    %v711 = vunpack.c.l.b16 %v118
    %v712 = vunpack.c.h.b16 %v118
    %v713 = vunpack.c.l.b16 %v119
    %v714 = vunpack.c.l.b16 %v120
    %v715 = vunpack.c.h.b16 %v120
    %v716 = vunpack.c.l.b16 %v121
    %v717 = vunpack.c.l.b16 %v122
    %v718 = vunpack.c.h.b16 %v122
    %v719 = vunpack.c.l.b16 %v123
    %v720 = vunpack.c.l.b16 %v124
    %v721 = vunpack.c.h.b16 %v124
    %v722 = vunpack.c.l.b16 %v125
    %v723 = vunpack.c.l.b16 %v126
    %v724 = vunpack.c.h.b16 %v126
    %v725 = vunpack.c.l.b16 %v127
    %v726 = vunpack.c.l.b16 %v128
    %v727 = vunpack.c.h.b16 %v128
    %v728 = vunpack.c.l.b16 %v129
    %v729 = vunpack.c.l.b16 %v130
    %v730 = vunpack.c.h.b16 %v130
    %v731 = vunpack.c.l.b16 %v131
    %v732 = vunpack.c.l.b16 %v132
    %v733 = vunpack.c.h.b16 %v132
    %v734 = vunpack.c.l.b16 %v133
    %v735 = vunpack.c.l.b16 %v134
    %v736 = vunpack.c.h.b16 %v134
    %v737 = vunpack.c.l.b16 %v135
    %v738 = vunpack.c.l.b16 %v136
    %v739 = vunpack.c.h.b16 %v136
    %v740 = vunpack.c.l.b16 %v137
    %v741 = vunpack.c.l.b16 %v138
    %v742 = vunpack.c.h.b16 %v138
    %v743 = vunpack.c.l.b16 %v139
    %v744 = vunpack.c.l.b16 %v140
    %v745 = vunpack.c.h.b16 %v140
    %v746 = vunpack.c.l.b16 %v141
    %v747 = vunpack.c.l.b16 %v142
    %v748 = vunpack.c.h.b16 %v142
    %v749 = vunpack.c.l.b16 %v143
    %v750 = vunpack.c.l.b16 %v144
    %v751 = vunpack.c.h.b16 %v144
    %v752 = vunpack.c.l.b16 %v145
    %v753 = vunpack.c.l.b16 %v146
    %v754 = vunpack.c.h.b16 %v146
    %v755 = vunpack.c.l.b16 %v147
    %v756 = vunpack.c.l.b16 %v148
    %v757 = vunpack.c.h.b16 %v148
    %v758 = vunpack.c.l.b16 %v149
    %v759 = vunpack.c.l.b16 %v150
    %v760 = vunpack.c.h.b16 %v150
    %v761 = vunpack.c.l.b16 %v151
    %v762 = vunpack.c.l.b16 %v152
    %v763 = vunpack.c.h.b16 %v152
    %v764 = vunpack.c.l.b16 %v153
    %v765 = vunpack.c.l.b16 %v154
    %v766 = vunpack.c.h.b16 %v154
    %v767 = vunpack.c.l.b16 %v155
    %v768 = vunpack.c.l.b16 %v156
    %v769 = vunpack.c.h.b16 %v156
    %v770 = vunpack.c.l.b16 %v157
    %v771 = vunpack.c.l.b16 %v158
    %v772 = vunpack.c.h.b16 %v158
    %v773 = vunpack.c.l.b16 %v159
    %v774 = vunpack.c.l.b16 %v160
    %v775 = vunpack.c.h.b16 %v160
    %v776 = vunpack.c.l.b16 %v161
    %v777 = vunpack.c.l.b16 %v162
    %v778 = vunpack.c.h.b16 %v162
    %v779 = vunpack.c.l.b16 %v163
    %v780 = vunpack.c.l.b16 %v164
    %v781 = vunpack.c.h.b16 %v164
    %v782 = vunpack.c.l.b16 %v165
    %v783 = vunpack.c.l.b16 %v166
    %v784 = vunpack.c.h.b16 %v166
    %v785 = vunpack.c.l.b16 %v167
    %v786 = vunpack.c.l.b16 %v168
    %v787 = vunpack.c.h.b16 %v168
    %v788 = vunpack.c.l.b16 %v169
    %v789 = vunpack.c.l.b16 %v170
    %v790 = vunpack.c.h.b16 %v170
    %v791 = vunpack.c.l.b16 %v171
    %v792 = vunpack.c.l.b16 %v172
    %v793 = vunpack.c.h.b16 %v172
    %v794 = vunpack.c.l.b16 %v173
    %v795 = vunpack.c.l.b16 %v174
    %v796 = vunpack.c.h.b16 %v174
    %v797 = vunpack.c.l.b16 %v175
    %v798 = vunpack.c.l.b16 %v176
    %v799 = vunpack.c.h.b16 %v176
    %v800 = vunpack.c.l.b16 %v177
    %v801 = vunpack.c.l.b16 %v178
    %v802 = vunpack.c.h.b16 %v178
    %v803 = vunpack.c.l.b16 %v179
    %v804 = vunpack.c.l.b16 %v180
    %v805 = vunpack.c.h.b16 %v180
    %v806 = vunpack.c.l.b16 %v181
    %v807 = vunpack.c.l.b16 %v182
    %v808 = vunpack.c.h.b16 %v182
    %v809 = vunpack.c.l.b16 %v183
    %v810 = vunpack.c.l.b16 %v184
    %v811 = vunpack.c.h.b16 %v184
    %v812 = vunpack.c.l.b16 %v185
    %v813 = vunpack.c.l.b16 %v186
    %v814 = vunpack.c.h.b16 %v186
    %v815 = vunpack.c.l.b16 %v187
    %v816 = vunpack.c.l.b16 %v188
    %v817 = vunpack.c.h.b16 %v188
    %v818 = vunpack.c.l.b16 %v189
    %v819 = vunpack.c.l.b16 %v190
    %v820 = vunpack.c.h.b16 %v190
    %v821 = vunpack.c.l.b16 %v191
    %v822 = vunpack.c.l.b16 %v192
    %v823 = vunpack.c.h.b16 %v192
    %v824 = vunpack.c.l.b16 %v193
    %v825 = vunpack.c.l.b16 %v194
    %v826 = vunpack.c.h.b16 %v194
    %v827 = vunpack.c.l.b16 %v195
    %v828 = vunpack.c.l.b16 %v196
    %v829 = vunpack.c.h.b16 %v196
    %v830 = vunpack.c.l.b16 %v197
    %v831 = vunpack.c.l.b16 %v198
    %v832 = vunpack.c.h.b16 %v198
    %v833 = vunpack.c.l.b16 %v199
    %v834 = vunpack.c.l.b16 %v200
    %v835 = vunpack.c.h.b16 %v200
    %v836 = vunpack.c.l.b16 %v201
    %v837 = vunpack.c.l.b16 %v202
    %v838 = vunpack.c.h.b16 %v202
    %v839 = vunpack.c.l.b16 %v203
    %v840 = vunpack.c.l.b16 %v204
    %v841 = vunpack.c.h.b16 %v204
    %v842 = vunpack.c.l.b16 %v205
    %v843 = vunpack.c.l.b16 %v206
    %v844 = vunpack.c.h.b16 %v206
    %v845 = vunpack.c.l.b16 %v207
    %v846 = vunpack.c.l.b16 %v208
    %v847 = vunpack.c.h.b16 %v208
    %v848 = vunpack.c.l.b16 %v209
    %v849 = vunpack.c.l.b16 %v210
    %v850 = vunpack.c.h.b16 %v210
    %v851 = vunpack.c.l.b16 %v211
    %v852 = vunpack.c.l.b16 %v212
    %v853 = vunpack.c.h.b16 %v212
    %v854 = vunpack.c.l.b16 %v213
    %v855 = vpack.c.b16 %v714, %v711
    %v856 = vpack.c.b16 %v715, %v712
    %v857 = vpack.c.b16 %v716, %v713
    %v858 = vpack.c.b16 %v720, %v717
    %v859 = vpack.c.b16 %v721, %v718
    %v860 = vpack.c.b16 %v722, %v719
    %v861 = vpack.c.b16 %v726, %v723
    %v862 = vpack.c.b16 %v727, %v724
    %v863 = vpack.c.b16 %v728, %v725
    %v864 = vpack.c.b16 %v732, %v729
    %v865 = vpack.c.b16 %v733, %v730
    %v866 = vpack.c.b16 %v734, %v731
    %v867 = vpack.c.b16 %v738, %v735
    %v868 = vpack.c.b16 %v739, %v736
    %v869 = vpack.c.b16 %v740, %v737
    %v870 = vpack.c.b16 %v744, %v741
    %v871 = vpack.c.b16 %v745, %v742
    %v872 = vpack.c.b16 %v746, %v743
    %v873 = vpack.c.b16 %v750, %v747
    %v874 = vpack.c.b16 %v751, %v748
    %v875 = vpack.c.b16 %v752, %v749
    %v876 = vpack.c.b16 %v756, %v753
    %v877 = vpack.c.b16 %v757, %v754
    %v878 = vpack.c.b16 %v758, %v755
    %v879 = vpack.c.b16 %v762, %v759
    %v880 = vpack.c.b16 %v763, %v760
    %v881 = vpack.c.b16 %v764, %v761
    %v882 = vpack.c.b16 %v768, %v765
    %v883 = vpack.c.b16 %v769, %v766
    %v884 = vpack.c.b16 %v770, %v767
    %v885 = vpack.c.b16 %v774, %v771
    %v886 = vpack.c.b16 %v775, %v772
    %v887 = vpack.c.b16 %v776, %v773
    %v888 = vpack.c.b16 %v780, %v777
    %v889 = vpack.c.b16 %v781, %v778
    %v890 = vpack.c.b16 %v782, %v779
    %v891 = vpack.c.b16 %v786, %v783
    %v892 = vpack.c.b16 %v787, %v784
    %v893 = vpack.c.b16 %v788, %v785
    %v894 = vpack.c.b16 %v792, %v789
    %v895 = vpack.c.b16 %v793, %v790
    %v896 = vpack.c.b16 %v794, %v791
    %v897 = vpack.c.b16 %v798, %v795
    %v898 = vpack.c.b16 %v799, %v796
    %v899 = vpack.c.b16 %v800, %v797
    %v900 = vpack.c.b16 %v804, %v801
    %v901 = vpack.c.b16 %v805, %v802
    %v902 = vpack.c.b16 %v806, %v803
    %v903 = vpack.c.b16 %v810, %v807
    %v904 = vpack.c.b16 %v811, %v808
    %v905 = vpack.c.b16 %v812, %v809
    %v906 = vpack.c.b16 %v816, %v813
    %v907 = vpack.c.b16 %v817, %v814
    %v908 = vpack.c.b16 %v818, %v815
    %v909 = vpack.c.b16 %v822, %v819
    %v910 = vpack.c.b16 %v823, %v820
    %v911 = vpack.c.b16 %v824, %v821
    %v912 = vpack.c.b16 %v828, %v825
    %v913 = vpack.c.b16 %v829, %v826
    %v914 = vpack.c.b16 %v830, %v827
    %v915 = vpack.c.b16 %v834, %v831
    %v916 = vpack.c.b16 %v835, %v832
    %v917 = vpack.c.b16 %v836, %v833
    %v918 = vpack.c.b16 %v840, %v837
    %v919 = vpack.c.b16 %v841, %v838
    %v920 = vpack.c.b16 %v842, %v839
    %v921 = vpack.c.b16 %v846, %v843
    %v922 = vpack.c.b16 %v847, %v844
    %v923 = vpack.c.b16 %v848, %v845
    %v924 = vpack.c.b16 %v852, %v849
    %v925 = vpack.c.b16 %v853, %v850
    %v926 = vpack.c.b16 %v854, %v851
    %999 = vmatprep.subr.bf16.mxu0 %v856
    %1000 = vmatpush1.bf16.msra.mxu0 %v855
    %1001 = vmatprep.subr.bf16.mxu0 %v859
    %1002 = vmatpush1.bf16.msra.mxu0 %v858
    %1003 = vmatprep.subr.bf16.mxu0 %v862
    %1004 = vmatpush1.bf16.msra.mxu0 %v861
    %1005 = vmatprep.subr.bf16.mxu0 %v865
    %1006 = vmatpush1.bf16.msra.mxu0 %v864
    %1007 = vmatprep.subr.bf16.mxu0 %v868
    %1008 = vmatpush1.bf16.msra.mxu0 %v867
    %1009 = vmatprep.subr.bf16.mxu0 %v871
    %1010 = vmatpush1.bf16.msra.mxu0 %v870
    %1011 = vmatprep.subr.bf16.mxu0 %v874
    %1012 = vmatpush1.bf16.msra.mxu0 %v873
    %1013 = vmatprep.subr.bf16.mxu0 %v877
    %1014 = vmatpush1.bf16.msra.mxu0 %v876
    %1015 = vmatprep.subr.bf16.mxu0 %v880
    %1016 = vmatpush1.bf16.msra.mxu0 %v879
    %1017 = vmatprep.subr.bf16.mxu0 %v883
    %1018 = vmatpush1.bf16.msra.mxu0 %v882
    %1019 = vmatprep.subr.bf16.mxu0 %v886
    %1020 = vmatpush1.bf16.msra.mxu0 %v885
    %1021 = vmatprep.subr.bf16.mxu0 %v889
    %1022 = vmatpush1.bf16.msra.mxu0 %v888
    %1023 = vmatprep.subr.bf16.mxu0 %v892
    %1024 = vmatpush1.bf16.msra.mxu0 %v891
    %1025 = vmatprep.subr.bf16.mxu0 %v895
    %1026 = vmatpush1.bf16.msra.mxu0 %v894
    %1027 = vmatprep.subr.bf16.mxu0 %v898
    %1028 = vmatpush1.bf16.msra.mxu0 %v897
    %1029 = vmatprep.subr.bf16.mxu0 %v901
    %1030 = vmatpush1.bf16.msra.mxu0 %v900
    %1031 = vmatprep.mubr.bf16.mxu0 %v472
    %1032 = vmatmul.mubr.bf16.gmra.mrb[0].mxu0 %v471
    %v1033 = vpop.f32.mrb[0].mxu0
    %v1034 = vadd.f32 %v219, %v1033
    %v1035 = vpop.f32.mrb[0].mxu0
    %v1036 = vadd.f32 %v223, %v1035
    %v1037 = vpop.f32.mrb[0].mxu0
    %v1038 = vadd.f32 %v219, %v1037
    %v1039 = vpop.f32.mrb[0].mxu0
    %v1040 = vadd.f32 %v223, %v1039
    %1041 = vmatprep.mubr.bf16.mxu0 %v475
    %1042 = vmatmul.mubr.bf16.gmra.mrb[0].mxu0 %v474
    %v1043 = vpop.f32.mrb[0].mxu0
    %v1044 = vadd.f32 %v219, %v1043
    %v1045 = vpop.f32.mrb[0].mxu0
    %v1046 = vadd.f32 %v223, %v1045
    %v1047 = vpop.f32.mrb[0].mxu0
    %v1048 = vadd.f32 %v219, %v1047
    %v1049 = vpop.f32.mrb[0].mxu0
    %v1050 = vadd.f32 %v223, %v1049
    %1051 = vmatprep.mubr.bf16.mxu0 %v478
    %1052 = vmatmul.mubr.bf16.gmra.mrb[0].mxu0 %v477
    %v1053 = vpop.f32.mrb[0].mxu0
    %v1054 = vadd.f32 %v219, %v1053
    %v1055 = vpop.f32.mrb[0].mxu0
    %v1056 = vadd.f32 %v223, %v1055
    %v1057 = vpop.f32.mrb[0].mxu0
    %v1058 = vadd.f32 %v219, %v1057
    %v1059 = vpop.f32.mrb[0].mxu0
    %v1060 = vadd.f32 %v223, %v1059
    %1061 = vmatprep.mubr.bf16.mxu0 %v481
    %1062 = vmatmul.mubr.bf16.gmra.mrb[0].mxu0 %v480
    %v1063 = vpop.f32.mrb[0].mxu0
    %v1064 = vadd.f32 %v219, %v1063
    %v1065 = vpop.f32.mrb[0].mxu0
    %v1066 = vadd.f32 %v223, %v1065
    %v1067 = vpop.f32.mrb[0].mxu0
    %v1068 = vadd.f32 %v219, %v1067
    %v1069 = vpop.f32.mrb[0].mxu0
    %v1070 = vadd.f32 %v223, %v1069
    %1071 = vmatprep.mubr.bf16.mxu0 %v484
    %1072 = vmatmul.mubr.bf16.gmra.mrb[0].mxu0 %v483
    %v1073 = vpop.f32.mrb[0].mxu0
    %v1074 = vadd.f32 %v219, %v1073
    %v1075 = vpop.f32.mrb[0].mxu0
    %v1076 = vadd.f32 %v223, %v1075
    %v1077 = vpop.f32.mrb[0].mxu0
    %v1078 = vadd.f32 %v219, %v1077
    %v1079 = vpop.f32.mrb[0].mxu0
    %v1080 = vadd.f32 %v223, %v1079
    %1081 = vmatprep.mubr.bf16.mxu0 %v487
    %1082 = vmatmul.mubr.bf16.gmra.mrb[0].mxu0 %v486
    %v1083 = vpop.f32.mrb[0].mxu0
    %v1084 = vadd.f32 %v219, %v1083
    %v1085 = vpop.f32.mrb[0].mxu0
    %v1086 = vadd.f32 %v223, %v1085
    %v1087 = vpop.f32.mrb[0].mxu0
    %v1088 = vadd.f32 %v219, %v1087
    %v1089 = vpop.f32.mrb[0].mxu0
    %v1090 = vadd.f32 %v223, %v1089
    %1091 = vmatprep.mubr.bf16.mxu0 %v490
    %1092 = vmatmul.mubr.bf16.gmra.mrb[0].mxu0 %v489
    %v1093 = vpop.f32.mrb[0].mxu0
    %v1094 = vadd.f32 %v219, %v1093
    %v1095 = vpop.f32.mrb[0].mxu0
    %v1096 = vadd.f32 %v223, %v1095
    %v1097 = vpop.f32.mrb[0].mxu0
    %v1098 = vadd.f32 %v219, %v1097
    %v1099 = vpop.f32.mrb[0].mxu0
    %v1100 = vadd.f32 %v223, %v1099
    %1101 = vmatprep.mubr.bf16.mxu0 %v493
    %1102 = vmatmul.mubr.bf16.gmra.mrb[0].mxu0 %v492
    %v1103 = vpop.f32.mrb[0].mxu0
    %v1104 = vadd.f32 %v219, %v1103
    %v1105 = vpop.f32.mrb[0].mxu0
    %v1106 = vadd.f32 %v223, %v1105
    %v1107 = vpop.f32.mrb[0].mxu0
    %v1108 = vadd.f32 %v219, %v1107
    %v1109 = vpop.f32.mrb[0].mxu0
    %v1110 = vadd.f32 %v223, %v1109
    %1111 = vmatprep.mubr.bf16.mxu0 %v496
    %1112 = vmatmul.mubr.bf16.gmra.mrb[0].mxu0 %v495
    %v1113 = vpop.f32.mrb[0].mxu0
    %v1114 = vadd.f32 %v219, %v1113
    %v1115 = vpop.f32.mrb[0].mxu0
    %v1116 = vadd.f32 %v223, %v1115
    %v1117 = vpop.f32.mrb[0].mxu0
    %v1118 = vadd.f32 %v219, %v1117
    %v1119 = vpop.f32.mrb[0].mxu0
    %v1120 = vadd.f32 %v223, %v1119
    %1121 = vmatprep.mubr.bf16.mxu0 %v499
    %1122 = vmatmul.mubr.bf16.gmra.mrb[0].mxu0 %v498
    %v1123 = vpop.f32.mrb[0].mxu0
    %v1124 = vadd.f32 %v219, %v1123
    %v1125 = vpop.f32.mrb[0].mxu0
    %v1126 = vadd.f32 %v223, %v1125
    %v1127 = vpop.f32.mrb[0].mxu0
    %v1128 = vadd.f32 %v219, %v1127
    %v1129 = vpop.f32.mrb[0].mxu0
    %v1130 = vadd.f32 %v223, %v1129
    %1131 = vmatprep.mubr.bf16.mxu0 %v502
    %1132 = vmatmul.mubr.bf16.gmra.mrb[0].mxu0 %v501
    %v1133 = vpop.f32.mrb[0].mxu0
    %v1134 = vadd.f32 %v219, %v1133
    %v1135 = vpop.f32.mrb[0].mxu0
    %v1136 = vadd.f32 %v223, %v1135
    %v1137 = vpop.f32.mrb[0].mxu0
    %v1138 = vadd.f32 %v219, %v1137
    %v1139 = vpop.f32.mrb[0].mxu0
    %v1140 = vadd.f32 %v223, %v1139
    %1141 = vmatprep.mubr.bf16.mxu0 %v505
    %1142 = vmatmul.mubr.bf16.gmra.mrb[0].mxu0 %v504
    %v1143 = vpop.f32.mrb[0].mxu0
    %v1144 = vadd.f32 %v219, %v1143
    %v1145 = vpop.f32.mrb[0].mxu0
    %v1146 = vadd.f32 %v223, %v1145
    %v1147 = vpop.f32.mrb[0].mxu0
    %v1148 = vadd.f32 %v219, %v1147
    %v1149 = vpop.f32.mrb[0].mxu0
    %v1150 = vadd.f32 %v223, %v1149
    %1151 = vmatprep.mubr.bf16.mxu0 %v508
    %1152 = vmatmul.mubr.bf16.gmra.mrb[0].mxu0 %v507
    %v1153 = vpop.f32.mrb[0].mxu0
    %v1154 = vadd.f32 %v219, %v1153
    %v1155 = vpop.f32.mrb[0].mxu0
    %v1156 = vadd.f32 %v223, %v1155
    %v1157 = vpop.f32.mrb[0].mxu0
    %v1158 = vadd.f32 %v219, %v1157
    %v1159 = vpop.f32.mrb[0].mxu0
    %v1160 = vadd.f32 %v223, %v1159
    %1161 = vmatprep.mubr.bf16.mxu0 %v511
    %1162 = vmatmul.mubr.bf16.gmra.mrb[0].mxu0 %v510
    %v1163 = vpop.f32.mrb[0].mxu0
    %v1164 = vadd.f32 %v219, %v1163
    %v1165 = vpop.f32.mrb[0].mxu0
    %v1166 = vadd.f32 %v223, %v1165
    %v1167 = vpop.f32.mrb[0].mxu0
    %v1168 = vadd.f32 %v219, %v1167
    %v1169 = vpop.f32.mrb[0].mxu0
    %v1170 = vadd.f32 %v223, %v1169
    %1171 = vmatprep.mubr.bf16.mxu0 %v514
    %1172 = vmatmul.mubr.bf16.gmra.mrb[0].mxu0 %v513
    %v1173 = vpop.f32.mrb[0].mxu0
    %v1174 = vadd.f32 %v219, %v1173
    %v1175 = vpop.f32.mrb[0].mxu0
    %v1176 = vadd.f32 %v223, %v1175
    %v1177 = vpop.f32.mrb[0].mxu0
    %v1178 = vadd.f32 %v219, %v1177
    %v1179 = vpop.f32.mrb[0].mxu0
    %v1180 = vadd.f32 %v223, %v1179
    %1181 = vmatprep.mubr.bf16.mxu0 %v517
    %1182 = vmatmul.mubr.bf16.gmra.mrb[0].mxu0 %v516
    %v1183 = vpop.f32.mrb[0].mxu0
    %v1184 = vadd.f32 %v219, %v1183
    %v1185 = vpop.f32.mrb[0].mxu0
    %v1186 = vadd.f32 %v223, %v1185
    %v1187 = vpop.f32.mrb[0].mxu0
    %v1188 = vadd.f32 %v219, %v1187
    %v1189 = vpop.f32.mrb[0].mxu0
    %v1190 = vadd.f32 %v223, %v1189
    %1191 = vmatprep.mubr.bf16.mxu0 %v520
    %1192 = vmatmul.mubr.bf16.gmra.mrb[0].mxu0 %v519
    %v1193 = vpop.f32.mrb[0].mxu0
    %v1194 = vadd.f32 %v219, %v1193
    %v1195 = vpop.f32.mrb[0].mxu0
    %v1196 = vadd.f32 %v223, %v1195
    %v1197 = vpop.f32.mrb[0].mxu0
    %v1198 = vadd.f32 %v219, %v1197
    %v1199 = vpop.f32.mrb[0].mxu0
    %v1200 = vadd.f32 %v223, %v1199
    %1201 = vmatprep.mubr.bf16.mxu0 %v523
    %1202 = vmatmul.mubr.bf16.gmra.mrb[0].mxu0 %v522
    %v1203 = vpop.f32.mrb[0].mxu0
    %v1204 = vadd.f32 %v219, %v1203
    %v1205 = vpop.f32.mrb[0].mxu0
    %v1206 = vadd.f32 %v223, %v1205
    %v1207 = vpop.f32.mrb[0].mxu0
    %v1208 = vadd.f32 %v219, %v1207
    %v1209 = vpop.f32.mrb[0].mxu0
    %v1210 = vadd.f32 %v223, %v1209
    %1211 = vmatprep.mubr.bf16.mxu0 %v526
    %1212 = vmatmul.mubr.bf16.gmra.mrb[0].mxu0 %v525
    %v1213 = vpop.f32.mrb[0].mxu0
    %v1214 = vadd.f32 %v219, %v1213
    %v1215 = vpop.f32.mrb[0].mxu0
    %v1216 = vadd.f32 %v223, %v1215
    %v1217 = vpop.f32.mrb[0].mxu0
    %v1218 = vadd.f32 %v219, %v1217
    %v1219 = vpop.f32.mrb[0].mxu0
    %v1220 = vadd.f32 %v223, %v1219
    %1221 = vmatprep.mubr.bf16.mxu0 %v529
    %1222 = vmatmul.mubr.bf16.gmra.mrb[0].mxu0 %v528
    %v1223 = vpop.f32.mrb[0].mxu0
    %v1224 = vadd.f32 %v219, %v1223
    %v1225 = vpop.f32.mrb[0].mxu0
    %v1226 = vadd.f32 %v223, %v1225
    %v1227 = vpop.f32.mrb[0].mxu0
    %v1228 = vadd.f32 %v219, %v1227
    %v1229 = vpop.f32.mrb[0].mxu0
    %v1230 = vadd.f32 %v223, %v1229
    %1231 = vmatprep.mubr.bf16.mxu0 %v532
    %1232 = vmatmul.mubr.bf16.gmra.mrb[0].mxu0 %v531
    %v1233 = vpop.f32.mrb[0].mxu0
    %v1234 = vadd.f32 %v219, %v1233
    %v1235 = vpop.f32.mrb[0].mxu0
    %v1236 = vadd.f32 %v223, %v1235
    %v1237 = vpop.f32.mrb[0].mxu0
    %v1238 = vadd.f32 %v219, %v1237
    %v1239 = vpop.f32.mrb[0].mxu0
    %v1240 = vadd.f32 %v223, %v1239
    %1241 = vmatprep.mubr.bf16.mxu0 %v535
    %1242 = vmatmul.mubr.bf16.gmra.mrb[0].mxu0 %v534
    %v1243 = vpop.f32.mrb[0].mxu0
    %v1244 = vadd.f32 %v219, %v1243
    %v1245 = vpop.f32.mrb[0].mxu0
    %v1246 = vadd.f32 %v223, %v1245
    %v1247 = vpop.f32.mrb[0].mxu0
    %v1248 = vadd.f32 %v219, %v1247
    %v1249 = vpop.f32.mrb[0].mxu0
    %v1250 = vadd.f32 %v223, %v1249
    %1251 = vmatprep.mubr.bf16.mxu0 %v538
    %1252 = vmatmul.mubr.bf16.gmra.mrb[0].mxu0 %v537
    %v1253 = vpop.f32.mrb[0].mxu0
    %v1254 = vadd.f32 %v219, %v1253
    %v1255 = vpop.f32.mrb[0].mxu0
    %v1256 = vadd.f32 %v223, %v1255
    %v1257 = vpop.f32.mrb[0].mxu0
    %v1258 = vadd.f32 %v219, %v1257
    %v1259 = vpop.f32.mrb[0].mxu0
    %v1260 = vadd.f32 %v223, %v1259
    %1261 = vmatprep.mubr.bf16.mxu0 %v541
    %1262 = vmatmul.mubr.bf16.gmra.mrb[0].mxu0 %v540
    %v1263 = vpop.f32.mrb[0].mxu0
    %v1264 = vadd.f32 %v219, %v1263
    %v1265 = vpop.f32.mrb[0].mxu0
    %v1266 = vadd.f32 %v223, %v1265
    %v1267 = vpop.f32.mrb[0].mxu0
    %v1268 = vadd.f32 %v219, %v1267
    %v1269 = vpop.f32.mrb[0].mxu0
    %v1270 = vadd.f32 %v223, %v1269
    %1271 = vdwg.mxu0
    %1272 = vmatprep.subr.bf16.mxu0 %v904
    %1273 = vmatpush1.bf16.msra.mxu0 %v903
    %1274 = vmatprep.subr.bf16.mxu0 %v907
    %1275 = vmatpush1.bf16.msra.mxu0 %v906
    %1276 = vmatprep.subr.bf16.mxu0 %v910
    %1277 = vmatpush1.bf16.msra.mxu0 %v909
    %1278 = vmatprep.subr.bf16.mxu0 %v913
    %1279 = vmatpush1.bf16.msra.mxu0 %v912
    %1280 = vmatprep.subr.bf16.mxu0 %v916
    %1281 = vmatpush1.bf16.msra.mxu0 %v915
    %1282 = vmatprep.subr.bf16.mxu0 %v919
    %1283 = vmatpush1.bf16.msra.mxu0 %v918
    %1284 = vmatprep.subr.bf16.mxu0 %v922
    %1285 = vmatpush1.bf16.msra.mxu0 %v921
    %1286 = vmatprep.subr.bf16.mxu0 %v925
    %1287 = vmatpush1.bf16.msra.mxu0 %v924
    %1288 = vmatprep.subr.bf16.mxu0 0
    %1289 = vmatpush1.bf16.msra.mxu0 0
    %1290 = vmatprep.subr.bf16.mxu0 0
    %1291 = vmatpush1.bf16.msra.mxu0 0
    %1292 = vmatprep.subr.bf16.mxu0 0
    %1293 = vmatpush1.bf16.msra.mxu0 0
    %1294 = vmatprep.subr.bf16.mxu0 0
    %1295 = vmatpush1.bf16.msra.mxu0 0
    %1296 = vmatprep.subr.bf16.mxu0 0
    %1297 = vmatpush1.bf16.msra.mxu0 0
    %1298 = vmatprep.subr.bf16.mxu0 0
    %1299 = vmatpush1.bf16.msra.mxu0 0
    %1300 = vmatprep.subr.bf16.mxu0 0
    %1301 = vmatpush1.bf16.msra.mxu0 0
    %1302 = vmatprep.subr.bf16.mxu0 0
    %1303 = vmatpush1.bf16.msra.mxu0 0
    %1304 = vmatprep.mubr.bf16.mxu0 0
    %1305 = vmatmul.mubr.bf16.gmra.mrb[0].mxu0 %v473
    %v1306 = vpop.f32.mrb[0].mxu0
    %v1307 = vadd.f32 %v1034, %v1306
    %v1308 = vpop.f32.mrb[0].mxu0
    %v1309 = vadd.f32 %v1036, %v1308
    %v1310 = vpop.f32.mrb[0].mxu0
    %v1311 = vadd.f32 %v1038, %v1310
    %v1312 = vpop.f32.mrb[0].mxu0
    %v1313 = vadd.f32 %v1040, %v1312
    %1314 = vmatprep.mubr.bf16.mxu0 0
    %1315 = vmatmul.mubr.bf16.gmra.mrb[0].mxu0 %v476
    %v1316 = vpop.f32.mrb[0].mxu0
    %v1317 = vadd.f32 %v1044, %v1316
    %v1318 = vpop.f32.mrb[0].mxu0
    %v1319 = vadd.f32 %v1046, %v1318
    %v1320 = vpop.f32.mrb[0].mxu0
    %v1321 = vadd.f32 %v1048, %v1320
    %v1322 = vpop.f32.mrb[0].mxu0
    %v1323 = vadd.f32 %v1050, %v1322
    %1324 = vmatprep.mubr.bf16.mxu0 0
    %1325 = vmatmul.mubr.bf16.gmra.mrb[0].mxu0 %v479
    %v1326 = vpop.f32.mrb[0].mxu0
    %v1327 = vadd.f32 %v1054, %v1326
    %v1328 = vpop.f32.mrb[0].mxu0
    %v1329 = vadd.f32 %v1056, %v1328
    %v1330 = vpop.f32.mrb[0].mxu0
    %v1331 = vadd.f32 %v1058, %v1330
    %v1332 = vpop.f32.mrb[0].mxu0
    %v1333 = vadd.f32 %v1060, %v1332
    %1334 = vmatprep.mubr.bf16.mxu0 0
    %1335 = vmatmul.mubr.bf16.gmra.mrb[0].mxu0 %v482
    %v1336 = vpop.f32.mrb[0].mxu0
    %v1337 = vadd.f32 %v1064, %v1336
    %v1338 = vpop.f32.mrb[0].mxu0
    %v1339 = vadd.f32 %v1066, %v1338
    %v1340 = vpop.f32.mrb[0].mxu0
    %v1341 = vadd.f32 %v1068, %v1340
    %v1342 = vpop.f32.mrb[0].mxu0
    %v1343 = vadd.f32 %v1070, %v1342
    %1344 = vmatprep.mubr.bf16.mxu0 0
    %1345 = vmatmul.mubr.bf16.gmra.mrb[0].mxu0 %v485
    %v1346 = vpop.f32.mrb[0].mxu0
    %v1347 = vadd.f32 %v1074, %v1346
    %v1348 = vpop.f32.mrb[0].mxu0
    %v1349 = vadd.f32 %v1076, %v1348
    %v1350 = vpop.f32.mrb[0].mxu0
    %v1351 = vadd.f32 %v1078, %v1350
    %v1352 = vpop.f32.mrb[0].mxu0
    %v1353 = vadd.f32 %v1080, %v1352
    %1354 = vmatprep.mubr.bf16.mxu0 0
    %1355 = vmatmul.mubr.bf16.gmra.mrb[0].mxu0 %v488
    %v1356 = vpop.f32.mrb[0].mxu0
    %v1357 = vadd.f32 %v1084, %v1356
    %v1358 = vpop.f32.mrb[0].mxu0
    %v1359 = vadd.f32 %v1086, %v1358
    %v1360 = vpop.f32.mrb[0].mxu0
    %v1361 = vadd.f32 %v1088, %v1360
    %v1362 = vpop.f32.mrb[0].mxu0
    %v1363 = vadd.f32 %v1090, %v1362
    %1364 = vmatprep.mubr.bf16.mxu0 0
    %1365 = vmatmul.mubr.bf16.gmra.mrb[0].mxu0 %v491
    %v1366 = vpop.f32.mrb[0].mxu0
    %v1367 = vadd.f32 %v1094, %v1366
    %v1368 = vpop.f32.mrb[0].mxu0
    %v1369 = vadd.f32 %v1096, %v1368
    %v1370 = vpop.f32.mrb[0].mxu0
    %v1371 = vadd.f32 %v1098, %v1370
    %v1372 = vpop.f32.mrb[0].mxu0
    %v1373 = vadd.f32 %v1100, %v1372
    %1374 = vmatprep.mubr.bf16.mxu0 0
    %1375 = vmatmul.mubr.bf16.gmra.mrb[0].mxu0 %v494
    %v1376 = vpop.f32.mrb[0].mxu0
    %v1377 = vadd.f32 %v1104, %v1376
    %v1378 = vpop.f32.mrb[0].mxu0
    %v1379 = vadd.f32 %v1106, %v1378
    %v1380 = vpop.f32.mrb[0].mxu0
    %v1381 = vadd.f32 %v1108, %v1380
    %v1382 = vpop.f32.mrb[0].mxu0
    %v1383 = vadd.f32 %v1110, %v1382
    %1384 = vmatprep.mubr.bf16.mxu0 0
    %1385 = vmatmul.mubr.bf16.gmra.mrb[0].mxu0 %v497
    %v1386 = vpop.f32.mrb[0].mxu0
    %v1387 = vadd.f32 %v1114, %v1386
    %v1388 = vpop.f32.mrb[0].mxu0
    %v1389 = vadd.f32 %v1116, %v1388
    %v1390 = vpop.f32.mrb[0].mxu0
    %v1391 = vadd.f32 %v1118, %v1390
    %v1392 = vpop.f32.mrb[0].mxu0
    %v1393 = vadd.f32 %v1120, %v1392
    %1394 = vmatprep.mubr.bf16.mxu0 0
    %1395 = vmatmul.mubr.bf16.gmra.mrb[0].mxu0 %v500
    %v1396 = vpop.f32.mrb[0].mxu0
    %v1397 = vadd.f32 %v1124, %v1396
    %v1398 = vpop.f32.mrb[0].mxu0
    %v1399 = vadd.f32 %v1126, %v1398
    %v1400 = vpop.f32.mrb[0].mxu0
    %v1401 = vadd.f32 %v1128, %v1400
    %v1402 = vpop.f32.mrb[0].mxu0
    %v1403 = vadd.f32 %v1130, %v1402
    %1404 = vmatprep.mubr.bf16.mxu0 0
    %1405 = vmatmul.mubr.bf16.gmra.mrb[0].mxu0 %v503
    %v1406 = vpop.f32.mrb[0].mxu0
    %v1407 = vadd.f32 %v1134, %v1406
    %v1408 = vpop.f32.mrb[0].mxu0
    %v1409 = vadd.f32 %v1136, %v1408
    %v1410 = vpop.f32.mrb[0].mxu0
    %v1411 = vadd.f32 %v1138, %v1410
    %v1412 = vpop.f32.mrb[0].mxu0
    %v1413 = vadd.f32 %v1140, %v1412
    %1414 = vmatprep.mubr.bf16.mxu0 0
    %1415 = vmatmul.mubr.bf16.gmra.mrb[0].mxu0 %v506
    %v1416 = vpop.f32.mrb[0].mxu0
    %v1417 = vadd.f32 %v1144, %v1416
    %v1418 = vpop.f32.mrb[0].mxu0
    %v1419 = vadd.f32 %v1146, %v1418
    %v1420 = vpop.f32.mrb[0].mxu0
    %v1421 = vadd.f32 %v1148, %v1420
    %v1422 = vpop.f32.mrb[0].mxu0
    %v1423 = vadd.f32 %v1150, %v1422
    %1424 = vmatprep.mubr.bf16.mxu0 0
    %1425 = vmatmul.mubr.bf16.gmra.mrb[0].mxu0 %v509
    %v1426 = vpop.f32.mrb[0].mxu0
    %v1427 = vadd.f32 %v1154, %v1426
    %v1428 = vpop.f32.mrb[0].mxu0
    %v1429 = vadd.f32 %v1156, %v1428
    %v1430 = vpop.f32.mrb[0].mxu0
    %v1431 = vadd.f32 %v1158, %v1430
    %v1432 = vpop.f32.mrb[0].mxu0
    %v1433 = vadd.f32 %v1160, %v1432
    %1434 = vmatprep.mubr.bf16.mxu0 0
    %1435 = vmatmul.mubr.bf16.gmra.mrb[0].mxu0 %v512
    %v1436 = vpop.f32.mrb[0].mxu0
    %v1437 = vadd.f32 %v1164, %v1436
    %v1438 = vpop.f32.mrb[0].mxu0
    %v1439 = vadd.f32 %v1166, %v1438
    %v1440 = vpop.f32.mrb[0].mxu0
    %v1441 = vadd.f32 %v1168, %v1440
    %v1442 = vpop.f32.mrb[0].mxu0
    %v1443 = vadd.f32 %v1170, %v1442
    %1444 = vmatprep.mubr.bf16.mxu0 0
    %1445 = vmatmul.mubr.bf16.gmra.mrb[0].mxu0 %v515
    %v1446 = vpop.f32.mrb[0].mxu0
    %v1447 = vadd.f32 %v1174, %v1446
    %v1448 = vpop.f32.mrb[0].mxu0
    %v1449 = vadd.f32 %v1176, %v1448
    %v1450 = vpop.f32.mrb[0].mxu0
    %v1451 = vadd.f32 %v1178, %v1450
    %v1452 = vpop.f32.mrb[0].mxu0
    %v1453 = vadd.f32 %v1180, %v1452
    %1454 = vmatprep.mubr.bf16.mxu0 0
    %1455 = vmatmul.mubr.bf16.gmra.mrb[0].mxu0 %v518
    %v1456 = vpop.f32.mrb[0].mxu0
    %v1457 = vadd.f32 %v1184, %v1456
    %v1458 = vpop.f32.mrb[0].mxu0
    %v1459 = vadd.f32 %v1186, %v1458
    %v1460 = vpop.f32.mrb[0].mxu0
    %v1461 = vadd.f32 %v1188, %v1460
    %v1462 = vpop.f32.mrb[0].mxu0
    %v1463 = vadd.f32 %v1190, %v1462
    %1464 = vmatprep.mubr.bf16.mxu0 0
    %1465 = vmatmul.mubr.bf16.gmra.mrb[0].mxu0 %v521
    %v1466 = vpop.f32.mrb[0].mxu0
    %v1467 = vadd.f32 %v1194, %v1466
    %v1468 = vpop.f32.mrb[0].mxu0
    %v1469 = vadd.f32 %v1196, %v1468
    %v1470 = vpop.f32.mrb[0].mxu0
    %v1471 = vadd.f32 %v1198, %v1470
    %v1472 = vpop.f32.mrb[0].mxu0
    %v1473 = vadd.f32 %v1200, %v1472
    %1474 = vmatprep.mubr.bf16.mxu0 0
    %1475 = vmatmul.mubr.bf16.gmra.mrb[0].mxu0 %v524
    %v1476 = vpop.f32.mrb[0].mxu0
    %v1477 = vadd.f32 %v1204, %v1476
    %v1478 = vpop.f32.mrb[0].mxu0
    %v1479 = vadd.f32 %v1206, %v1478
    %v1480 = vpop.f32.mrb[0].mxu0
    %v1481 = vadd.f32 %v1208, %v1480
    %v1482 = vpop.f32.mrb[0].mxu0
    %v1483 = vadd.f32 %v1210, %v1482
    %1484 = vmatprep.mubr.bf16.mxu0 0
    %1485 = vmatmul.mubr.bf16.gmra.mrb[0].mxu0 %v527
    %v1486 = vpop.f32.mrb[0].mxu0
    %v1487 = vadd.f32 %v1214, %v1486
    %v1488 = vpop.f32.mrb[0].mxu0
    %v1489 = vadd.f32 %v1216, %v1488
    %v1490 = vpop.f32.mrb[0].mxu0
    %v1491 = vadd.f32 %v1218, %v1490
    %v1492 = vpop.f32.mrb[0].mxu0
    %v1493 = vadd.f32 %v1220, %v1492
    %1494 = vmatprep.mubr.bf16.mxu0 0
    %1495 = vmatmul.mubr.bf16.gmra.mrb[0].mxu0 %v530
    %v1496 = vpop.f32.mrb[0].mxu0
    %v1497 = vadd.f32 %v1224, %v1496
    %v1498 = vpop.f32.mrb[0].mxu0
    %v1499 = vadd.f32 %v1226, %v1498
    %v1500 = vpop.f32.mrb[0].mxu0
    %v1501 = vadd.f32 %v1228, %v1500
    %v1502 = vpop.f32.mrb[0].mxu0
    %v1503 = vadd.f32 %v1230, %v1502
    %1504 = vmatprep.mubr.bf16.mxu0 0
    %1505 = vmatmul.mubr.bf16.gmra.mrb[0].mxu0 %v533
    %v1506 = vpop.f32.mrb[0].mxu0
    %v1507 = vadd.f32 %v1234, %v1506
    %v1508 = vpop.f32.mrb[0].mxu0
    %v1509 = vadd.f32 %v1236, %v1508
    %v1510 = vpop.f32.mrb[0].mxu0
    %v1511 = vadd.f32 %v1238, %v1510
    %v1512 = vpop.f32.mrb[0].mxu0
    %v1513 = vadd.f32 %v1240, %v1512
    %1514 = vmatprep.mubr.bf16.mxu0 0
    %1515 = vmatmul.mubr.bf16.gmra.mrb[0].mxu0 %v536
    %v1516 = vpop.f32.mrb[0].mxu0
    %v1517 = vadd.f32 %v1244, %v1516
    %v1518 = vpop.f32.mrb[0].mxu0
    %v1519 = vadd.f32 %v1246, %v1518
    %v1520 = vpop.f32.mrb[0].mxu0
    %v1521 = vadd.f32 %v1248, %v1520
    %v1522 = vpop.f32.mrb[0].mxu0
    %v1523 = vadd.f32 %v1250, %v1522
    %1524 = vmatprep.mubr.bf16.mxu0 0
    %1525 = vmatmul.mubr.bf16.gmra.mrb[0].mxu0 %v539
    %v1526 = vpop.f32.mrb[0].mxu0
    %v1527 = vadd.f32 %v1254, %v1526
    %v1528 = vpop.f32.mrb[0].mxu0
    %v1529 = vadd.f32 %v1256, %v1528
    %v1530 = vpop.f32.mrb[0].mxu0
    %v1531 = vadd.f32 %v1258, %v1530
    %v1532 = vpop.f32.mrb[0].mxu0
    %v1533 = vadd.f32 %v1260, %v1532
    %1534 = vmatprep.mubr.bf16.mxu0 0
    %1535 = vmatmul.mubr.bf16.gmra.mrb[0].mxu0 %v542
    %v1536 = vpop.f32.mrb[0].mxu0
    %v1537 = vadd.f32 %v1264, %v1536
    %v1538 = vpop.f32.mrb[0].mxu0
    %v1539 = vadd.f32 %v1266, %v1538
    %v1540 = vpop.f32.mrb[0].mxu0
    %v1541 = vadd.f32 %v1268, %v1540
    %v1542 = vpop.f32.mrb[0].mxu0
    %v1543 = vadd.f32 %v1270, %v1542
    %1544 = vdwg.mxu0
    %1545 = vmatprep.subr.bf16.mxu0 0
    %1546 = vmatpush1.bf16.msra.mxu0 %v857
    %1547 = vmatprep.subr.bf16.mxu0 0
    %1548 = vmatpush1.bf16.msra.mxu0 %v860
    %1549 = vmatprep.subr.bf16.mxu0 0
    %1550 = vmatpush1.bf16.msra.mxu0 %v863
    %1551 = vmatprep.subr.bf16.mxu0 0
    %1552 = vmatpush1.bf16.msra.mxu0 %v866
    %1553 = vmatprep.subr.bf16.mxu0 0
    %1554 = vmatpush1.bf16.msra.mxu0 %v869
    %1555 = vmatprep.subr.bf16.mxu0 0
    %1556 = vmatpush1.bf16.msra.mxu0 %v872
    %1557 = vmatprep.subr.bf16.mxu0 0
    %1558 = vmatpush1.bf16.msra.mxu0 %v875
    %1559 = vmatprep.subr.bf16.mxu0 0
    %1560 = vmatpush1.bf16.msra.mxu0 %v878
    %1561 = vmatprep.subr.bf16.mxu0 0
    %1562 = vmatpush1.bf16.msra.mxu0 %v881
    %1563 = vmatprep.subr.bf16.mxu0 0
    %1564 = vmatpush1.bf16.msra.mxu0 %v884
    %1565 = vmatprep.subr.bf16.mxu0 0
    %1566 = vmatpush1.bf16.msra.mxu0 %v887
    %1567 = vmatprep.subr.bf16.mxu0 0
    %1568 = vmatpush1.bf16.msra.mxu0 %v890
    %1569 = vmatprep.subr.bf16.mxu0 0
    %1570 = vmatpush1.bf16.msra.mxu0 %v893
    %1571 = vmatprep.subr.bf16.mxu0 0
    %1572 = vmatpush1.bf16.msra.mxu0 %v896
    %1573 = vmatprep.subr.bf16.mxu0 0
    %1574 = vmatpush1.bf16.msra.mxu0 %v899
    %1575 = vmatprep.subr.bf16.mxu0 0
    %1576 = vmatpush1.bf16.msra.mxu0 %v902
    %1577 = vmatprep.mubr.bf16.mxu0 %v472
    %1578 = vmatmul.mubr.bf16.gmra.mrb[0].mxu0 %v471
    %v1579 = vpop.f32.mrb[0].mxu0
    %v1580 = vadd.f32 %v227, %v1579
    %v1581 = vpop.f32.mrb[0].mxu0
    %v1582 = vpop.f32.mrb[0].mxu0
    %v1583 = vadd.f32 %v227, %v1582
    %v1584 = vpop.f32.mrb[0].mxu0
    %1585 = vmatprep.mubr.bf16.mxu0 %v475
    %1586 = vmatmul.mubr.bf16.gmra.mrb[0].mxu0 %v474
    %v1587 = vpop.f32.mrb[0].mxu0
    %v1588 = vadd.f32 %v227, %v1587
    %v1589 = vpop.f32.mrb[0].mxu0
    %v1590 = vpop.f32.mrb[0].mxu0
    %v1591 = vadd.f32 %v227, %v1590
    %v1592 = vpop.f32.mrb[0].mxu0
    %1593 = vmatprep.mubr.bf16.mxu0 %v478
    %1594 = vmatmul.mubr.bf16.gmra.mrb[0].mxu0 %v477
    %v1595 = vpop.f32.mrb[0].mxu0
    %v1596 = vadd.f32 %v227, %v1595
    %v1597 = vpop.f32.mrb[0].mxu0
    %v1598 = vpop.f32.mrb[0].mxu0
    %v1599 = vadd.f32 %v227, %v1598
    %v1600 = vpop.f32.mrb[0].mxu0
    %1601 = vmatprep.mubr.bf16.mxu0 %v481
    %1602 = vmatmul.mubr.bf16.gmra.mrb[0].mxu0 %v480
    %v1603 = vpop.f32.mrb[0].mxu0
    %v1604 = vadd.f32 %v227, %v1603
    %v1605 = vpop.f32.mrb[0].mxu0
    %v1606 = vpop.f32.mrb[0].mxu0
    %v1607 = vadd.f32 %v227, %v1606
    %v1608 = vpop.f32.mrb[0].mxu0
    %1609 = vmatprep.mubr.bf16.mxu0 %v484
    %1610 = vmatmul.mubr.bf16.gmra.mrb[0].mxu0 %v483
    %v1611 = vpop.f32.mrb[0].mxu0
    %v1612 = vadd.f32 %v227, %v1611
    %v1613 = vpop.f32.mrb[0].mxu0
    %v1614 = vpop.f32.mrb[0].mxu0
    %v1615 = vadd.f32 %v227, %v1614
    %v1616 = vpop.f32.mrb[0].mxu0
    %1617 = vmatprep.mubr.bf16.mxu0 %v487
    %1618 = vmatmul.mubr.bf16.gmra.mrb[0].mxu0 %v486
    %v1619 = vpop.f32.mrb[0].mxu0
    %v1620 = vadd.f32 %v227, %v1619
    %v1621 = vpop.f32.mrb[0].mxu0
    %v1622 = vpop.f32.mrb[0].mxu0
    %v1623 = vadd.f32 %v227, %v1622
    %v1624 = vpop.f32.mrb[0].mxu0
    %1625 = vmatprep.mubr.bf16.mxu0 %v490
    %1626 = vmatmul.mubr.bf16.gmra.mrb[0].mxu0 %v489
    %v1627 = vpop.f32.mrb[0].mxu0
    %v1628 = vadd.f32 %v227, %v1627
    %v1629 = vpop.f32.mrb[0].mxu0
    %v1630 = vpop.f32.mrb[0].mxu0
    %v1631 = vadd.f32 %v227, %v1630
    %v1632 = vpop.f32.mrb[0].mxu0
    %1633 = vmatprep.mubr.bf16.mxu0 %v493
    %1634 = vmatmul.mubr.bf16.gmra.mrb[0].mxu0 %v492
    %v1635 = vpop.f32.mrb[0].mxu0
    %v1636 = vadd.f32 %v227, %v1635
    %v1637 = vpop.f32.mrb[0].mxu0
    %v1638 = vpop.f32.mrb[0].mxu0
    %v1639 = vadd.f32 %v227, %v1638
    %v1640 = vpop.f32.mrb[0].mxu0
    %1641 = vmatprep.mubr.bf16.mxu0 %v496
    %1642 = vmatmul.mubr.bf16.gmra.mrb[0].mxu0 %v495
    %v1643 = vpop.f32.mrb[0].mxu0
    %v1644 = vadd.f32 %v227, %v1643
    %v1645 = vpop.f32.mrb[0].mxu0
    %v1646 = vpop.f32.mrb[0].mxu0
    %v1647 = vadd.f32 %v227, %v1646
    %v1648 = vpop.f32.mrb[0].mxu0
    %1649 = vmatprep.mubr.bf16.mxu0 %v499
    %1650 = vmatmul.mubr.bf16.gmra.mrb[0].mxu0 %v498
    %v1651 = vpop.f32.mrb[0].mxu0
    %v1652 = vadd.f32 %v227, %v1651
    %v1653 = vpop.f32.mrb[0].mxu0
    %v1654 = vpop.f32.mrb[0].mxu0
    %v1655 = vadd.f32 %v227, %v1654
    %v1656 = vpop.f32.mrb[0].mxu0
    %1657 = vmatprep.mubr.bf16.mxu0 %v502
    %1658 = vmatmul.mubr.bf16.gmra.mrb[0].mxu0 %v501
    %v1659 = vpop.f32.mrb[0].mxu0
    %v1660 = vadd.f32 %v227, %v1659
    %v1661 = vpop.f32.mrb[0].mxu0
    %v1662 = vpop.f32.mrb[0].mxu0
    %v1663 = vadd.f32 %v227, %v1662
    %v1664 = vpop.f32.mrb[0].mxu0
    %1665 = vmatprep.mubr.bf16.mxu0 %v505
    %1666 = vmatmul.mubr.bf16.gmra.mrb[0].mxu0 %v504
    %v1667 = vpop.f32.mrb[0].mxu0
    %v1668 = vadd.f32 %v227, %v1667
    %v1669 = vpop.f32.mrb[0].mxu0
    %v1670 = vpop.f32.mrb[0].mxu0
    %v1671 = vadd.f32 %v227, %v1670
    %v1672 = vpop.f32.mrb[0].mxu0
    %1673 = vmatprep.mubr.bf16.mxu0 %v508
    %1674 = vmatmul.mubr.bf16.gmra.mrb[0].mxu0 %v507
    %v1675 = vpop.f32.mrb[0].mxu0
    %v1676 = vadd.f32 %v227, %v1675
    %v1677 = vpop.f32.mrb[0].mxu0
    %v1678 = vpop.f32.mrb[0].mxu0
    %v1679 = vadd.f32 %v227, %v1678
    %v1680 = vpop.f32.mrb[0].mxu0
    %1681 = vmatprep.mubr.bf16.mxu0 %v511
    %1682 = vmatmul.mubr.bf16.gmra.mrb[0].mxu0 %v510
    %v1683 = vpop.f32.mrb[0].mxu0
    %v1684 = vadd.f32 %v227, %v1683
    %v1685 = vpop.f32.mrb[0].mxu0
    %v1686 = vpop.f32.mrb[0].mxu0
    %v1687 = vadd.f32 %v227, %v1686
    %v1688 = vpop.f32.mrb[0].mxu0
    %1689 = vmatprep.mubr.bf16.mxu0 %v514
    %1690 = vmatmul.mubr.bf16.gmra.mrb[0].mxu0 %v513
    %v1691 = vpop.f32.mrb[0].mxu0
    %v1692 = vadd.f32 %v227, %v1691
    %v1693 = vpop.f32.mrb[0].mxu0
    %v1694 = vpop.f32.mrb[0].mxu0
    %v1695 = vadd.f32 %v227, %v1694
    %v1696 = vpop.f32.mrb[0].mxu0
    %1697 = vmatprep.mubr.bf16.mxu0 %v517
    %1698 = vmatmul.mubr.bf16.gmra.mrb[0].mxu0 %v516
    %v1699 = vpop.f32.mrb[0].mxu0
    %v1700 = vadd.f32 %v227, %v1699
    %v1701 = vpop.f32.mrb[0].mxu0
    %v1702 = vpop.f32.mrb[0].mxu0
    %v1703 = vadd.f32 %v227, %v1702
    %v1704 = vpop.f32.mrb[0].mxu0
    %1705 = vmatprep.mubr.bf16.mxu0 %v520
    %1706 = vmatmul.mubr.bf16.gmra.mrb[0].mxu0 %v519
    %v1707 = vpop.f32.mrb[0].mxu0
    %v1708 = vadd.f32 %v227, %v1707
    %v1709 = vpop.f32.mrb[0].mxu0
    %v1710 = vpop.f32.mrb[0].mxu0
    %v1711 = vadd.f32 %v227, %v1710
    %v1712 = vpop.f32.mrb[0].mxu0
    %1713 = vmatprep.mubr.bf16.mxu0 %v523
    %1714 = vmatmul.mubr.bf16.gmra.mrb[0].mxu0 %v522
    %v1715 = vpop.f32.mrb[0].mxu0
    %v1716 = vadd.f32 %v227, %v1715
    %v1717 = vpop.f32.mrb[0].mxu0
    %v1718 = vpop.f32.mrb[0].mxu0
    %v1719 = vadd.f32 %v227, %v1718
    %v1720 = vpop.f32.mrb[0].mxu0
    %1721 = vmatprep.mubr.bf16.mxu0 %v526
    %1722 = vmatmul.mubr.bf16.gmra.mrb[0].mxu0 %v525
    %v1723 = vpop.f32.mrb[0].mxu0
    %v1724 = vadd.f32 %v227, %v1723
    %v1725 = vpop.f32.mrb[0].mxu0
    %v1726 = vpop.f32.mrb[0].mxu0
    %v1727 = vadd.f32 %v227, %v1726
    %v1728 = vpop.f32.mrb[0].mxu0
    %1729 = vmatprep.mubr.bf16.mxu0 %v529
    %1730 = vmatmul.mubr.bf16.gmra.mrb[0].mxu0 %v528
    %v1731 = vpop.f32.mrb[0].mxu0
    %v1732 = vadd.f32 %v227, %v1731
    %v1733 = vpop.f32.mrb[0].mxu0
    %v1734 = vpop.f32.mrb[0].mxu0
    %v1735 = vadd.f32 %v227, %v1734
    %v1736 = vpop.f32.mrb[0].mxu0
    %1737 = vmatprep.mubr.bf16.mxu0 %v532
    %1738 = vmatmul.mubr.bf16.gmra.mrb[0].mxu0 %v531
    %v1739 = vpop.f32.mrb[0].mxu0
    %v1740 = vadd.f32 %v227, %v1739
    %v1741 = vpop.f32.mrb[0].mxu0
    %v1742 = vpop.f32.mrb[0].mxu0
    %v1743 = vadd.f32 %v227, %v1742
    %v1744 = vpop.f32.mrb[0].mxu0
    %1745 = vmatprep.mubr.bf16.mxu0 %v535
    %1746 = vmatmul.mubr.bf16.gmra.mrb[0].mxu0 %v534
    %v1747 = vpop.f32.mrb[0].mxu0
    %v1748 = vadd.f32 %v227, %v1747
    %v1749 = vpop.f32.mrb[0].mxu0
    %v1750 = vpop.f32.mrb[0].mxu0
    %v1751 = vadd.f32 %v227, %v1750
    %v1752 = vpop.f32.mrb[0].mxu0
    %1753 = vmatprep.mubr.bf16.mxu0 %v538
    %1754 = vmatmul.mubr.bf16.gmra.mrb[0].mxu0 %v537
    %v1755 = vpop.f32.mrb[0].mxu0
    %v1756 = vadd.f32 %v227, %v1755
    %v1757 = vpop.f32.mrb[0].mxu0
    %v1758 = vpop.f32.mrb[0].mxu0
    %v1759 = vadd.f32 %v227, %v1758
    %v1760 = vpop.f32.mrb[0].mxu0
    %1761 = vmatprep.mubr.bf16.mxu0 %v541
    %1762 = vmatmul.mubr.bf16.gmra.mrb[0].mxu0 %v540
    %v1763 = vpop.f32.mrb[0].mxu0
    %v1764 = vadd.f32 %v227, %v1763
    %v1765 = vpop.f32.mrb[0].mxu0
    %v1766 = vpop.f32.mrb[0].mxu0
    %v1767 = vadd.f32 %v227, %v1766
    %v1768 = vpop.f32.mrb[0].mxu0
    %1769 = vdwg.mxu0
    %1770 = vmatprep.subr.bf16.mxu0 0
    %1771 = vmatpush1.bf16.msra.mxu0 %v905
    %1772 = vmatprep.subr.bf16.mxu0 0
    %1773 = vmatpush1.bf16.msra.mxu0 %v908
    %1774 = vmatprep.subr.bf16.mxu0 0
    %1775 = vmatpush1.bf16.msra.mxu0 %v911
    %1776 = vmatprep.subr.bf16.mxu0 0
    %1777 = vmatpush1.bf16.msra.mxu0 %v914
    %1778 = vmatprep.subr.bf16.mxu0 0
    %1779 = vmatpush1.bf16.msra.mxu0 %v917
    %1780 = vmatprep.subr.bf16.mxu0 0
    %1781 = vmatpush1.bf16.msra.mxu0 %v920
    %1782 = vmatprep.subr.bf16.mxu0 0
    %1783 = vmatpush1.bf16.msra.mxu0 %v923
    %1784 = vmatprep.subr.bf16.mxu0 0
    %1785 = vmatpush1.bf16.msra.mxu0 %v926
    %1786 = vmatprep.subr.bf16.mxu0 0
    %1787 = vmatpush1.bf16.msra.mxu0 0
    %1788 = vmatprep.subr.bf16.mxu0 0
    %1789 = vmatpush1.bf16.msra.mxu0 0
    %1790 = vmatprep.subr.bf16.mxu0 0
    %1791 = vmatpush1.bf16.msra.mxu0 0
    %1792 = vmatprep.subr.bf16.mxu0 0
    %1793 = vmatpush1.bf16.msra.mxu0 0
    %1794 = vmatprep.subr.bf16.mxu0 0
    %1795 = vmatpush1.bf16.msra.mxu0 0
    %1796 = vmatprep.subr.bf16.mxu0 0
    %1797 = vmatpush1.bf16.msra.mxu0 0
    %1798 = vmatprep.subr.bf16.mxu0 0
    %1799 = vmatpush1.bf16.msra.mxu0 0
    %1800 = vmatprep.subr.bf16.mxu0 0
    %1801 = vmatpush1.bf16.msra.mxu0 0
    %1802 = vmatprep.mubr.bf16.mxu0 0
    %1803 = vmatmul.mubr.bf16.gmra.mrb[0].mxu0 %v473
    %v1804 = vpop.f32.mrb[0].mxu0
    %v1805 = vadd.f32 %v1580, %v1804
    %v1806 = vpop.f32.mrb[0].mxu0
    %v1807 = vpop.f32.mrb[0].mxu0
    %v1808 = vadd.f32 %v1583, %v1807
    %v1809 = vpop.f32.mrb[0].mxu0
    %1810 = vmatprep.mubr.bf16.mxu0 0
    %1811 = vmatmul.mubr.bf16.gmra.mrb[0].mxu0 %v476
    %v1812 = vpop.f32.mrb[0].mxu0
    %v1813 = vadd.f32 %v1588, %v1812
    %v1814 = vpop.f32.mrb[0].mxu0
    %v1815 = vpop.f32.mrb[0].mxu0
    %v1816 = vadd.f32 %v1591, %v1815
    %v1817 = vpop.f32.mrb[0].mxu0
    %1818 = vmatprep.mubr.bf16.mxu0 0
    %1819 = vmatmul.mubr.bf16.gmra.mrb[0].mxu0 %v479
    %v1820 = vpop.f32.mrb[0].mxu0
    %v1821 = vadd.f32 %v1596, %v1820
    %v1822 = vpop.f32.mrb[0].mxu0
    %v1823 = vpop.f32.mrb[0].mxu0
    %v1824 = vadd.f32 %v1599, %v1823
    %v1825 = vpop.f32.mrb[0].mxu0
    %1826 = vmatprep.mubr.bf16.mxu0 0
    %1827 = vmatmul.mubr.bf16.gmra.mrb[0].mxu0 %v482
    %v1828 = vpop.f32.mrb[0].mxu0
    %v1829 = vadd.f32 %v1604, %v1828
    %v1830 = vpop.f32.mrb[0].mxu0
    %v1831 = vpop.f32.mrb[0].mxu0
    %v1832 = vadd.f32 %v1607, %v1831
    %v1833 = vpop.f32.mrb[0].mxu0
    %1834 = vmatprep.mubr.bf16.mxu0 0
    %1835 = vmatmul.mubr.bf16.gmra.mrb[0].mxu0 %v485
    %v1836 = vpop.f32.mrb[0].mxu0
    %v1837 = vadd.f32 %v1612, %v1836
    %v1838 = vpop.f32.mrb[0].mxu0
    %v1839 = vpop.f32.mrb[0].mxu0
    %v1840 = vadd.f32 %v1615, %v1839
    %v1841 = vpop.f32.mrb[0].mxu0
    %1842 = vmatprep.mubr.bf16.mxu0 0
    %1843 = vmatmul.mubr.bf16.gmra.mrb[0].mxu0 %v488
    %v1844 = vpop.f32.mrb[0].mxu0
    %v1845 = vadd.f32 %v1620, %v1844
    %v1846 = vpop.f32.mrb[0].mxu0
    %v1847 = vpop.f32.mrb[0].mxu0
    %v1848 = vadd.f32 %v1623, %v1847
    %v1849 = vpop.f32.mrb[0].mxu0
    %1850 = vmatprep.mubr.bf16.mxu0 0
    %1851 = vmatmul.mubr.bf16.gmra.mrb[0].mxu0 %v491
    %v1852 = vpop.f32.mrb[0].mxu0
    %v1853 = vadd.f32 %v1628, %v1852
    %v1854 = vpop.f32.mrb[0].mxu0
    %v1855 = vpop.f32.mrb[0].mxu0
    %v1856 = vadd.f32 %v1631, %v1855
    %v1857 = vpop.f32.mrb[0].mxu0
    %1858 = vmatprep.mubr.bf16.mxu0 0
    %1859 = vmatmul.mubr.bf16.gmra.mrb[0].mxu0 %v494
    %v1860 = vpop.f32.mrb[0].mxu0
    %v1861 = vadd.f32 %v1636, %v1860
    %v1862 = vpop.f32.mrb[0].mxu0
    %v1863 = vpop.f32.mrb[0].mxu0
    %v1864 = vadd.f32 %v1639, %v1863
    %v1865 = vpop.f32.mrb[0].mxu0
    %1866 = vmatprep.mubr.bf16.mxu0 0
    %1867 = vmatmul.mubr.bf16.gmra.mrb[0].mxu0 %v497
    %v1868 = vpop.f32.mrb[0].mxu0
    %v1869 = vadd.f32 %v1644, %v1868
    %v1870 = vpop.f32.mrb[0].mxu0
    %v1871 = vpop.f32.mrb[0].mxu0
    %v1872 = vadd.f32 %v1647, %v1871
    %v1873 = vpop.f32.mrb[0].mxu0
    %1874 = vmatprep.mubr.bf16.mxu0 0
    %1875 = vmatmul.mubr.bf16.gmra.mrb[0].mxu0 %v500
    %v1876 = vpop.f32.mrb[0].mxu0
    %v1877 = vadd.f32 %v1652, %v1876
    %v1878 = vpop.f32.mrb[0].mxu0
    %v1879 = vpop.f32.mrb[0].mxu0
    %v1880 = vadd.f32 %v1655, %v1879
    %v1881 = vpop.f32.mrb[0].mxu0
    %1882 = vmatprep.mubr.bf16.mxu0 0
    %1883 = vmatmul.mubr.bf16.gmra.mrb[0].mxu0 %v503
    %v1884 = vpop.f32.mrb[0].mxu0
    %v1885 = vadd.f32 %v1660, %v1884
    %v1886 = vpop.f32.mrb[0].mxu0
    %v1887 = vpop.f32.mrb[0].mxu0
    %v1888 = vadd.f32 %v1663, %v1887
    %v1889 = vpop.f32.mrb[0].mxu0
    %1890 = vmatprep.mubr.bf16.mxu0 0
    %1891 = vmatmul.mubr.bf16.gmra.mrb[0].mxu0 %v506
    %v1892 = vpop.f32.mrb[0].mxu0
    %v1893 = vadd.f32 %v1668, %v1892
    %v1894 = vpop.f32.mrb[0].mxu0
    %v1895 = vpop.f32.mrb[0].mxu0
    %v1896 = vadd.f32 %v1671, %v1895
    %v1897 = vpop.f32.mrb[0].mxu0
    %1898 = vmatprep.mubr.bf16.mxu0 0
    %1899 = vmatmul.mubr.bf16.gmra.mrb[0].mxu0 %v509
    %v1900 = vpop.f32.mrb[0].mxu0
    %v1901 = vadd.f32 %v1676, %v1900
    %v1902 = vpop.f32.mrb[0].mxu0
    %v1903 = vpop.f32.mrb[0].mxu0
    %v1904 = vadd.f32 %v1679, %v1903
    %v1905 = vpop.f32.mrb[0].mxu0
    %1906 = vmatprep.mubr.bf16.mxu0 0
    %1907 = vmatmul.mubr.bf16.gmra.mrb[0].mxu0 %v512
    %v1908 = vpop.f32.mrb[0].mxu0
    %v1909 = vadd.f32 %v1684, %v1908
    %v1910 = vpop.f32.mrb[0].mxu0
    %v1911 = vpop.f32.mrb[0].mxu0
    %v1912 = vadd.f32 %v1687, %v1911
    %v1913 = vpop.f32.mrb[0].mxu0
    %1914 = vmatprep.mubr.bf16.mxu0 0
    %1915 = vmatmul.mubr.bf16.gmra.mrb[0].mxu0 %v515
    %v1916 = vpop.f32.mrb[0].mxu0
    %v1917 = vadd.f32 %v1692, %v1916
    %v1918 = vpop.f32.mrb[0].mxu0
    %v1919 = vpop.f32.mrb[0].mxu0
    %v1920 = vadd.f32 %v1695, %v1919
    %v1921 = vpop.f32.mrb[0].mxu0
    %1922 = vmatprep.mubr.bf16.mxu0 0
    %1923 = vmatmul.mubr.bf16.gmra.mrb[0].mxu0 %v518
    %v1924 = vpop.f32.mrb[0].mxu0
    %v1925 = vadd.f32 %v1700, %v1924
    %v1926 = vpop.f32.mrb[0].mxu0
    %v1927 = vpop.f32.mrb[0].mxu0
    %v1928 = vadd.f32 %v1703, %v1927
    %v1929 = vpop.f32.mrb[0].mxu0
    %1930 = vmatprep.mubr.bf16.mxu0 0
    %1931 = vmatmul.mubr.bf16.gmra.mrb[0].mxu0 %v521
    %v1932 = vpop.f32.mrb[0].mxu0
    %v1933 = vadd.f32 %v1708, %v1932
    %v1934 = vpop.f32.mrb[0].mxu0
    %v1935 = vpop.f32.mrb[0].mxu0
    %v1936 = vadd.f32 %v1711, %v1935
    %v1937 = vpop.f32.mrb[0].mxu0
    %1938 = vmatprep.mubr.bf16.mxu0 0
    %1939 = vmatmul.mubr.bf16.gmra.mrb[0].mxu0 %v524
    %v1940 = vpop.f32.mrb[0].mxu0
    %v1941 = vadd.f32 %v1716, %v1940
    %v1942 = vpop.f32.mrb[0].mxu0
    %v1943 = vpop.f32.mrb[0].mxu0
    %v1944 = vadd.f32 %v1719, %v1943
    %v1945 = vpop.f32.mrb[0].mxu0
    %1946 = vmatprep.mubr.bf16.mxu0 0
    %1947 = vmatmul.mubr.bf16.gmra.mrb[0].mxu0 %v527
    %v1948 = vpop.f32.mrb[0].mxu0
    %v1949 = vadd.f32 %v1724, %v1948
    %v1950 = vpop.f32.mrb[0].mxu0
    %v1951 = vpop.f32.mrb[0].mxu0
    %v1952 = vadd.f32 %v1727, %v1951
    %v1953 = vpop.f32.mrb[0].mxu0
    %1954 = vmatprep.mubr.bf16.mxu0 0
    %1955 = vmatmul.mubr.bf16.gmra.mrb[0].mxu0 %v530
    %v1956 = vpop.f32.mrb[0].mxu0
    %v1957 = vadd.f32 %v1732, %v1956
    %v1958 = vpop.f32.mrb[0].mxu0
    %v1959 = vpop.f32.mrb[0].mxu0
    %v1960 = vadd.f32 %v1735, %v1959
    %v1961 = vpop.f32.mrb[0].mxu0
    %1962 = vmatprep.mubr.bf16.mxu0 0
    %1963 = vmatmul.mubr.bf16.gmra.mrb[0].mxu0 %v533
    %v1964 = vpop.f32.mrb[0].mxu0
    %v1965 = vadd.f32 %v1740, %v1964
    %v1966 = vpop.f32.mrb[0].mxu0
    %v1967 = vpop.f32.mrb[0].mxu0
    %v1968 = vadd.f32 %v1743, %v1967
    %v1969 = vpop.f32.mrb[0].mxu0
    %1970 = vmatprep.mubr.bf16.mxu0 0
    %1971 = vmatmul.mubr.bf16.gmra.mrb[0].mxu0 %v536
    %v1972 = vpop.f32.mrb[0].mxu0
    %v1973 = vadd.f32 %v1748, %v1972
    %v1974 = vpop.f32.mrb[0].mxu0
    %v1975 = vpop.f32.mrb[0].mxu0
    %v1976 = vadd.f32 %v1751, %v1975
    %v1977 = vpop.f32.mrb[0].mxu0
    %1978 = vmatprep.mubr.bf16.mxu0 0
    %1979 = vmatmul.mubr.bf16.gmra.mrb[0].mxu0 %v539
    %v1980 = vpop.f32.mrb[0].mxu0
    %v1981 = vadd.f32 %v1756, %v1980
    %v1982 = vpop.f32.mrb[0].mxu0
    %v1983 = vpop.f32.mrb[0].mxu0
    %v1984 = vadd.f32 %v1759, %v1983
    %v1985 = vpop.f32.mrb[0].mxu0
    %1986 = vmatprep.mubr.bf16.mxu0 0
    %1987 = vmatmul.mubr.bf16.gmra.mrb[0].mxu0 %v542
    %v1988 = vpop.f32.mrb[0].mxu0
    %v1989 = vadd.f32 %v1764, %v1988
    %v1990 = vpop.f32.mrb[0].mxu0
    %v1991 = vpop.f32.mrb[0].mxu0
    %v1992 = vadd.f32 %v1767, %v1991
    %v1993 = vpop.f32.mrb[0].mxu0
    %1994 = vdwg.mxu0
    %v1995 = vpack.c.bf16 %v1311, %v1307
    %v1996 = vpack.c.bf16 %v1313, %v1309
    %v1997 = vpack.c.bf16 %v1808, %v1805
    %v1998 = vpack.c.bf16 %v1321, %v1317
    %v1999 = vpack.c.bf16 %v1323, %v1319
    %v2000 = vpack.c.bf16 %v1816, %v1813
    %v2001 = vpack.c.bf16 %v1331, %v1327
    %v2002 = vpack.c.bf16 %v1333, %v1329
    %v2003 = vpack.c.bf16 %v1824, %v1821
    %v2004 = vpack.c.bf16 %v1341, %v1337
    %v2005 = vpack.c.bf16 %v1343, %v1339
    %v2006 = vpack.c.bf16 %v1832, %v1829
    %v2007 = vpack.c.bf16 %v1351, %v1347
    %v2008 = vpack.c.bf16 %v1353, %v1349
    %v2009 = vpack.c.bf16 %v1840, %v1837
    %v2010 = vpack.c.bf16 %v1361, %v1357
    %v2011 = vpack.c.bf16 %v1363, %v1359
    %v2012 = vpack.c.bf16 %v1848, %v1845
    %v2013 = vpack.c.bf16 %v1371, %v1367
    %v2014 = vpack.c.bf16 %v1373, %v1369
    %v2015 = vpack.c.bf16 %v1856, %v1853
    %v2016 = vpack.c.bf16 %v1381, %v1377
    %v2017 = vpack.c.bf16 %v1383, %v1379
    %v2018 = vpack.c.bf16 %v1864, %v1861
    %v2019 = vpack.c.bf16 %v1391, %v1387
    %v2020 = vpack.c.bf16 %v1393, %v1389
    %v2021 = vpack.c.bf16 %v1872, %v1869
    %v2022 = vpack.c.bf16 %v1401, %v1397
    %v2023 = vpack.c.bf16 %v1403, %v1399
    %v2024 = vpack.c.bf16 %v1880, %v1877
    %v2025 = vpack.c.bf16 %v1411, %v1407
    %v2026 = vpack.c.bf16 %v1413, %v1409
    %v2027 = vpack.c.bf16 %v1888, %v1885
    %v2028 = vpack.c.bf16 %v1421, %v1417
    %v2029 = vpack.c.bf16 %v1423, %v1419
    %v2030 = vpack.c.bf16 %v1896, %v1893
    %v2031 = vpack.c.bf16 %v1431, %v1427
    %v2032 = vpack.c.bf16 %v1433, %v1429
    %v2033 = vpack.c.bf16 %v1904, %v1901
    %v2034 = vpack.c.bf16 %v1441, %v1437
    %v2035 = vpack.c.bf16 %v1443, %v1439
    %v2036 = vpack.c.bf16 %v1912, %v1909
    %v2037 = vpack.c.bf16 %v1451, %v1447
    %v2038 = vpack.c.bf16 %v1453, %v1449
    %v2039 = vpack.c.bf16 %v1920, %v1917
    %v2040 = vpack.c.bf16 %v1461, %v1457
    %v2041 = vpack.c.bf16 %v1463, %v1459
    %v2042 = vpack.c.bf16 %v1928, %v1925
    %v2043 = vpack.c.bf16 %v1471, %v1467
    %v2044 = vpack.c.bf16 %v1473, %v1469
    %v2045 = vpack.c.bf16 %v1936, %v1933
    %v2046 = vpack.c.bf16 %v1481, %v1477
    %v2047 = vpack.c.bf16 %v1483, %v1479
    %v2048 = vpack.c.bf16 %v1944, %v1941
    %v2049 = vpack.c.bf16 %v1491, %v1487
    %v2050 = vpack.c.bf16 %v1493, %v1489
    %v2051 = vpack.c.bf16 %v1952, %v1949
    %v2052 = vpack.c.bf16 %v1501, %v1497
    %v2053 = vpack.c.bf16 %v1503, %v1499
    %v2054 = vpack.c.bf16 %v1960, %v1957
    %v2055 = vpack.c.bf16 %v1511, %v1507
    %v2056 = vpack.c.bf16 %v1513, %v1509
    %v2057 = vpack.c.bf16 %v1968, %v1965
    %v2058 = vpack.c.bf16 %v1521, %v1517
    %v2059 = vpack.c.bf16 %v1523, %v1519
    %v2060 = vpack.c.bf16 %v1976, %v1973
    %v2061 = vpack.c.bf16 %v1531, %v1527
    %v2062 = vpack.c.bf16 %v1533, %v1529
    %v2063 = vpack.c.bf16 %v1984, %v1981
    %v2064 = vpack.c.bf16 %v1541, %v1537
    %v2065 = vpack.c.bf16 %v1543, %v1539
    %v2066 = vpack.c.bf16 %v1992, %v1989
    %2067 = vst [vmem:[#allocation2] sm:$0xff] %v1995
    %2068 = vst [vmem:[#allocation2 + $0x8] sm:$0xff] %v1996
    %2069 = vst [vmem:[#allocation2 + $0x10] sm:$0xff] %v1997
    %2070 = vst [vmem:[#allocation2 + $0x18] sm:$0xff] %v1998
    %2071 = vst [vmem:[#allocation2 + $0x20] sm:$0xff] %v1999
    %2072 = vst [vmem:[#allocation2 + $0x28] sm:$0xff] %v2000
    %2073 = vst [vmem:[#allocation2 + $0x30] sm:$0xff] %v2001
    %2074 = vst [vmem:[#allocation2 + $0x38] sm:$0xff] %v2002
    %2075 = vst [vmem:[#allocation2 + $0x40] sm:$0xff] %v2003
    %2076 = vst [vmem:[#allocation2 + $0x48] sm:$0xff] %v2004
    %2077 = vst [vmem:[#allocation2 + $0x50] sm:$0xff] %v2005
    %2078 = vst [vmem:[#allocation2 + $0x58] sm:$0xff] %v2006
    %2079 = vst [vmem:[#allocation2 + $0x60] sm:$0xff] %v2007
    %2080 = vst [vmem:[#allocation2 + $0x68] sm:$0xff] %v2008
    %2081 = vst [vmem:[#allocation2 + $0x70] sm:$0xff] %v2009
    %2082 = vst [vmem:[#allocation2 + $0x78] sm:$0xff] %v2010
    %2083 = vst [vmem:[#allocation2 + $0x80] sm:$0xff] %v2011
    %2084 = vst [vmem:[#allocation2 + $0x88] sm:$0xff] %v2012
    %2085 = vst [vmem:[#allocation2 + $0x90] sm:$0xff] %v2013
    %2086 = vst [vmem:[#allocation2 + $0x98] sm:$0xff] %v2014
    %2087 = vst [vmem:[#allocation2 + $0xa0] sm:$0xff] %v2015
    %2088 = vst [vmem:[#allocation2 + $0xa8] sm:$0xff] %v2016
    %2089 = vst [vmem:[#allocation2 + $0xb0] sm:$0xff] %v2017
    %2090 = vst [vmem:[#allocation2 + $0xb8] sm:$0xff] %v2018
    %2091 = vst [vmem:[#allocation2 + $0xc0] sm:$0xff] %v2019
    %2092 = vst [vmem:[#allocation2 + $0xc8] sm:$0xff] %v2020
    %2093 = vst [vmem:[#allocation2 + $0xd0] sm:$0xff] %v2021
    %2094 = vst [vmem:[#allocation2 + $0xd8] sm:$0xff] %v2022
    %2095 = vst [vmem:[#allocation2 + $0xe0] sm:$0xff] %v2023
    %2096 = vst [vmem:[#allocation2 + $0xe8] sm:$0xff] %v2024
    %2097 = vst [vmem:[#allocation2 + $0xf0] sm:$0xff] %v2025
    %2098 = vst [vmem:[#allocation2 + $0xf8] sm:$0xff] %v2026
    %2099 = vst [vmem:[#allocation2 + $0x100] sm:$0xff] %v2027
    %2100 = vst [vmem:[#allocation2 + $0x108] sm:$0xff] %v2028
    %2101 = vst [vmem:[#allocation2 + $0x110] sm:$0xff] %v2029
    %2102 = vst [vmem:[#allocation2 + $0x118] sm:$0xff] %v2030
    %2103 = vst [vmem:[#allocation2 + $0x120] sm:$0xff] %v2031
    %2104 = vst [vmem:[#allocation2 + $0x128] sm:$0xff] %v2032
    %2105 = vst [vmem:[#allocation2 + $0x130] sm:$0xff] %v2033
    %2106 = vst [vmem:[#allocation2 + $0x138] sm:$0xff] %v2034
    %2107 = vst [vmem:[#allocation2 + $0x140] sm:$0xff] %v2035
    %2108 = vst [vmem:[#allocation2 + $0x148] sm:$0xff] %v2036
    %2109 = vst [vmem:[#allocation2 + $0x150] sm:$0xff] %v2037
    %2110 = vst [vmem:[#allocation2 + $0x158] sm:$0xff] %v2038
    %2111 = vst [vmem:[#allocation2 + $0x160] sm:$0xff] %v2039
    %2112 = vst [vmem:[#allocation2 + $0x168] sm:$0xff] %v2040
    %2113 = vst [vmem:[#allocation2 + $0x170] sm:$0xff] %v2041
    %2114 = vst [vmem:[#allocation2 + $0x178] sm:$0xff] %v2042
    %2115 = vst [vmem:[#allocation2 + $0x180] sm:$0xff] %v2043
    %2116 = vst [vmem:[#allocation2 + $0x188] sm:$0xff] %v2044
    %2117 = vst [vmem:[#allocation2 + $0x190] sm:$0xff] %v2045
    %2118 = vst [vmem:[#allocation2 + $0x198] sm:$0xff] %v2046
    %2119 = vst [vmem:[#allocation2 + $0x1a0] sm:$0xff] %v2047
    %2120 = vst [vmem:[#allocation2 + $0x1a8] sm:$0xff] %v2048
    %2121 = vst [vmem:[#allocation2 + $0x1b0] sm:$0xff] %v2049
    %2122 = vst [vmem:[#allocation2 + $0x1b8] sm:$0xff] %v2050
    %2123 = vst [vmem:[#allocation2 + $0x1c0] sm:$0xff] %v2051
    %2124 = vst [vmem:[#allocation2 + $0x1c8] sm:$0xff] %v2052
    %2125 = vst [vmem:[#allocation2 + $0x1d0] sm:$0xff] %v2053
    %2126 = vst [vmem:[#allocation2 + $0x1d8] sm:$0xff] %v2054
    %2127 = vst [vmem:[#allocation2 + $0x1e0] sm:$0xff] %v2055
    %2128 = vst [vmem:[#allocation2 + $0x1e8] sm:$0xff] %v2056
    %2129 = vst [vmem:[#allocation2 + $0x1f0] sm:$0xff] %v2057
    %2130 = vst [vmem:[#allocation2 + $0x1f8] sm:$0xff] %v2058
    %2131 = vst [vmem:[#allocation2 + $0x200] sm:$0xff] %v2059
    %2132 = vst [vmem:[#allocation2 + $0x208] sm:$0xff] %v2060
    %2133 = vst [vmem:[#allocation2 + $0x210] sm:$0xff] %v2061
    %2134 = vst [vmem:[#allocation2 + $0x218] sm:$0xff] %v2062
    %2135 = vst [vmem:[#allocation2 + $0x220] sm:$0xff] %v2063
    %2136 = vst [vmem:[#allocation2 + $0x228] sm:$0xff] %v2064
    %2137 = vst [vmem:[#allocation2 + $0x230] sm:$0xff] %v2065
    %2138 = vst [vmem:[#allocation2 + $0x238] sm:$0xff] %v2066
    %v2139 = vld [vmem:[#allocation2] sm:$0xff]
    %v2140 = vld [vmem:[#allocation2 + $0x18] sm:$0xff]
    %v2141 = vld [vmem:[#allocation2 + $0x30] sm:$0xff]
    %v2142 = vld [vmem:[#allocation2 + $0x48] sm:$0xff]
    %vm2143 = vcmask 523264
    %2144 = vst.msk [vmem:[#allocation3] sm:$0xff] %vm2143, %v2139
    %2145 = vst.msk [vmem:[#allocation3 + $0x18] sm:$0xff] %vm2143, %v2140
    %2146 = vst.msk [vmem:[#allocation3 + $0x30] sm:$0xff] %vm2143, %v2141
    %2147 = vst.msk [vmem:[#allocation3 + $0x48] sm:$0xff] %vm2143, %v2142
    %v2148 = vld [vmem:[#allocation2 + $0x60] sm:$0xff]
    %v2149 = vld [vmem:[#allocation2 + $0x78] sm:$0xff]
    %v2150 = vld [vmem:[#allocation2 + $0x90] sm:$0xff]
    %v2151 = vld [vmem:[#allocation2 + $0xa8] sm:$0xff]
    %2156 = vrot.lane.b32.xlu0 %v2148, 64
    %v2157 = vpop.permute.xlu0 %2156
    %2158 = vrot.lane.b32.xlu0 %v2149, 64
    %v2159 = vpop.permute.xlu0 %2158
    %2160 = vrot.lane.b32.xlu0 %v2150, 64
    %v2161 = vpop.permute.xlu0 %2160
    %2162 = vrot.lane.b32.xlu0 %v2151, 64
    %v2163 = vpop.permute.xlu0 %2162
    %vm2168 = vcmask 1048064
    %2169 = vst.msk [vmem:[#allocation3] sm:$0xff] %vm2168, %v2157
    %2170 = vst.msk [vmem:[#allocation3 + $0x18] sm:$0xff] %vm2168, %v2159
    %2171 = vst.msk [vmem:[#allocation3 + $0x30] sm:$0xff] %vm2168, %v2161
    %2172 = vst.msk [vmem:[#allocation3 + $0x48] sm:$0xff] %vm2168, %v2163
    %v2173 = vld [vmem:[#allocation2 + $0xc0] sm:$0xff]
    %v2174 = vld [vmem:[#allocation2 + $0xd8] sm:$0xff]
    %v2175 = vld [vmem:[#allocation2 + $0xf0] sm:$0xff]
    %v2176 = vld [vmem:[#allocation2 + $0x108] sm:$0xff]
    %2177 = vst.msk [vmem:[#allocation3 + $0x8] sm:$0xff] %vm2143, %v2173
    %2178 = vst.msk [vmem:[#allocation3 + $0x20] sm:$0xff] %vm2143, %v2174
    %2179 = vst.msk [vmem:[#allocation3 + $0x38] sm:$0xff] %vm2143, %v2175
    %2180 = vst.msk [vmem:[#allocation3 + $0x50] sm:$0xff] %vm2143, %v2176
    %v2181 = vld [vmem:[#allocation2 + $0x120] sm:$0xff]
    %v2182 = vld [vmem:[#allocation2 + $0x138] sm:$0xff]
    %v2183 = vld [vmem:[#allocation2 + $0x150] sm:$0xff]
    %v2184 = vld [vmem:[#allocation2 + $0x168] sm:$0xff]
    %2189 = vrot.lane.b32.xlu0 %v2181, 64
    %v2190 = vpop.permute.xlu0 %2189
    %2191 = vrot.lane.b32.xlu0 %v2182, 64
    %v2192 = vpop.permute.xlu0 %2191
    %2193 = vrot.lane.b32.xlu0 %v2183, 64
    %v2194 = vpop.permute.xlu0 %2193
    %2195 = vrot.lane.b32.xlu0 %v2184, 64
    %v2196 = vpop.permute.xlu0 %2195
    %2201 = vst.msk [vmem:[#allocation3 + $0x8] sm:$0xff] %vm2168, %v2190
    %2202 = vst.msk [vmem:[#allocation3 + $0x20] sm:$0xff] %vm2168, %v2192
    %2203 = vst.msk [vmem:[#allocation3 + $0x38] sm:$0xff] %vm2168, %v2194
    %2204 = vst.msk [vmem:[#allocation3 + $0x50] sm:$0xff] %vm2168, %v2196
    %v2205 = vld [vmem:[#allocation2 + $0x180] sm:$0xff]
    %v2206 = vld [vmem:[#allocation2 + $0x198] sm:$0xff]
    %v2207 = vld [vmem:[#allocation2 + $0x1b0] sm:$0xff]
    %v2208 = vld [vmem:[#allocation2 + $0x1c8] sm:$0xff]
    %2209 = vst.msk [vmem:[#allocation3 + $0x10] sm:$0xff] %vm2143, %v2205
    %2210 = vst.msk [vmem:[#allocation3 + $0x28] sm:$0xff] %vm2143, %v2206
    %2211 = vst.msk [vmem:[#allocation3 + $0x40] sm:$0xff] %vm2143, %v2207
    %2212 = vst.msk [vmem:[#allocation3 + $0x58] sm:$0xff] %vm2143, %v2208
    %v2213 = vld [vmem:[#allocation2 + $0x1e0] sm:$0xff]
    %v2214 = vld [vmem:[#allocation2 + $0x1f8] sm:$0xff]
    %v2215 = vld [vmem:[#allocation2 + $0x210] sm:$0xff]
    %v2216 = vld [vmem:[#allocation2 + $0x228] sm:$0xff]
    %2221 = vrot.lane.b32.xlu0 %v2213, 64
    %v2222 = vpop.permute.xlu0 %2221
    %2223 = vrot.lane.b32.xlu0 %v2214, 64
    %v2224 = vpop.permute.xlu0 %2223
    %2225 = vrot.lane.b32.xlu0 %v2215, 64
    %v2226 = vpop.permute.xlu0 %2225
    %2227 = vrot.lane.b32.xlu0 %v2216, 64
    %v2228 = vpop.permute.xlu0 %2227
    %2233 = vst.msk [vmem:[#allocation3 + $0x10] sm:$0xff] %vm2168, %v2222
    %2234 = vst.msk [vmem:[#allocation3 + $0x28] sm:$0xff] %vm2168, %v2224
    %2235 = vst.msk [vmem:[#allocation3 + $0x40] sm:$0xff] %vm2168, %v2226
    %2236 = vst.msk [vmem:[#allocation3 + $0x58] sm:$0xff] %vm2168, %v2228
    %v2237 = vld [vmem:[#allocation2] sm:$0xff]
    %v2238 = vld [vmem:[#allocation2 + $0x18] sm:$0xff]
    %v2239 = vld [vmem:[#allocation2 + $0x30] sm:$0xff]
    %v2240 = vld [vmem:[#allocation2 + $0x48] sm:$0xff]
    %2245 = vrot.lane.b32.xlu0 %v2237, 64
    %v2246 = vpop.permute.xlu0 %2245
    %2247 = vrot.lane.b32.xlu0 %v2238, 64
    %v2248 = vpop.permute.xlu0 %2247
    %2249 = vrot.lane.b32.xlu0 %v2239, 64
    %v2250 = vpop.permute.xlu0 %2249
    %2251 = vrot.lane.b32.xlu0 %v2240, 64
    %v2252 = vpop.permute.xlu0 %2251
    %2257 = vst.msk [vmem:[#allocation3 + $0x60] sm:$0xff] %vm2143, %v2246
    %2258 = vst.msk [vmem:[#allocation3 + $0x78] sm:$0xff] %vm2143, %v2248
    %2259 = vst.msk [vmem:[#allocation3 + $0x90] sm:$0xff] %vm2143, %v2250
    %2260 = vst.msk [vmem:[#allocation3 + $0xa8] sm:$0xff] %vm2143, %v2252
    %v2261 = vld [vmem:[#allocation2 + $0x60] sm:$0xff]
    %v2262 = vld [vmem:[#allocation2 + $0x78] sm:$0xff]
    %v2263 = vld [vmem:[#allocation2 + $0x90] sm:$0xff]
    %v2264 = vld [vmem:[#allocation2 + $0xa8] sm:$0xff]
    %2265 = vst.msk [vmem:[#allocation3 + $0x60] sm:$0xff] %vm2168, %v2261
    %2266 = vst.msk [vmem:[#allocation3 + $0x78] sm:$0xff] %vm2168, %v2262
    %2267 = vst.msk [vmem:[#allocation3 + $0x90] sm:$0xff] %vm2168, %v2263
    %2268 = vst.msk [vmem:[#allocation3 + $0xa8] sm:$0xff] %vm2168, %v2264
    %v2269 = vld [vmem:[#allocation2 + $0xc0] sm:$0xff]
    %v2270 = vld [vmem:[#allocation2 + $0xd8] sm:$0xff]
    %v2271 = vld [vmem:[#allocation2 + $0xf0] sm:$0xff]
    %v2272 = vld [vmem:[#allocation2 + $0x108] sm:$0xff]
    %2277 = vrot.lane.b32.xlu0 %v2269, 64
    %v2278 = vpop.permute.xlu0 %2277
    %2279 = vrot.lane.b32.xlu0 %v2270, 64
    %v2280 = vpop.permute.xlu0 %2279
    %2281 = vrot.lane.b32.xlu0 %v2271, 64
    %v2282 = vpop.permute.xlu0 %2281
    %2283 = vrot.lane.b32.xlu0 %v2272, 64
    %v2284 = vpop.permute.xlu0 %2283
    %2289 = vst.msk [vmem:[#allocation3 + $0x68] sm:$0xff] %vm2143, %v2278
    %2290 = vst.msk [vmem:[#allocation3 + $0x80] sm:$0xff] %vm2143, %v2280
    %2291 = vst.msk [vmem:[#allocation3 + $0x98] sm:$0xff] %vm2143, %v2282
    %2292 = vst.msk [vmem:[#allocation3 + $0xb0] sm:$0xff] %vm2143, %v2284
    %v2293 = vld [vmem:[#allocation2 + $0x120] sm:$0xff]
    %v2294 = vld [vmem:[#allocation2 + $0x138] sm:$0xff]
    %v2295 = vld [vmem:[#allocation2 + $0x150] sm:$0xff]
    %v2296 = vld [vmem:[#allocation2 + $0x168] sm:$0xff]
    %2297 = vst.msk [vmem:[#allocation3 + $0x68] sm:$0xff] %vm2168, %v2293
    %2298 = vst.msk [vmem:[#allocation3 + $0x80] sm:$0xff] %vm2168, %v2294
    %2299 = vst.msk [vmem:[#allocation3 + $0x98] sm:$0xff] %vm2168, %v2295
    %2300 = vst.msk [vmem:[#allocation3 + $0xb0] sm:$0xff] %vm2168, %v2296
    %v2301 = vld [vmem:[#allocation2 + $0x180] sm:$0xff]
    %v2302 = vld [vmem:[#allocation2 + $0x198] sm:$0xff]
    %v2303 = vld [vmem:[#allocation2 + $0x1b0] sm:$0xff]
    %v2304 = vld [vmem:[#allocation2 + $0x1c8] sm:$0xff]
    %2309 = vrot.lane.b32.xlu0 %v2301, 64
    %v2310 = vpop.permute.xlu0 %2309
    %2311 = vrot.lane.b32.xlu0 %v2302, 64
    %v2312 = vpop.permute.xlu0 %2311
    %2313 = vrot.lane.b32.xlu0 %v2303, 64
    %v2314 = vpop.permute.xlu0 %2313
    %2315 = vrot.lane.b32.xlu0 %v2304, 64
    %v2316 = vpop.permute.xlu0 %2315
    %2321 = vst.msk [vmem:[#allocation3 + $0x70] sm:$0xff] %vm2143, %v2310
    %2322 = vst.msk [vmem:[#allocation3 + $0x88] sm:$0xff] %vm2143, %v2312
    %2323 = vst.msk [vmem:[#allocation3 + $0xa0] sm:$0xff] %vm2143, %v2314
    %2324 = vst.msk [vmem:[#allocation3 + $0xb8] sm:$0xff] %vm2143, %v2316
    %v2325 = vld [vmem:[#allocation2 + $0x1e0] sm:$0xff]
    %v2326 = vld [vmem:[#allocation2 + $0x1f8] sm:$0xff]
    %v2327 = vld [vmem:[#allocation2 + $0x210] sm:$0xff]
    %v2328 = vld [vmem:[#allocation2 + $0x228] sm:$0xff]
    %2329 = vst.msk [vmem:[#allocation3 + $0x70] sm:$0xff] %vm2168, %v2325
    %2330 = vst.msk [vmem:[#allocation3 + $0x88] sm:$0xff] %vm2168, %v2326
    %2331 = vst.msk [vmem:[#allocation3 + $0xa0] sm:$0xff] %vm2168, %v2327
    %2332 = vst.msk [vmem:[#allocation3 + $0xb8] sm:$0xff] %vm2168, %v2328
    %v2333 = vld [vmem:[#allocation2 + $0x8] sm:$0xff]
    %v2334 = vld [vmem:[#allocation2 + $0x20] sm:$0xff]
    %v2335 = vld [vmem:[#allocation2 + $0x38] sm:$0xff]
    %v2336 = vld [vmem:[#allocation2 + $0x50] sm:$0xff]
    %2337 = vst.msk [vmem:[#allocation3 + $0xc0] sm:$0xff] %vm2143, %v2333
    %2338 = vst.msk [vmem:[#allocation3 + $0xd8] sm:$0xff] %vm2143, %v2334
    %2339 = vst.msk [vmem:[#allocation3 + $0xf0] sm:$0xff] %vm2143, %v2335
    %2340 = vst.msk [vmem:[#allocation3 + $0x108] sm:$0xff] %vm2143, %v2336
    %v2341 = vld [vmem:[#allocation2 + $0x68] sm:$0xff]
    %v2342 = vld [vmem:[#allocation2 + $0x80] sm:$0xff]
    %v2343 = vld [vmem:[#allocation2 + $0x98] sm:$0xff]
    %v2344 = vld [vmem:[#allocation2 + $0xb0] sm:$0xff]
    %2349 = vrot.lane.b32.xlu0 %v2341, 64
    %v2350 = vpop.permute.xlu0 %2349
    %2351 = vrot.lane.b32.xlu0 %v2342, 64
    %v2352 = vpop.permute.xlu0 %2351
    %2353 = vrot.lane.b32.xlu0 %v2343, 64
    %v2354 = vpop.permute.xlu0 %2353
    %2355 = vrot.lane.b32.xlu0 %v2344, 64
    %v2356 = vpop.permute.xlu0 %2355
    %2361 = vst.msk [vmem:[#allocation3 + $0xc0] sm:$0xff] %vm2168, %v2350
    %2362 = vst.msk [vmem:[#allocation3 + $0xd8] sm:$0xff] %vm2168, %v2352
    %2363 = vst.msk [vmem:[#allocation3 + $0xf0] sm:$0xff] %vm2168, %v2354
    %2364 = vst.msk [vmem:[#allocation3 + $0x108] sm:$0xff] %vm2168, %v2356
    %v2365 = vld [vmem:[#allocation2 + $0xc8] sm:$0xff]
    %v2366 = vld [vmem:[#allocation2 + $0xe0] sm:$0xff]
    %v2367 = vld [vmem:[#allocation2 + $0xf8] sm:$0xff]
    %v2368 = vld [vmem:[#allocation2 + $0x110] sm:$0xff]
    %2369 = vst.msk [vmem:[#allocation3 + $0xc8] sm:$0xff] %vm2143, %v2365
    %2370 = vst.msk [vmem:[#allocation3 + $0xe0] sm:$0xff] %vm2143, %v2366
    %2371 = vst.msk [vmem:[#allocation3 + $0xf8] sm:$0xff] %vm2143, %v2367
    %2372 = vst.msk [vmem:[#allocation3 + $0x110] sm:$0xff] %vm2143, %v2368
    %v2373 = vld [vmem:[#allocation2 + $0x128] sm:$0xff]
    %v2374 = vld [vmem:[#allocation2 + $0x140] sm:$0xff]
    %v2375 = vld [vmem:[#allocation2 + $0x158] sm:$0xff]
    %v2376 = vld [vmem:[#allocation2 + $0x170] sm:$0xff]
    %2381 = vrot.lane.b32.xlu0 %v2373, 64
    %v2382 = vpop.permute.xlu0 %2381
    %2383 = vrot.lane.b32.xlu0 %v2374, 64
    %v2384 = vpop.permute.xlu0 %2383
    %2385 = vrot.lane.b32.xlu0 %v2375, 64
    %v2386 = vpop.permute.xlu0 %2385
    %2387 = vrot.lane.b32.xlu0 %v2376, 64
    %v2388 = vpop.permute.xlu0 %2387
    %2393 = vst.msk [vmem:[#allocation3 + $0xc8] sm:$0xff] %vm2168, %v2382
    %2394 = vst.msk [vmem:[#allocation3 + $0xe0] sm:$0xff] %vm2168, %v2384
    %2395 = vst.msk [vmem:[#allocation3 + $0xf8] sm:$0xff] %vm2168, %v2386
    %2396 = vst.msk [vmem:[#allocation3 + $0x110] sm:$0xff] %vm2168, %v2388
    %v2397 = vld [vmem:[#allocation2 + $0x188] sm:$0xff]
    %v2398 = vld [vmem:[#allocation2 + $0x1a0] sm:$0xff]
    %v2399 = vld [vmem:[#allocation2 + $0x1b8] sm:$0xff]
    %v2400 = vld [vmem:[#allocation2 + $0x1d0] sm:$0xff]
    %2401 = vst.msk [vmem:[#allocation3 + $0xd0] sm:$0xff] %vm2143, %v2397
    %2402 = vst.msk [vmem:[#allocation3 + $0xe8] sm:$0xff] %vm2143, %v2398
    %2403 = vst.msk [vmem:[#allocation3 + $0x100] sm:$0xff] %vm2143, %v2399
    %2404 = vst.msk [vmem:[#allocation3 + $0x118] sm:$0xff] %vm2143, %v2400
    %v2405 = vld [vmem:[#allocation2 + $0x1e8] sm:$0xff]
    %v2406 = vld [vmem:[#allocation2 + $0x200] sm:$0xff]
    %v2407 = vld [vmem:[#allocation2 + $0x218] sm:$0xff]
    %v2408 = vld [vmem:[#allocation2 + $0x230] sm:$0xff]
    %2413 = vrot.lane.b32.xlu0 %v2405, 64
    %v2414 = vpop.permute.xlu0 %2413
    %2415 = vrot.lane.b32.xlu0 %v2406, 64
    %v2416 = vpop.permute.xlu0 %2415
    %2417 = vrot.lane.b32.xlu0 %v2407, 64
    %v2418 = vpop.permute.xlu0 %2417
    %2419 = vrot.lane.b32.xlu0 %v2408, 64
    %v2420 = vpop.permute.xlu0 %2419
    %2425 = vst.msk [vmem:[#allocation3 + $0xd0] sm:$0xff] %vm2168, %v2414
    %2426 = vst.msk [vmem:[#allocation3 + $0xe8] sm:$0xff] %vm2168, %v2416
    %2427 = vst.msk [vmem:[#allocation3 + $0x100] sm:$0xff] %vm2168, %v2418
    %2428 = vst.msk [vmem:[#allocation3 + $0x118] sm:$0xff] %vm2168, %v2420
    %v2429 = vld [vmem:[#allocation2 + $0x8] sm:$0xff]
    %v2430 = vld [vmem:[#allocation2 + $0x20] sm:$0xff]
    %v2431 = vld [vmem:[#allocation2 + $0x38] sm:$0xff]
    %v2432 = vld [vmem:[#allocation2 + $0x50] sm:$0xff]
    %2437 = vrot.lane.b32.xlu0 %v2429, 64
    %v2438 = vpop.permute.xlu0 %2437
    %2439 = vrot.lane.b32.xlu0 %v2430, 64
    %v2440 = vpop.permute.xlu0 %2439
    %2441 = vrot.lane.b32.xlu0 %v2431, 64
    %v2442 = vpop.permute.xlu0 %2441
    %2443 = vrot.lane.b32.xlu0 %v2432, 64
    %v2444 = vpop.permute.xlu0 %2443
    %2449 = vst.msk [vmem:[#allocation3 + $0x120] sm:$0xff] %vm2143, %v2438
    %2450 = vst.msk [vmem:[#allocation3 + $0x138] sm:$0xff] %vm2143, %v2440
    %2451 = vst.msk [vmem:[#allocation3 + $0x150] sm:$0xff] %vm2143, %v2442
    %2452 = vst.msk [vmem:[#allocation3 + $0x168] sm:$0xff] %vm2143, %v2444
    %v2453 = vld [vmem:[#allocation2 + $0x68] sm:$0xff]
    %v2454 = vld [vmem:[#allocation2 + $0x80] sm:$0xff]
    %v2455 = vld [vmem:[#allocation2 + $0x98] sm:$0xff]
    %v2456 = vld [vmem:[#allocation2 + $0xb0] sm:$0xff]
    %2457 = vst.msk [vmem:[#allocation3 + $0x120] sm:$0xff] %vm2168, %v2453
    %2458 = vst.msk [vmem:[#allocation3 + $0x138] sm:$0xff] %vm2168, %v2454
    %2459 = vst.msk [vmem:[#allocation3 + $0x150] sm:$0xff] %vm2168, %v2455
    %2460 = vst.msk [vmem:[#allocation3 + $0x168] sm:$0xff] %vm2168, %v2456
    %v2461 = vld [vmem:[#allocation2 + $0xc8] sm:$0xff]
    %v2462 = vld [vmem:[#allocation2 + $0xe0] sm:$0xff]
    %v2463 = vld [vmem:[#allocation2 + $0xf8] sm:$0xff]
    %v2464 = vld [vmem:[#allocation2 + $0x110] sm:$0xff]
    %2469 = vrot.lane.b32.xlu0 %v2461, 64
    %v2470 = vpop.permute.xlu0 %2469
    %2471 = vrot.lane.b32.xlu0 %v2462, 64
    %v2472 = vpop.permute.xlu0 %2471
    %2473 = vrot.lane.b32.xlu0 %v2463, 64
    %v2474 = vpop.permute.xlu0 %2473
    %2475 = vrot.lane.b32.xlu0 %v2464, 64
    %v2476 = vpop.permute.xlu0 %2475
    %2481 = vst.msk [vmem:[#allocation3 + $0x128] sm:$0xff] %vm2143, %v2470
    %2482 = vst.msk [vmem:[#allocation3 + $0x140] sm:$0xff] %vm2143, %v2472
    %2483 = vst.msk [vmem:[#allocation3 + $0x158] sm:$0xff] %vm2143, %v2474
    %2484 = vst.msk [vmem:[#allocation3 + $0x170] sm:$0xff] %vm2143, %v2476
    %v2485 = vld [vmem:[#allocation2 + $0x128] sm:$0xff]
    %v2486 = vld [vmem:[#allocation2 + $0x140] sm:$0xff]
    %v2487 = vld [vmem:[#allocation2 + $0x158] sm:$0xff]
    %v2488 = vld [vmem:[#allocation2 + $0x170] sm:$0xff]
    %2489 = vst.msk [vmem:[#allocation3 + $0x128] sm:$0xff] %vm2168, %v2485
    %2490 = vst.msk [vmem:[#allocation3 + $0x140] sm:$0xff] %vm2168, %v2486
    %2491 = vst.msk [vmem:[#allocation3 + $0x158] sm:$0xff] %vm2168, %v2487
    %2492 = vst.msk [vmem:[#allocation3 + $0x170] sm:$0xff] %vm2168, %v2488
    %v2493 = vld [vmem:[#allocation2 + $0x188] sm:$0xff]
    %v2494 = vld [vmem:[#allocation2 + $0x1a0] sm:$0xff]
    %v2495 = vld [vmem:[#allocation2 + $0x1b8] sm:$0xff]
    %v2496 = vld [vmem:[#allocation2 + $0x1d0] sm:$0xff]
    %2501 = vrot.lane.b32.xlu0 %v2493, 64
    %v2502 = vpop.permute.xlu0 %2501
    %2503 = vrot.lane.b32.xlu0 %v2494, 64
    %v2504 = vpop.permute.xlu0 %2503
    %2505 = vrot.lane.b32.xlu0 %v2495, 64
    %v2506 = vpop.permute.xlu0 %2505
    %2507 = vrot.lane.b32.xlu0 %v2496, 64
    %v2508 = vpop.permute.xlu0 %2507
    %2513 = vst.msk [vmem:[#allocation3 + $0x130] sm:$0xff] %vm2143, %v2502
    %2514 = vst.msk [vmem:[#allocation3 + $0x148] sm:$0xff] %vm2143, %v2504
    %2515 = vst.msk [vmem:[#allocation3 + $0x160] sm:$0xff] %vm2143, %v2506
    %2516 = vst.msk [vmem:[#allocation3 + $0x178] sm:$0xff] %vm2143, %v2508
    %v2517 = vld [vmem:[#allocation2 + $0x1e8] sm:$0xff]
    %v2518 = vld [vmem:[#allocation2 + $0x200] sm:$0xff]
    %v2519 = vld [vmem:[#allocation2 + $0x218] sm:$0xff]
    %v2520 = vld [vmem:[#allocation2 + $0x230] sm:$0xff]
    %2521 = vst.msk [vmem:[#allocation3 + $0x130] sm:$0xff] %vm2168, %v2517
    %2522 = vst.msk [vmem:[#allocation3 + $0x148] sm:$0xff] %vm2168, %v2518
    %2523 = vst.msk [vmem:[#allocation3 + $0x160] sm:$0xff] %vm2168, %v2519
    %2524 = vst.msk [vmem:[#allocation3 + $0x178] sm:$0xff] %vm2168, %v2520
    %v2525 = vld [vmem:[#allocation2 + $0x10] sm:$0xff]
    %v2526 = vld [vmem:[#allocation2 + $0x28] sm:$0xff]
    %v2527 = vld [vmem:[#allocation2 + $0x40] sm:$0xff]
    %v2528 = vld [vmem:[#allocation2 + $0x58] sm:$0xff]
    %2529 = vst.msk [vmem:[#allocation3 + $0x180] sm:$0xff] %vm2143, %v2525
    %2530 = vst.msk [vmem:[#allocation3 + $0x198] sm:$0xff] %vm2143, %v2526
    %2531 = vst.msk [vmem:[#allocation3 + $0x1b0] sm:$0xff] %vm2143, %v2527
    %2532 = vst.msk [vmem:[#allocation3 + $0x1c8] sm:$0xff] %vm2143, %v2528
    %v2533 = vld [vmem:[#allocation2 + $0x70] sm:$0xff]
    %v2534 = vld [vmem:[#allocation2 + $0x88] sm:$0xff]
    %v2535 = vld [vmem:[#allocation2 + $0xa0] sm:$0xff]
    %v2536 = vld [vmem:[#allocation2 + $0xb8] sm:$0xff]
    %2541 = vrot.lane.b32.xlu0 %v2533, 64
    %v2542 = vpop.permute.xlu0 %2541
    %2543 = vrot.lane.b32.xlu0 %v2534, 64
    %v2544 = vpop.permute.xlu0 %2543
    %2545 = vrot.lane.b32.xlu0 %v2535, 64
    %v2546 = vpop.permute.xlu0 %2545
    %2547 = vrot.lane.b32.xlu0 %v2536, 64
    %v2548 = vpop.permute.xlu0 %2547
    %2553 = vst.msk [vmem:[#allocation3 + $0x180] sm:$0xff] %vm2168, %v2542
    %2554 = vst.msk [vmem:[#allocation3 + $0x198] sm:$0xff] %vm2168, %v2544
    %2555 = vst.msk [vmem:[#allocation3 + $0x1b0] sm:$0xff] %vm2168, %v2546
    %2556 = vst.msk [vmem:[#allocation3 + $0x1c8] sm:$0xff] %vm2168, %v2548
    %v2557 = vld [vmem:[#allocation2 + $0xd0] sm:$0xff]
    %v2558 = vld [vmem:[#allocation2 + $0xe8] sm:$0xff]
    %v2559 = vld [vmem:[#allocation2 + $0x100] sm:$0xff]
    %v2560 = vld [vmem:[#allocation2 + $0x118] sm:$0xff]
    %2561 = vst.msk [vmem:[#allocation3 + $0x188] sm:$0xff] %vm2143, %v2557
    %2562 = vst.msk [vmem:[#allocation3 + $0x1a0] sm:$0xff] %vm2143, %v2558
    %2563 = vst.msk [vmem:[#allocation3 + $0x1b8] sm:$0xff] %vm2143, %v2559
    %2564 = vst.msk [vmem:[#allocation3 + $0x1d0] sm:$0xff] %vm2143, %v2560
    %v2565 = vld [vmem:[#allocation2 + $0x130] sm:$0xff]
    %v2566 = vld [vmem:[#allocation2 + $0x148] sm:$0xff]
    %v2567 = vld [vmem:[#allocation2 + $0x160] sm:$0xff]
    %v2568 = vld [vmem:[#allocation2 + $0x178] sm:$0xff]
    %2573 = vrot.lane.b32.xlu0 %v2565, 64
    %v2574 = vpop.permute.xlu0 %2573
    %2575 = vrot.lane.b32.xlu0 %v2566, 64
    %v2576 = vpop.permute.xlu0 %2575
    %2577 = vrot.lane.b32.xlu0 %v2567, 64
    %v2578 = vpop.permute.xlu0 %2577
    %2579 = vrot.lane.b32.xlu0 %v2568, 64
    %v2580 = vpop.permute.xlu0 %2579
    %2585 = vst.msk [vmem:[#allocation3 + $0x188] sm:$0xff] %vm2168, %v2574
    %2586 = vst.msk [vmem:[#allocation3 + $0x1a0] sm:$0xff] %vm2168, %v2576
    %2587 = vst.msk [vmem:[#allocation3 + $0x1b8] sm:$0xff] %vm2168, %v2578
    %2588 = vst.msk [vmem:[#allocation3 + $0x1d0] sm:$0xff] %vm2168, %v2580
    %v2589 = vld [vmem:[#allocation2 + $0x190] sm:$0xff]
    %v2590 = vld [vmem:[#allocation2 + $0x1a8] sm:$0xff]
    %v2591 = vld [vmem:[#allocation2 + $0x1c0] sm:$0xff]
    %v2592 = vld [vmem:[#allocation2 + $0x1d8] sm:$0xff]
    %2593 = vst.msk [vmem:[#allocation3 + $0x190] sm:$0xff] %vm2143, %v2589
    %2594 = vst.msk [vmem:[#allocation3 + $0x1a8] sm:$0xff] %vm2143, %v2590
    %2595 = vst.msk [vmem:[#allocation3 + $0x1c0] sm:$0xff] %vm2143, %v2591
    %2596 = vst.msk [vmem:[#allocation3 + $0x1d8] sm:$0xff] %vm2143, %v2592
    %v2597 = vld [vmem:[#allocation2 + $0x1f0] sm:$0xff]
    %v2598 = vld [vmem:[#allocation2 + $0x208] sm:$0xff]
    %v2599 = vld [vmem:[#allocation2 + $0x220] sm:$0xff]
    %v2600 = vld [vmem:[#allocation2 + $0x238] sm:$0xff]
    %2605 = vrot.lane.b32.xlu0 %v2597, 64
    %v2606 = vpop.permute.xlu0 %2605
    %2607 = vrot.lane.b32.xlu0 %v2598, 64
    %v2608 = vpop.permute.xlu0 %2607
    %2609 = vrot.lane.b32.xlu0 %v2599, 64
    %v2610 = vpop.permute.xlu0 %2609
    %2611 = vrot.lane.b32.xlu0 %v2600, 64
    %v2612 = vpop.permute.xlu0 %2611
    %2617 = vst.msk [vmem:[#allocation3 + $0x190] sm:$0xff] %vm2168, %v2606
    %2618 = vst.msk [vmem:[#allocation3 + $0x1a8] sm:$0xff] %vm2168, %v2608
    %2619 = vst.msk [vmem:[#allocation3 + $0x1c0] sm:$0xff] %vm2168, %v2610
    %2620 = vst.msk [vmem:[#allocation3 + $0x1d8] sm:$0xff] %vm2168, %v2612
    %v2621 = vld [vmem:[#allocation2 + $0x10] sm:$0xff]
    %v2622 = vld [vmem:[#allocation2 + $0x28] sm:$0xff]
    %v2623 = vld [vmem:[#allocation2 + $0x40] sm:$0xff]
    %v2624 = vld [vmem:[#allocation2 + $0x58] sm:$0xff]
    %2629 = vrot.lane.b32.xlu0 %v2621, 64
    %v2630 = vpop.permute.xlu0 %2629
    %2631 = vrot.lane.b32.xlu0 %v2622, 64
    %v2632 = vpop.permute.xlu0 %2631
    %2633 = vrot.lane.b32.xlu0 %v2623, 64
    %v2634 = vpop.permute.xlu0 %2633
    %2635 = vrot.lane.b32.xlu0 %v2624, 64
    %v2636 = vpop.permute.xlu0 %2635
    %2641 = vst.msk [vmem:[#allocation3 + $0x1e0] sm:$0xff] %vm2143, %v2630
    %2642 = vst.msk [vmem:[#allocation3 + $0x1f8] sm:$0xff] %vm2143, %v2632
    %2643 = vst.msk [vmem:[#allocation3 + $0x210] sm:$0xff] %vm2143, %v2634
    %2644 = vst.msk [vmem:[#allocation3 + $0x228] sm:$0xff] %vm2143, %v2636
    %v2645 = vld [vmem:[#allocation2 + $0x70] sm:$0xff]
    %v2646 = vld [vmem:[#allocation2 + $0x88] sm:$0xff]
    %v2647 = vld [vmem:[#allocation2 + $0xa0] sm:$0xff]
    %v2648 = vld [vmem:[#allocation2 + $0xb8] sm:$0xff]
    %2649 = vst.msk [vmem:[#allocation3 + $0x1e0] sm:$0xff] %vm2168, %v2645
    %2650 = vst.msk [vmem:[#allocation3 + $0x1f8] sm:$0xff] %vm2168, %v2646
    %2651 = vst.msk [vmem:[#allocation3 + $0x210] sm:$0xff] %vm2168, %v2647
    %2652 = vst.msk [vmem:[#allocation3 + $0x228] sm:$0xff] %vm2168, %v2648
    %v2653 = vld [vmem:[#allocation2 + $0xd0] sm:$0xff]
    %v2654 = vld [vmem:[#allocation2 + $0xe8] sm:$0xff]
    %v2655 = vld [vmem:[#allocation2 + $0x100] sm:$0xff]
    %v2656 = vld [vmem:[#allocation2 + $0x118] sm:$0xff]
    %2661 = vrot.lane.b32.xlu0 %v2653, 64
    %v2662 = vpop.permute.xlu0 %2661
    %2663 = vrot.lane.b32.xlu0 %v2654, 64
    %v2664 = vpop.permute.xlu0 %2663
    %2665 = vrot.lane.b32.xlu0 %v2655, 64
    %v2666 = vpop.permute.xlu0 %2665
    %2667 = vrot.lane.b32.xlu0 %v2656, 64
    %v2668 = vpop.permute.xlu0 %2667
    %2673 = vst.msk [vmem:[#allocation3 + $0x1e8] sm:$0xff] %vm2143, %v2662
    %2674 = vst.msk [vmem:[#allocation3 + $0x200] sm:$0xff] %vm2143, %v2664
    %2675 = vst.msk [vmem:[#allocation3 + $0x218] sm:$0xff] %vm2143, %v2666
    %2676 = vst.msk [vmem:[#allocation3 + $0x230] sm:$0xff] %vm2143, %v2668
    %v2677 = vld [vmem:[#allocation2 + $0x130] sm:$0xff]
    %v2678 = vld [vmem:[#allocation2 + $0x148] sm:$0xff]
    %v2679 = vld [vmem:[#allocation2 + $0x160] sm:$0xff]
    %v2680 = vld [vmem:[#allocation2 + $0x178] sm:$0xff]
    %2681 = vst.msk [vmem:[#allocation3 + $0x1e8] sm:$0xff] %vm2168, %v2677
    %2682 = vst.msk [vmem:[#allocation3 + $0x200] sm:$0xff] %vm2168, %v2678
    %2683 = vst.msk [vmem:[#allocation3 + $0x218] sm:$0xff] %vm2168, %v2679
    %2684 = vst.msk [vmem:[#allocation3 + $0x230] sm:$0xff] %vm2168, %v2680
    %v2685 = vld [vmem:[#allocation2 + $0x190] sm:$0xff]
    %v2686 = vld [vmem:[#allocation2 + $0x1a8] sm:$0xff]
    %v2687 = vld [vmem:[#allocation2 + $0x1c0] sm:$0xff]
    %v2688 = vld [vmem:[#allocation2 + $0x1d8] sm:$0xff]
    %2693 = vrot.lane.b32.xlu0 %v2685, 64
    %v2694 = vpop.permute.xlu0 %2693
    %2695 = vrot.lane.b32.xlu0 %v2686, 64
    %v2696 = vpop.permute.xlu0 %2695
    %2697 = vrot.lane.b32.xlu0 %v2687, 64
    %v2698 = vpop.permute.xlu0 %2697
    %2699 = vrot.lane.b32.xlu0 %v2688, 64
    %v2700 = vpop.permute.xlu0 %2699
    %2705 = vst.msk [vmem:[#allocation3 + $0x1f0] sm:$0xff] %vm2143, %v2694
    %2706 = vst.msk [vmem:[#allocation3 + $0x208] sm:$0xff] %vm2143, %v2696
    %2707 = vst.msk [vmem:[#allocation3 + $0x220] sm:$0xff] %vm2143, %v2698
    %2708 = vst.msk [vmem:[#allocation3 + $0x238] sm:$0xff] %vm2143, %v2700
    %v2709 = vld [vmem:[#allocation2 + $0x1f0] sm:$0xff]
    %v2710 = vld [vmem:[#allocation2 + $0x208] sm:$0xff]
    %v2711 = vld [vmem:[#allocation2 + $0x220] sm:$0xff]
    %v2712 = vld [vmem:[#allocation2 + $0x238] sm:$0xff]
    %2713 = vst.msk [vmem:[#allocation3 + $0x1f0] sm:$0xff] %vm2168, %v2709
    %2714 = vst.msk [vmem:[#allocation3 + $0x208] sm:$0xff] %vm2168, %v2710
    %2715 = vst.msk [vmem:[#allocation3 + $0x220] sm:$0xff] %vm2168, %v2711
    %2716 = vst.msk [vmem:[#allocation3 + $0x238] sm:$0xff] %vm2168, %v2712
    %v2717 = vld [vmem:[#allocation3] sm:$0xff]
    %v2718 = vld [vmem:[#allocation3 + $0x8] sm:$0xff]
    %v2719 = vld [vmem:[#allocation3 + $0x10] sm:$0xff]
    %v2720 = vld [vmem:[#allocation3 + $0x18] sm:$0xff]
    %v2721 = vld [vmem:[#allocation3 + $0x20] sm:$0xff]
    %v2722 = vld [vmem:[#allocation3 + $0x28] sm:$0xff]
    %v2723 = vld [vmem:[#allocation3 + $0x30] sm:$0xff]
    %v2724 = vld [vmem:[#allocation3 + $0x38] sm:$0xff]
    %v2725 = vld [vmem:[#allocation3 + $0x40] sm:$0xff]
    %v2726 = vld [vmem:[#allocation3 + $0x48] sm:$0xff]
    %v2727 = vld [vmem:[#allocation3 + $0x50] sm:$0xff]
    %v2728 = vld [vmem:[#allocation3 + $0x58] sm:$0xff]
    %v2729 = vld [vmem:[#allocation3 + $0x60] sm:$0xff]
    %v2730 = vld [vmem:[#allocation3 + $0x68] sm:$0xff]
    %v2731 = vld [vmem:[#allocation3 + $0x70] sm:$0xff]
    %v2732 = vld [vmem:[#allocation3 + $0x78] sm:$0xff]
    %v2733 = vld [vmem:[#allocation3 + $0x80] sm:$0xff]
    %v2734 = vld [vmem:[#allocation3 + $0x88] sm:$0xff]
    %v2735 = vld [vmem:[#allocation3 + $0x90] sm:$0xff]
    %v2736 = vld [vmem:[#allocation3 + $0x98] sm:$0xff]
    %v2737 = vld [vmem:[#allocation3 + $0xa0] sm:$0xff]
    %v2738 = vld [vmem:[#allocation3 + $0xa8] sm:$0xff]
    %v2739 = vld [vmem:[#allocation3 + $0xb0] sm:$0xff]
    %v2740 = vld [vmem:[#allocation3 + $0xb8] sm:$0xff]
    %v2741 = vld [vmem:[#allocation3 + $0xc0] sm:$0xff]
    %v2742 = vld [vmem:[#allocation3 + $0xc8] sm:$0xff]
    %v2743 = vld [vmem:[#allocation3 + $0xd0] sm:$0xff]
    %v2744 = vld [vmem:[#allocation3 + $0xd8] sm:$0xff]
    %v2745 = vld [vmem:[#allocation3 + $0xe0] sm:$0xff]
    %v2746 = vld [vmem:[#allocation3 + $0xe8] sm:$0xff]
    %v2747 = vld [vmem:[#allocation3 + $0xf0] sm:$0xff]
    %v2748 = vld [vmem:[#allocation3 + $0xf8] sm:$0xff]
    %v2749 = vld [vmem:[#allocation3 + $0x100] sm:$0xff]
    %v2750 = vld [vmem:[#allocation3 + $0x108] sm:$0xff]
    %v2751 = vld [vmem:[#allocation3 + $0x110] sm:$0xff]
    %v2752 = vld [vmem:[#allocation3 + $0x118] sm:$0xff]
    %v2753 = vld [vmem:[#allocation3 + $0x120] sm:$0xff]
    %v2754 = vld [vmem:[#allocation3 + $0x128] sm:$0xff]
    %v2755 = vld [vmem:[#allocation3 + $0x130] sm:$0xff]
    %v2756 = vld [vmem:[#allocation3 + $0x138] sm:$0xff]
    %v2757 = vld [vmem:[#allocation3 + $0x140] sm:$0xff]
    %v2758 = vld [vmem:[#allocation3 + $0x148] sm:$0xff]
    %v2759 = vld [vmem:[#allocation3 + $0x150] sm:$0xff]
    %v2760 = vld [vmem:[#allocation3 + $0x158] sm:$0xff]
    %v2761 = vld [vmem:[#allocation3 + $0x160] sm:$0xff]
    %v2762 = vld [vmem:[#allocation3 + $0x168] sm:$0xff]
    %v2763 = vld [vmem:[#allocation3 + $0x170] sm:$0xff]
    %v2764 = vld [vmem:[#allocation3 + $0x178] sm:$0xff]
    %v2765 = vld [vmem:[#allocation3 + $0x180] sm:$0xff]
    %v2766 = vld [vmem:[#allocation3 + $0x188] sm:$0xff]
    %v2767 = vld [vmem:[#allocation3 + $0x190] sm:$0xff]
    %v2768 = vld [vmem:[#allocation3 + $0x198] sm:$0xff]
    %v2769 = vld [vmem:[#allocation3 + $0x1a0] sm:$0xff]
    %v2770 = vld [vmem:[#allocation3 + $0x1a8] sm:$0xff]
    %v2771 = vld [vmem:[#allocation3 + $0x1b0] sm:$0xff]
    %v2772 = vld [vmem:[#allocation3 + $0x1b8] sm:$0xff]
    %v2773 = vld [vmem:[#allocation3 + $0x1c0] sm:$0xff]
    %v2774 = vld [vmem:[#allocation3 + $0x1c8] sm:$0xff]
    %v2775 = vld [vmem:[#allocation3 + $0x1d0] sm:$0xff]
    %v2776 = vld [vmem:[#allocation3 + $0x1d8] sm:$0xff]
    %v2777 = vld [vmem:[#allocation3 + $0x1e0] sm:$0xff]
    %v2778 = vld [vmem:[#allocation3 + $0x1e8] sm:$0xff]
    %v2779 = vld [vmem:[#allocation3 + $0x1f0] sm:$0xff]
    %v2780 = vld [vmem:[#allocation3 + $0x1f8] sm:$0xff]
    %v2781 = vld [vmem:[#allocation3 + $0x200] sm:$0xff]
    %v2782 = vld [vmem:[#allocation3 + $0x208] sm:$0xff]
    %v2783 = vld [vmem:[#allocation3 + $0x210] sm:$0xff]
    %v2784 = vld [vmem:[#allocation3 + $0x218] sm:$0xff]
    %v2785 = vld [vmem:[#allocation3 + $0x220] sm:$0xff]
    %v2786 = vld [vmem:[#allocation3 + $0x228] sm:$0xff]
    %v2787 = vld [vmem:[#allocation3 + $0x230] sm:$0xff]
    %v2788 = vld [vmem:[#allocation3 + $0x238] sm:$0xff]
    %v2789 = vld [vmem:[%s3] sm:$0xff]
    %v2790 = vld [vmem:[%s3 + $0x8] sm:$0xf]
    %v2791 = vld [vmem:[%s3 + $0xc] sm:$0xff]
    %v2792 = vld [vmem:[%s3 + $0x14] sm:$0xf]
    %v2793 = vld [vmem:[%s3 + $0x18] sm:$0xff]
    %v2794 = vld [vmem:[%s3 + $0x20] sm:$0xf]
    %v2795 = vld [vmem:[%s3 + $0x24] sm:$0xff]
    %v2796 = vld [vmem:[%s3 + $0x2c] sm:$0xf]
    %v2797 = vld [vmem:[%s3 + $0x30] sm:$0xff]
    %v2798 = vld [vmem:[%s3 + $0x38] sm:$0xf]
    %v2799 = vld [vmem:[%s3 + $0x3c] sm:$0xff]
    %v2800 = vld [vmem:[%s3 + $0x44] sm:$0xf]
    %v2801 = vld [vmem:[%s3 + $0x48] sm:$0xff]
    %v2802 = vld [vmem:[%s3 + $0x50] sm:$0xf]
    %v2803 = vld [vmem:[%s3 + $0x54] sm:$0xff]
    %v2804 = vld [vmem:[%s3 + $0x5c] sm:$0xf]
    %v2805 = vld [vmem:[%s3 + $0x60] sm:$0xff]
    %v2806 = vld [vmem:[%s3 + $0x68] sm:$0xf]
    %v2807 = vld [vmem:[%s3 + $0x6c] sm:$0xff]
    %v2808 = vld [vmem:[%s3 + $0x74] sm:$0xf]
    %v2809 = vld [vmem:[%s3 + $0x78] sm:$0xff]
    %v2810 = vld [vmem:[%s3 + $0x80] sm:$0xf]
    %v2811 = vld [vmem:[%s3 + $0x84] sm:$0xff]
    %v2812 = vld [vmem:[%s3 + $0x8c] sm:$0xf]
    %v2813 = vld [vmem:[%s3 + $0x90] sm:$0xff]
    %v2814 = vld [vmem:[%s3 + $0x98] sm:$0xf]
    %v2815 = vld [vmem:[%s3 + $0x9c] sm:$0xff]
    %v2816 = vld [vmem:[%s3 + $0xa4] sm:$0xf]
    %v2817 = vld [vmem:[%s3 + $0xa8] sm:$0xff]
    %v2818 = vld [vmem:[%s3 + $0xb0] sm:$0xf]
    %v2819 = vld [vmem:[%s3 + $0xb4] sm:$0xff]
    %v2820 = vld [vmem:[%s3 + $0xbc] sm:$0xf]
    %v2821 = vld [vmem:[%s3 + $0xc0] sm:$0xff]
    %v2822 = vld [vmem:[%s3 + $0xc8] sm:$0xf]
    %v2823 = vld [vmem:[%s3 + $0xcc] sm:$0xff]
    %v2824 = vld [vmem:[%s3 + $0xd4] sm:$0xf]
    %v2825 = vld [vmem:[%s3 + $0xd8] sm:$0xff]
    %v2826 = vld [vmem:[%s3 + $0xe0] sm:$0xf]
    %v2827 = vld [vmem:[%s3 + $0xe4] sm:$0xff]
    %v2828 = vld [vmem:[%s3 + $0xec] sm:$0xf]
    %v2829 = vld [vmem:[%s3 + $0xf0] sm:$0xff]
    %v2830 = vld [vmem:[%s3 + $0xf8] sm:$0xf]
    %v2831 = vld [vmem:[%s3 + $0xfc] sm:$0xff]
    %v2832 = vld [vmem:[%s3 + $0x104] sm:$0xf]
    %v2833 = vld [vmem:[%s3 + $0x108] sm:$0xff]
    %v2834 = vld [vmem:[%s3 + $0x110] sm:$0xf]
    %v2835 = vld [vmem:[%s3 + $0x114] sm:$0xff]
    %v2836 = vld [vmem:[%s3 + $0x11c] sm:$0xf]
    %v2837 = vld [vmem:[%s3 + $0x120] sm:$0xff]
    %v2838 = vld [vmem:[%s3 + $0x128] sm:$0xf]
    %v2839 = vld [vmem:[%s3 + $0x12c] sm:$0xff]
    %v2840 = vld [vmem:[%s3 + $0x134] sm:$0xf]
    %v2841 = vld [vmem:[%s3 + $0x138] sm:$0xff]
    %v2842 = vld [vmem:[%s3 + $0x140] sm:$0xf]
    %v2843 = vld [vmem:[%s3 + $0x144] sm:$0xff]
    %v2844 = vld [vmem:[%s3 + $0x14c] sm:$0xf]
    %v2845 = vld [vmem:[%s3 + $0x150] sm:$0xff]
    %v2846 = vld [vmem:[%s3 + $0x158] sm:$0xf]
    %v2847 = vld [vmem:[%s3 + $0x15c] sm:$0xff]
    %v2848 = vld [vmem:[%s3 + $0x164] sm:$0xf]
    %v2849 = vld [vmem:[%s3 + $0x168] sm:$0xff]
    %v2850 = vld [vmem:[%s3 + $0x170] sm:$0xf]
    %v2851 = vld [vmem:[%s3 + $0x174] sm:$0xff]
    %v2852 = vld [vmem:[%s3 + $0x17c] sm:$0xf]
    %v2853 = vld [vmem:[%s3 + $0x180] sm:$0xff]
    %v2854 = vld [vmem:[%s3 + $0x188] sm:$0xf]
    %v2855 = vld [vmem:[%s3 + $0x18c] sm:$0xff]
    %v2856 = vld [vmem:[%s3 + $0x194] sm:$0xf]
    %v2857 = vld [vmem:[%s3 + $0x198] sm:$0xff]
    %v2858 = vld [vmem:[%s3 + $0x1a0] sm:$0xf]
    %v2859 = vld [vmem:[%s3 + $0x1a4] sm:$0xff]
    %v2860 = vld [vmem:[%s3 + $0x1ac] sm:$0xf]
    %v2861 = vld [vmem:[%s3 + $0x1b0] sm:$0xff]
    %v2862 = vld [vmem:[%s3 + $0x1b8] sm:$0xf]
    %v2863 = vld [vmem:[%s3 + $0x1bc] sm:$0xff]
    %v2864 = vld [vmem:[%s3 + $0x1c4] sm:$0xf]
    %v2865 = vld [vmem:[%s3 + $0x1c8] sm:$0xff]
    %v2866 = vld [vmem:[%s3 + $0x1d0] sm:$0xf]
    %v2867 = vld [vmem:[%s3 + $0x1d4] sm:$0xff]
    %v2868 = vld [vmem:[%s3 + $0x1dc] sm:$0xf]
    %v2869 = vld [vmem:[%s3 + $0x1e0] sm:$0xff]
    %v2870 = vld [vmem:[%s3 + $0x1e8] sm:$0xf]
    %v2871 = vld [vmem:[%s3 + $0x1ec] sm:$0xff]
    %v2872 = vld [vmem:[%s3 + $0x1f4] sm:$0xf]
    %v2873 = vld [vmem:[%s3 + $0x1f8] sm:$0xff]
    %v2874 = vld [vmem:[%s3 + $0x200] sm:$0xf]
    %v2875 = vld [vmem:[%s3 + $0x204] sm:$0xff]
    %v2876 = vld [vmem:[%s3 + $0x20c] sm:$0xf]
    %v2877 = vld [vmem:[%s3 + $0x210] sm:$0xff]
    %v2878 = vld [vmem:[%s3 + $0x218] sm:$0xf]
    %v2879 = vld [vmem:[%s3 + $0x21c] sm:$0xff]
    %v2880 = vld [vmem:[%s3 + $0x224] sm:$0xf]
    %v2881 = vld [vmem:[%s3 + $0x228] sm:$0xff]
    %v2882 = vld [vmem:[%s3 + $0x230] sm:$0xf]
    %v2883 = vld [vmem:[%s3 + $0x234] sm:$0xff]
    %v2884 = vld [vmem:[%s3 + $0x23c] sm:$0xf]
    %v2885 = vld [vmem:[%s4] sm:$0x7]
    %v2887 = vlaneseq
    %v2888 = vshrl.u32 %v2887, 7
    %v2889 = vsub.s32 0, %v2888
    %v2890 = vrot.slane %v2885, %v2889
    %v2891 = vlaneseq
    %v2892 = vshrl.u32 %v2891, 7
    %v2893 = vsub.s32 1, %v2892
    %v2894 = vrot.slane %v2885, %v2893
    %v2895 = vlaneseq
    %v2896 = vshrl.u32 %v2895, 7
    %v2897 = vsub.s32 2, %v2896
    %v2898 = vrot.slane %v2885, %v2897
    %v2998 = vunpack.c.l.b16 %v2789
    %v2999 = vunpack.c.h.b16 %v2789
    %v3000 = vunpack.c.l.b16 %v2790
    %v3001 = vunpack.c.l.b16 %v2791
    %v3002 = vunpack.c.h.b16 %v2791
    %v3003 = vunpack.c.l.b16 %v2792
    %v3004 = vunpack.c.l.b16 %v2793
    %v3005 = vunpack.c.h.b16 %v2793
    %v3006 = vunpack.c.l.b16 %v2794
    %v3007 = vunpack.c.l.b16 %v2795
    %v3008 = vunpack.c.h.b16 %v2795
    %v3009 = vunpack.c.l.b16 %v2796
    %v3010 = vunpack.c.l.b16 %v2797
    %v3011 = vunpack.c.h.b16 %v2797
    %v3012 = vunpack.c.l.b16 %v2798
    %v3013 = vunpack.c.l.b16 %v2799
    %v3014 = vunpack.c.h.b16 %v2799
    %v3015 = vunpack.c.l.b16 %v2800
    %v3016 = vunpack.c.l.b16 %v2801
    %v3017 = vunpack.c.h.b16 %v2801
    %v3018 = vunpack.c.l.b16 %v2802
    %v3019 = vunpack.c.l.b16 %v2803
    %v3020 = vunpack.c.h.b16 %v2803
    %v3021 = vunpack.c.l.b16 %v2804
    %v3022 = vunpack.c.l.b16 %v2805
    %v3023 = vunpack.c.h.b16 %v2805
    %v3024 = vunpack.c.l.b16 %v2806
    %v3025 = vunpack.c.l.b16 %v2807
    %v3026 = vunpack.c.h.b16 %v2807
    %v3027 = vunpack.c.l.b16 %v2808
    %v3028 = vunpack.c.l.b16 %v2809
    %v3029 = vunpack.c.h.b16 %v2809
    %v3030 = vunpack.c.l.b16 %v2810
    %v3031 = vunpack.c.l.b16 %v2811
    %v3032 = vunpack.c.h.b16 %v2811
    %v3033 = vunpack.c.l.b16 %v2812
    %v3034 = vunpack.c.l.b16 %v2813
    %v3035 = vunpack.c.h.b16 %v2813
    %v3036 = vunpack.c.l.b16 %v2814
    %v3037 = vunpack.c.l.b16 %v2815
    %v3038 = vunpack.c.h.b16 %v2815
    %v3039 = vunpack.c.l.b16 %v2816
    %v3040 = vunpack.c.l.b16 %v2817
    %v3041 = vunpack.c.h.b16 %v2817
    %v3042 = vunpack.c.l.b16 %v2818
    %v3043 = vunpack.c.l.b16 %v2819
    %v3044 = vunpack.c.h.b16 %v2819
    %v3045 = vunpack.c.l.b16 %v2820
    %v3046 = vunpack.c.l.b16 %v2821
    %v3047 = vunpack.c.h.b16 %v2821
    %v3048 = vunpack.c.l.b16 %v2822
    %v3049 = vunpack.c.l.b16 %v2823
    %v3050 = vunpack.c.h.b16 %v2823
    %v3051 = vunpack.c.l.b16 %v2824
    %v3052 = vunpack.c.l.b16 %v2825
    %v3053 = vunpack.c.h.b16 %v2825
    %v3054 = vunpack.c.l.b16 %v2826
    %v3055 = vunpack.c.l.b16 %v2827
    %v3056 = vunpack.c.h.b16 %v2827
    %v3057 = vunpack.c.l.b16 %v2828
    %v3058 = vunpack.c.l.b16 %v2829
    %v3059 = vunpack.c.h.b16 %v2829
    %v3060 = vunpack.c.l.b16 %v2830
    %v3061 = vunpack.c.l.b16 %v2831
    %v3062 = vunpack.c.h.b16 %v2831
    %v3063 = vunpack.c.l.b16 %v2832
    %v3064 = vunpack.c.l.b16 %v2833
    %v3065 = vunpack.c.h.b16 %v2833
    %v3066 = vunpack.c.l.b16 %v2834
    %v3067 = vunpack.c.l.b16 %v2835
    %v3068 = vunpack.c.h.b16 %v2835
    %v3069 = vunpack.c.l.b16 %v2836
    %v3070 = vunpack.c.l.b16 %v2837
    %v3071 = vunpack.c.h.b16 %v2837
    %v3072 = vunpack.c.l.b16 %v2838
    %v3073 = vunpack.c.l.b16 %v2839
    %v3074 = vunpack.c.h.b16 %v2839
    %v3075 = vunpack.c.l.b16 %v2840
    %v3076 = vunpack.c.l.b16 %v2841
    %v3077 = vunpack.c.h.b16 %v2841
    %v3078 = vunpack.c.l.b16 %v2842
    %v3079 = vunpack.c.l.b16 %v2843
    %v3080 = vunpack.c.h.b16 %v2843
    %v3081 = vunpack.c.l.b16 %v2844
    %v3082 = vunpack.c.l.b16 %v2845
    %v3083 = vunpack.c.h.b16 %v2845
    %v3084 = vunpack.c.l.b16 %v2846
    %v3085 = vunpack.c.l.b16 %v2847
    %v3086 = vunpack.c.h.b16 %v2847
    %v3087 = vunpack.c.l.b16 %v2848
    %v3088 = vunpack.c.l.b16 %v2849
    %v3089 = vunpack.c.h.b16 %v2849
    %v3090 = vunpack.c.l.b16 %v2850
    %v3091 = vunpack.c.l.b16 %v2851
    %v3092 = vunpack.c.h.b16 %v2851
    %v3093 = vunpack.c.l.b16 %v2852
    %v3094 = vunpack.c.l.b16 %v2853
    %v3095 = vunpack.c.h.b16 %v2853
    %v3096 = vunpack.c.l.b16 %v2854
    %v3097 = vunpack.c.l.b16 %v2855
    %v3098 = vunpack.c.h.b16 %v2855
    %v3099 = vunpack.c.l.b16 %v2856
    %v3100 = vunpack.c.l.b16 %v2857
    %v3101 = vunpack.c.h.b16 %v2857
    %v3102 = vunpack.c.l.b16 %v2858
    %v3103 = vunpack.c.l.b16 %v2859
    %v3104 = vunpack.c.h.b16 %v2859
    %v3105 = vunpack.c.l.b16 %v2860
    %v3106 = vunpack.c.l.b16 %v2861
    %v3107 = vunpack.c.h.b16 %v2861
    %v3108 = vunpack.c.l.b16 %v2862
    %v3109 = vunpack.c.l.b16 %v2863
    %v3110 = vunpack.c.h.b16 %v2863
    %v3111 = vunpack.c.l.b16 %v2864
    %v3112 = vunpack.c.l.b16 %v2865
    %v3113 = vunpack.c.h.b16 %v2865
    %v3114 = vunpack.c.l.b16 %v2866
    %v3115 = vunpack.c.l.b16 %v2867
    %v3116 = vunpack.c.h.b16 %v2867
    %v3117 = vunpack.c.l.b16 %v2868
    %v3118 = vunpack.c.l.b16 %v2869
    %v3119 = vunpack.c.h.b16 %v2869
    %v3120 = vunpack.c.l.b16 %v2870
    %v3121 = vunpack.c.l.b16 %v2871
    %v3122 = vunpack.c.h.b16 %v2871
    %v3123 = vunpack.c.l.b16 %v2872
    %v3124 = vunpack.c.l.b16 %v2873
    %v3125 = vunpack.c.h.b16 %v2873
    %v3126 = vunpack.c.l.b16 %v2874
    %v3127 = vunpack.c.l.b16 %v2875
    %v3128 = vunpack.c.h.b16 %v2875
    %v3129 = vunpack.c.l.b16 %v2876
    %v3130 = vunpack.c.l.b16 %v2877
    %v3131 = vunpack.c.h.b16 %v2877
    %v3132 = vunpack.c.l.b16 %v2878
    %v3133 = vunpack.c.l.b16 %v2879
    %v3134 = vunpack.c.h.b16 %v2879
    %v3135 = vunpack.c.l.b16 %v2880
    %v3136 = vunpack.c.l.b16 %v2881
    %v3137 = vunpack.c.h.b16 %v2881
    %v3138 = vunpack.c.l.b16 %v2882
    %v3139 = vunpack.c.l.b16 %v2883
    %v3140 = vunpack.c.h.b16 %v2883
    %v3141 = vunpack.c.l.b16 %v2884
    %v3142 = vpack.c.b16 %v3001, %v2998
    %v3143 = vpack.c.b16 %v3002, %v2999
    %v3144 = vpack.c.b16 %v3003, %v3000
    %v3145 = vpack.c.b16 %v3007, %v3004
    %v3146 = vpack.c.b16 %v3008, %v3005
    %v3147 = vpack.c.b16 %v3009, %v3006
    %v3148 = vpack.c.b16 %v3013, %v3010
    %v3149 = vpack.c.b16 %v3014, %v3011
    %v3150 = vpack.c.b16 %v3015, %v3012
    %v3151 = vpack.c.b16 %v3019, %v3016
    %v3152 = vpack.c.b16 %v3020, %v3017
    %v3153 = vpack.c.b16 %v3021, %v3018
    %v3154 = vpack.c.b16 %v3025, %v3022
    %v3155 = vpack.c.b16 %v3026, %v3023
    %v3156 = vpack.c.b16 %v3027, %v3024
    %v3157 = vpack.c.b16 %v3031, %v3028
    %v3158 = vpack.c.b16 %v3032, %v3029
    %v3159 = vpack.c.b16 %v3033, %v3030
    %v3160 = vpack.c.b16 %v3037, %v3034
    %v3161 = vpack.c.b16 %v3038, %v3035
    %v3162 = vpack.c.b16 %v3039, %v3036
    %v3163 = vpack.c.b16 %v3043, %v3040
    %v3164 = vpack.c.b16 %v3044, %v3041
    %v3165 = vpack.c.b16 %v3045, %v3042
    %v3166 = vpack.c.b16 %v3049, %v3046
    %v3167 = vpack.c.b16 %v3050, %v3047
    %v3168 = vpack.c.b16 %v3051, %v3048
    %v3169 = vpack.c.b16 %v3055, %v3052
    %v3170 = vpack.c.b16 %v3056, %v3053
    %v3171 = vpack.c.b16 %v3057, %v3054
    %v3172 = vpack.c.b16 %v3061, %v3058
    %v3173 = vpack.c.b16 %v3062, %v3059
    %v3174 = vpack.c.b16 %v3063, %v3060
    %v3175 = vpack.c.b16 %v3067, %v3064
    %v3176 = vpack.c.b16 %v3068, %v3065
    %v3177 = vpack.c.b16 %v3069, %v3066
    %v3178 = vpack.c.b16 %v3073, %v3070
    %v3179 = vpack.c.b16 %v3074, %v3071
    %v3180 = vpack.c.b16 %v3075, %v3072
    %v3181 = vpack.c.b16 %v3079, %v3076
    %v3182 = vpack.c.b16 %v3080, %v3077
    %v3183 = vpack.c.b16 %v3081, %v3078
    %v3184 = vpack.c.b16 %v3085, %v3082
    %v3185 = vpack.c.b16 %v3086, %v3083
    %v3186 = vpack.c.b16 %v3087, %v3084
    %v3187 = vpack.c.b16 %v3091, %v3088
    %v3188 = vpack.c.b16 %v3092, %v3089
    %v3189 = vpack.c.b16 %v3093, %v3090
    %v3190 = vpack.c.b16 %v3097, %v3094
    %v3191 = vpack.c.b16 %v3098, %v3095
    %v3192 = vpack.c.b16 %v3099, %v3096
    %v3193 = vpack.c.b16 %v3103, %v3100
    %v3194 = vpack.c.b16 %v3104, %v3101
    %v3195 = vpack.c.b16 %v3105, %v3102
    %v3196 = vpack.c.b16 %v3109, %v3106
    %v3197 = vpack.c.b16 %v3110, %v3107
    %v3198 = vpack.c.b16 %v3111, %v3108
    %v3199 = vpack.c.b16 %v3115, %v3112
    %v3200 = vpack.c.b16 %v3116, %v3113
    %v3201 = vpack.c.b16 %v3117, %v3114
    %v3202 = vpack.c.b16 %v3121, %v3118
    %v3203 = vpack.c.b16 %v3122, %v3119
    %v3204 = vpack.c.b16 %v3123, %v3120
    %v3205 = vpack.c.b16 %v3127, %v3124
    %v3206 = vpack.c.b16 %v3128, %v3125
    %v3207 = vpack.c.b16 %v3129, %v3126
    %v3208 = vpack.c.b16 %v3133, %v3130
    %v3209 = vpack.c.b16 %v3134, %v3131
    %v3210 = vpack.c.b16 %v3135, %v3132
    %v3211 = vpack.c.b16 %v3139, %v3136
    %v3212 = vpack.c.b16 %v3140, %v3137
    %v3213 = vpack.c.b16 %v3141, %v3138
    %3286 = vmatprep.subr.bf16.mxu0 %v3143
    %3287 = vmatpush1.bf16.msra.mxu0 %v3142
    %3288 = vmatprep.subr.bf16.mxu0 %v3146
    %3289 = vmatpush1.bf16.msra.mxu0 %v3145
    %3290 = vmatprep.subr.bf16.mxu0 %v3149
    %3291 = vmatpush1.bf16.msra.mxu0 %v3148
    %3292 = vmatprep.subr.bf16.mxu0 %v3152
    %3293 = vmatpush1.bf16.msra.mxu0 %v3151
    %3294 = vmatprep.subr.bf16.mxu0 %v3155
    %3295 = vmatpush1.bf16.msra.mxu0 %v3154
    %3296 = vmatprep.subr.bf16.mxu0 %v3158
    %3297 = vmatpush1.bf16.msra.mxu0 %v3157
    %3298 = vmatprep.subr.bf16.mxu0 %v3161
    %3299 = vmatpush1.bf16.msra.mxu0 %v3160
    %3300 = vmatprep.subr.bf16.mxu0 %v3164
    %3301 = vmatpush1.bf16.msra.mxu0 %v3163
    %3302 = vmatprep.subr.bf16.mxu0 %v3167
    %3303 = vmatpush1.bf16.msra.mxu0 %v3166
    %3304 = vmatprep.subr.bf16.mxu0 %v3170
    %3305 = vmatpush1.bf16.msra.mxu0 %v3169
    %3306 = vmatprep.subr.bf16.mxu0 %v3173
    %3307 = vmatpush1.bf16.msra.mxu0 %v3172
    %3308 = vmatprep.subr.bf16.mxu0 %v3176
    %3309 = vmatpush1.bf16.msra.mxu0 %v3175
    %3310 = vmatprep.subr.bf16.mxu0 %v3179
    %3311 = vmatpush1.bf16.msra.mxu0 %v3178
    %3312 = vmatprep.subr.bf16.mxu0 %v3182
    %3313 = vmatpush1.bf16.msra.mxu0 %v3181
    %3314 = vmatprep.subr.bf16.mxu0 %v3185
    %3315 = vmatpush1.bf16.msra.mxu0 %v3184
    %3316 = vmatprep.subr.bf16.mxu0 %v3188
    %3317 = vmatpush1.bf16.msra.mxu0 %v3187
    %3318 = vmatprep.mubr.bf16.mxu0 %v2718
    %3319 = vmatmul.mubr.bf16.gmra.mrb[0].mxu0 %v2717
    %v3320 = vpop.f32.mrb[0].mxu0
    %v3321 = vadd.f32 %v2890, %v3320
    %v3322 = vpop.f32.mrb[0].mxu0
    %v3323 = vadd.f32 %v2894, %v3322
    %v3324 = vpop.f32.mrb[0].mxu0
    %v3325 = vadd.f32 %v2890, %v3324
    %v3326 = vpop.f32.mrb[0].mxu0
    %v3327 = vadd.f32 %v2894, %v3326
    %3328 = vmatprep.mubr.bf16.mxu0 %v2721
    %3329 = vmatmul.mubr.bf16.gmra.mrb[0].mxu0 %v2720
    %v3330 = vpop.f32.mrb[0].mxu0
    %v3331 = vadd.f32 %v2890, %v3330
    %v3332 = vpop.f32.mrb[0].mxu0
    %v3333 = vadd.f32 %v2894, %v3332
    %v3334 = vpop.f32.mrb[0].mxu0
    %v3335 = vadd.f32 %v2890, %v3334
    %v3336 = vpop.f32.mrb[0].mxu0
    %v3337 = vadd.f32 %v2894, %v3336
    %3338 = vmatprep.mubr.bf16.mxu0 %v2724
    %3339 = vmatmul.mubr.bf16.gmra.mrb[0].mxu0 %v2723
    %v3340 = vpop.f32.mrb[0].mxu0
    %v3341 = vadd.f32 %v2890, %v3340
    %v3342 = vpop.f32.mrb[0].mxu0
    %v3343 = vadd.f32 %v2894, %v3342
    %v3344 = vpop.f32.mrb[0].mxu0
    %v3345 = vadd.f32 %v2890, %v3344
    %v3346 = vpop.f32.mrb[0].mxu0
    %v3347 = vadd.f32 %v2894, %v3346
    %3348 = vmatprep.mubr.bf16.mxu0 %v2727
    %3349 = vmatmul.mubr.bf16.gmra.mrb[0].mxu0 %v2726
    %v3350 = vpop.f32.mrb[0].mxu0
    %v3351 = vadd.f32 %v2890, %v3350
    %v3352 = vpop.f32.mrb[0].mxu0
    %v3353 = vadd.f32 %v2894, %v3352
    %v3354 = vpop.f32.mrb[0].mxu0
    %v3355 = vadd.f32 %v2890, %v3354
    %v3356 = vpop.f32.mrb[0].mxu0
    %v3357 = vadd.f32 %v2894, %v3356
    %3358 = vmatprep.mubr.bf16.mxu0 %v2730
    %3359 = vmatmul.mubr.bf16.gmra.mrb[0].mxu0 %v2729
    %v3360 = vpop.f32.mrb[0].mxu0
    %v3361 = vadd.f32 %v2890, %v3360
    %v3362 = vpop.f32.mrb[0].mxu0
    %v3363 = vadd.f32 %v2894, %v3362
    %v3364 = vpop.f32.mrb[0].mxu0
    %v3365 = vadd.f32 %v2890, %v3364
    %v3366 = vpop.f32.mrb[0].mxu0
    %v3367 = vadd.f32 %v2894, %v3366
    %3368 = vmatprep.mubr.bf16.mxu0 %v2733
    %3369 = vmatmul.mubr.bf16.gmra.mrb[0].mxu0 %v2732
    %v3370 = vpop.f32.mrb[0].mxu0
    %v3371 = vadd.f32 %v2890, %v3370
    %v3372 = vpop.f32.mrb[0].mxu0
    %v3373 = vadd.f32 %v2894, %v3372
    %v3374 = vpop.f32.mrb[0].mxu0
    %v3375 = vadd.f32 %v2890, %v3374
    %v3376 = vpop.f32.mrb[0].mxu0
    %v3377 = vadd.f32 %v2894, %v3376
    %3378 = vmatprep.mubr.bf16.mxu0 %v2736
    %3379 = vmatmul.mubr.bf16.gmra.mrb[0].mxu0 %v2735
    %v3380 = vpop.f32.mrb[0].mxu0
    %v3381 = vadd.f32 %v2890, %v3380
    %v3382 = vpop.f32.mrb[0].mxu0
    %v3383 = vadd.f32 %v2894, %v3382
    %v3384 = vpop.f32.mrb[0].mxu0
    %v3385 = vadd.f32 %v2890, %v3384
    %v3386 = vpop.f32.mrb[0].mxu0
    %v3387 = vadd.f32 %v2894, %v3386
    %3388 = vmatprep.mubr.bf16.mxu0 %v2739
    %3389 = vmatmul.mubr.bf16.gmra.mrb[0].mxu0 %v2738
    %v3390 = vpop.f32.mrb[0].mxu0
    %v3391 = vadd.f32 %v2890, %v3390
    %v3392 = vpop.f32.mrb[0].mxu0
    %v3393 = vadd.f32 %v2894, %v3392
    %v3394 = vpop.f32.mrb[0].mxu0
    %v3395 = vadd.f32 %v2890, %v3394
    %v3396 = vpop.f32.mrb[0].mxu0
    %v3397 = vadd.f32 %v2894, %v3396
    %3398 = vmatprep.mubr.bf16.mxu0 %v2742
    %3399 = vmatmul.mubr.bf16.gmra.mrb[0].mxu0 %v2741
    %v3400 = vpop.f32.mrb[0].mxu0
    %v3401 = vadd.f32 %v2890, %v3400
    %v3402 = vpop.f32.mrb[0].mxu0
    %v3403 = vadd.f32 %v2894, %v3402
    %v3404 = vpop.f32.mrb[0].mxu0
    %v3405 = vadd.f32 %v2890, %v3404
    %v3406 = vpop.f32.mrb[0].mxu0
    %v3407 = vadd.f32 %v2894, %v3406
    %3408 = vmatprep.mubr.bf16.mxu0 %v2745
    %3409 = vmatmul.mubr.bf16.gmra.mrb[0].mxu0 %v2744
    %v3410 = vpop.f32.mrb[0].mxu0
    %v3411 = vadd.f32 %v2890, %v3410
    %v3412 = vpop.f32.mrb[0].mxu0
    %v3413 = vadd.f32 %v2894, %v3412
    %v3414 = vpop.f32.mrb[0].mxu0
    %v3415 = vadd.f32 %v2890, %v3414
    %v3416 = vpop.f32.mrb[0].mxu0
    %v3417 = vadd.f32 %v2894, %v3416
    %3418 = vmatprep.mubr.bf16.mxu0 %v2748
    %3419 = vmatmul.mubr.bf16.gmra.mrb[0].mxu0 %v2747
    %v3420 = vpop.f32.mrb[0].mxu0
    %v3421 = vadd.f32 %v2890, %v3420
    %v3422 = vpop.f32.mrb[0].mxu0
    %v3423 = vadd.f32 %v2894, %v3422
    %v3424 = vpop.f32.mrb[0].mxu0
    %v3425 = vadd.f32 %v2890, %v3424
    %v3426 = vpop.f32.mrb[0].mxu0
    %v3427 = vadd.f32 %v2894, %v3426
    %3428 = vmatprep.mubr.bf16.mxu0 %v2751
    %3429 = vmatmul.mubr.bf16.gmra.mrb[0].mxu0 %v2750
    %v3430 = vpop.f32.mrb[0].mxu0
    %v3431 = vadd.f32 %v2890, %v3430
    %v3432 = vpop.f32.mrb[0].mxu0
    %v3433 = vadd.f32 %v2894, %v3432
    %v3434 = vpop.f32.mrb[0].mxu0
    %v3435 = vadd.f32 %v2890, %v3434
    %v3436 = vpop.f32.mrb[0].mxu0
    %v3437 = vadd.f32 %v2894, %v3436
    %3438 = vmatprep.mubr.bf16.mxu0 %v2754
    %3439 = vmatmul.mubr.bf16.gmra.mrb[0].mxu0 %v2753
    %v3440 = vpop.f32.mrb[0].mxu0
    %v3441 = vadd.f32 %v2890, %v3440
    %v3442 = vpop.f32.mrb[0].mxu0
    %v3443 = vadd.f32 %v2894, %v3442
    %v3444 = vpop.f32.mrb[0].mxu0
    %v3445 = vadd.f32 %v2890, %v3444
    %v3446 = vpop.f32.mrb[0].mxu0
    %v3447 = vadd.f32 %v2894, %v3446
    %3448 = vmatprep.mubr.bf16.mxu0 %v2757
    %3449 = vmatmul.mubr.bf16.gmra.mrb[0].mxu0 %v2756
    %v3450 = vpop.f32.mrb[0].mxu0
    %v3451 = vadd.f32 %v2890, %v3450
    %v3452 = vpop.f32.mrb[0].mxu0
    %v3453 = vadd.f32 %v2894, %v3452
    %v3454 = vpop.f32.mrb[0].mxu0
    %v3455 = vadd.f32 %v2890, %v3454
    %v3456 = vpop.f32.mrb[0].mxu0
    %v3457 = vadd.f32 %v2894, %v3456
    %3458 = vmatprep.mubr.bf16.mxu0 %v2760
    %3459 = vmatmul.mubr.bf16.gmra.mrb[0].mxu0 %v2759
    %v3460 = vpop.f32.mrb[0].mxu0
    %v3461 = vadd.f32 %v2890, %v3460
    %v3462 = vpop.f32.mrb[0].mxu0
    %v3463 = vadd.f32 %v2894, %v3462
    %v3464 = vpop.f32.mrb[0].mxu0
    %v3465 = vadd.f32 %v2890, %v3464
    %v3466 = vpop.f32.mrb[0].mxu0
    %v3467 = vadd.f32 %v2894, %v3466
    %3468 = vmatprep.mubr.bf16.mxu0 %v2763
    %3469 = vmatmul.mubr.bf16.gmra.mrb[0].mxu0 %v2762
    %v3470 = vpop.f32.mrb[0].mxu0
    %v3471 = vadd.f32 %v2890, %v3470
    %v3472 = vpop.f32.mrb[0].mxu0
    %v3473 = vadd.f32 %v2894, %v3472
    %v3474 = vpop.f32.mrb[0].mxu0
    %v3475 = vadd.f32 %v2890, %v3474
    %v3476 = vpop.f32.mrb[0].mxu0
    %v3477 = vadd.f32 %v2894, %v3476
    %3478 = vmatprep.mubr.bf16.mxu0 %v2766
    %3479 = vmatmul.mubr.bf16.gmra.mrb[0].mxu0 %v2765
    %v3480 = vpop.f32.mrb[0].mxu0
    %v3481 = vadd.f32 %v2890, %v3480
    %v3482 = vpop.f32.mrb[0].mxu0
    %v3483 = vadd.f32 %v2894, %v3482
    %v3484 = vpop.f32.mrb[0].mxu0
    %v3485 = vadd.f32 %v2890, %v3484
    %v3486 = vpop.f32.mrb[0].mxu0
    %v3487 = vadd.f32 %v2894, %v3486
    %3488 = vmatprep.mubr.bf16.mxu0 %v2769
    %3489 = vmatmul.mubr.bf16.gmra.mrb[0].mxu0 %v2768
    %v3490 = vpop.f32.mrb[0].mxu0
    %v3491 = vadd.f32 %v2890, %v3490
    %v3492 = vpop.f32.mrb[0].mxu0
    %v3493 = vadd.f32 %v2894, %v3492
    %v3494 = vpop.f32.mrb[0].mxu0
    %v3495 = vadd.f32 %v2890, %v3494
    %v3496 = vpop.f32.mrb[0].mxu0
    %v3497 = vadd.f32 %v2894, %v3496
    %3498 = vmatprep.mubr.bf16.mxu0 %v2772
    %3499 = vmatmul.mubr.bf16.gmra.mrb[0].mxu0 %v2771
    %v3500 = vpop.f32.mrb[0].mxu0
    %v3501 = vadd.f32 %v2890, %v3500
    %v3502 = vpop.f32.mrb[0].mxu0
    %v3503 = vadd.f32 %v2894, %v3502
    %v3504 = vpop.f32.mrb[0].mxu0
    %v3505 = vadd.f32 %v2890, %v3504
    %v3506 = vpop.f32.mrb[0].mxu0
    %v3507 = vadd.f32 %v2894, %v3506
    %3508 = vmatprep.mubr.bf16.mxu0 %v2775
    %3509 = vmatmul.mubr.bf16.gmra.mrb[0].mxu0 %v2774
    %v3510 = vpop.f32.mrb[0].mxu0
    %v3511 = vadd.f32 %v2890, %v3510
    %v3512 = vpop.f32.mrb[0].mxu0
    %v3513 = vadd.f32 %v2894, %v3512
    %v3514 = vpop.f32.mrb[0].mxu0
    %v3515 = vadd.f32 %v2890, %v3514
    %v3516 = vpop.f32.mrb[0].mxu0
    %v3517 = vadd.f32 %v2894, %v3516
    %3518 = vmatprep.mubr.bf16.mxu0 %v2778
    %3519 = vmatmul.mubr.bf16.gmra.mrb[0].mxu0 %v2777
    %v3520 = vpop.f32.mrb[0].mxu0
    %v3521 = vadd.f32 %v2890, %v3520
    %v3522 = vpop.f32.mrb[0].mxu0
    %v3523 = vadd.f32 %v2894, %v3522
    %v3524 = vpop.f32.mrb[0].mxu0
    %v3525 = vadd.f32 %v2890, %v3524
    %v3526 = vpop.f32.mrb[0].mxu0
    %v3527 = vadd.f32 %v2894, %v3526
    %3528 = vmatprep.mubr.bf16.mxu0 %v2781
    %3529 = vmatmul.mubr.bf16.gmra.mrb[0].mxu0 %v2780
    %v3530 = vpop.f32.mrb[0].mxu0
    %v3531 = vadd.f32 %v2890, %v3530
    %v3532 = vpop.f32.mrb[0].mxu0
    %v3533 = vadd.f32 %v2894, %v3532
    %v3534 = vpop.f32.mrb[0].mxu0
    %v3535 = vadd.f32 %v2890, %v3534
    %v3536 = vpop.f32.mrb[0].mxu0
    %v3537 = vadd.f32 %v2894, %v3536
    %3538 = vmatprep.mubr.bf16.mxu0 %v2784
    %3539 = vmatmul.mubr.bf16.gmra.mrb[0].mxu0 %v2783
    %v3540 = vpop.f32.mrb[0].mxu0
    %v3541 = vadd.f32 %v2890, %v3540
    %v3542 = vpop.f32.mrb[0].mxu0
    %v3543 = vadd.f32 %v2894, %v3542
    %v3544 = vpop.f32.mrb[0].mxu0
    %v3545 = vadd.f32 %v2890, %v3544
    %v3546 = vpop.f32.mrb[0].mxu0
    %v3547 = vadd.f32 %v2894, %v3546
    %3548 = vmatprep.mubr.bf16.mxu0 %v2787
    %3549 = vmatmul.mubr.bf16.gmra.mrb[0].mxu0 %v2786
    %v3550 = vpop.f32.mrb[0].mxu0
    %v3551 = vadd.f32 %v2890, %v3550
    %v3552 = vpop.f32.mrb[0].mxu0
    %v3553 = vadd.f32 %v2894, %v3552
    %v3554 = vpop.f32.mrb[0].mxu0
    %v3555 = vadd.f32 %v2890, %v3554
    %v3556 = vpop.f32.mrb[0].mxu0
    %v3557 = vadd.f32 %v2894, %v3556
    %3558 = vdwg.mxu0
    %3559 = vmatprep.subr.bf16.mxu0 %v3191
    %3560 = vmatpush1.bf16.msra.mxu0 %v3190
    %3561 = vmatprep.subr.bf16.mxu0 %v3194
    %3562 = vmatpush1.bf16.msra.mxu0 %v3193
    %3563 = vmatprep.subr.bf16.mxu0 %v3197
    %3564 = vmatpush1.bf16.msra.mxu0 %v3196
    %3565 = vmatprep.subr.bf16.mxu0 %v3200
    %3566 = vmatpush1.bf16.msra.mxu0 %v3199
    %3567 = vmatprep.subr.bf16.mxu0 %v3203
    %3568 = vmatpush1.bf16.msra.mxu0 %v3202
    %3569 = vmatprep.subr.bf16.mxu0 %v3206
    %3570 = vmatpush1.bf16.msra.mxu0 %v3205
    %3571 = vmatprep.subr.bf16.mxu0 %v3209
    %3572 = vmatpush1.bf16.msra.mxu0 %v3208
    %3573 = vmatprep.subr.bf16.mxu0 %v3212
    %3574 = vmatpush1.bf16.msra.mxu0 %v3211
    %3575 = vmatprep.subr.bf16.mxu0 0
    %3576 = vmatpush1.bf16.msra.mxu0 0
    %3577 = vmatprep.subr.bf16.mxu0 0
    %3578 = vmatpush1.bf16.msra.mxu0 0
    %3579 = vmatprep.subr.bf16.mxu0 0
    %3580 = vmatpush1.bf16.msra.mxu0 0
    %3581 = vmatprep.subr.bf16.mxu0 0
    %3582 = vmatpush1.bf16.msra.mxu0 0
    %3583 = vmatprep.subr.bf16.mxu0 0
    %3584 = vmatpush1.bf16.msra.mxu0 0
    %3585 = vmatprep.subr.bf16.mxu0 0
    %3586 = vmatpush1.bf16.msra.mxu0 0
    %3587 = vmatprep.subr.bf16.mxu0 0
    %3588 = vmatpush1.bf16.msra.mxu0 0
    %3589 = vmatprep.subr.bf16.mxu0 0
    %3590 = vmatpush1.bf16.msra.mxu0 0
    %3591 = vmatprep.mubr.bf16.mxu0 0
    %3592 = vmatmul.mubr.bf16.gmra.mrb[0].mxu0 %v2719
    %v3593 = vpop.f32.mrb[0].mxu0
    %v3594 = vadd.f32 %v3321, %v3593
    %v3595 = vpop.f32.mrb[0].mxu0
    %v3596 = vadd.f32 %v3323, %v3595
    %v3597 = vpop.f32.mrb[0].mxu0
    %v3598 = vadd.f32 %v3325, %v3597
    %v3599 = vpop.f32.mrb[0].mxu0
    %v3600 = vadd.f32 %v3327, %v3599
    %3601 = vmatprep.mubr.bf16.mxu0 0
    %3602 = vmatmul.mubr.bf16.gmra.mrb[0].mxu0 %v2722
    %v3603 = vpop.f32.mrb[0].mxu0
    %v3604 = vadd.f32 %v3331, %v3603
    %v3605 = vpop.f32.mrb[0].mxu0
    %v3606 = vadd.f32 %v3333, %v3605
    %v3607 = vpop.f32.mrb[0].mxu0
    %v3608 = vadd.f32 %v3335, %v3607
    %v3609 = vpop.f32.mrb[0].mxu0
    %v3610 = vadd.f32 %v3337, %v3609
    %3611 = vmatprep.mubr.bf16.mxu0 0
    %3612 = vmatmul.mubr.bf16.gmra.mrb[0].mxu0 %v2725
    %v3613 = vpop.f32.mrb[0].mxu0
    %v3614 = vadd.f32 %v3341, %v3613
    %v3615 = vpop.f32.mrb[0].mxu0
    %v3616 = vadd.f32 %v3343, %v3615
    %v3617 = vpop.f32.mrb[0].mxu0
    %v3618 = vadd.f32 %v3345, %v3617
    %v3619 = vpop.f32.mrb[0].mxu0
    %v3620 = vadd.f32 %v3347, %v3619
    %3621 = vmatprep.mubr.bf16.mxu0 0
    %3622 = vmatmul.mubr.bf16.gmra.mrb[0].mxu0 %v2728
    %v3623 = vpop.f32.mrb[0].mxu0
    %v3624 = vadd.f32 %v3351, %v3623
    %v3625 = vpop.f32.mrb[0].mxu0
    %v3626 = vadd.f32 %v3353, %v3625
    %v3627 = vpop.f32.mrb[0].mxu0
    %v3628 = vadd.f32 %v3355, %v3627
    %v3629 = vpop.f32.mrb[0].mxu0
    %v3630 = vadd.f32 %v3357, %v3629
    %3631 = vmatprep.mubr.bf16.mxu0 0
    %3632 = vmatmul.mubr.bf16.gmra.mrb[0].mxu0 %v2731
    %v3633 = vpop.f32.mrb[0].mxu0
    %v3634 = vadd.f32 %v3361, %v3633
    %v3635 = vpop.f32.mrb[0].mxu0
    %v3636 = vadd.f32 %v3363, %v3635
    %v3637 = vpop.f32.mrb[0].mxu0
    %v3638 = vadd.f32 %v3365, %v3637
    %v3639 = vpop.f32.mrb[0].mxu0
    %v3640 = vadd.f32 %v3367, %v3639
    %3641 = vmatprep.mubr.bf16.mxu0 0
    %3642 = vmatmul.mubr.bf16.gmra.mrb[0].mxu0 %v2734
    %v3643 = vpop.f32.mrb[0].mxu0
    %v3644 = vadd.f32 %v3371, %v3643
    %v3645 = vpop.f32.mrb[0].mxu0
    %v3646 = vadd.f32 %v3373, %v3645
    %v3647 = vpop.f32.mrb[0].mxu0
    %v3648 = vadd.f32 %v3375, %v3647
    %v3649 = vpop.f32.mrb[0].mxu0
    %v3650 = vadd.f32 %v3377, %v3649
    %3651 = vmatprep.mubr.bf16.mxu0 0
    %3652 = vmatmul.mubr.bf16.gmra.mrb[0].mxu0 %v2737
    %v3653 = vpop.f32.mrb[0].mxu0
    %v3654 = vadd.f32 %v3381, %v3653
    %v3655 = vpop.f32.mrb[0].mxu0
    %v3656 = vadd.f32 %v3383, %v3655
    %v3657 = vpop.f32.mrb[0].mxu0
    %v3658 = vadd.f32 %v3385, %v3657
    %v3659 = vpop.f32.mrb[0].mxu0
    %v3660 = vadd.f32 %v3387, %v3659
    %3661 = vmatprep.mubr.bf16.mxu0 0
    %3662 = vmatmul.mubr.bf16.gmra.mrb[0].mxu0 %v2740
    %v3663 = vpop.f32.mrb[0].mxu0
    %v3664 = vadd.f32 %v3391, %v3663
    %v3665 = vpop.f32.mrb[0].mxu0
    %v3666 = vadd.f32 %v3393, %v3665
    %v3667 = vpop.f32.mrb[0].mxu0
    %v3668 = vadd.f32 %v3395, %v3667
    %v3669 = vpop.f32.mrb[0].mxu0
    %v3670 = vadd.f32 %v3397, %v3669
    %3671 = vmatprep.mubr.bf16.mxu0 0
    %3672 = vmatmul.mubr.bf16.gmra.mrb[0].mxu0 %v2743
    %v3673 = vpop.f32.mrb[0].mxu0
    %v3674 = vadd.f32 %v3401, %v3673
    %v3675 = vpop.f32.mrb[0].mxu0
    %v3676 = vadd.f32 %v3403, %v3675
    %v3677 = vpop.f32.mrb[0].mxu0
    %v3678 = vadd.f32 %v3405, %v3677
    %v3679 = vpop.f32.mrb[0].mxu0
    %v3680 = vadd.f32 %v3407, %v3679
    %3681 = vmatprep.mubr.bf16.mxu0 0
    %3682 = vmatmul.mubr.bf16.gmra.mrb[0].mxu0 %v2746
    %v3683 = vpop.f32.mrb[0].mxu0
    %v3684 = vadd.f32 %v3411, %v3683
    %v3685 = vpop.f32.mrb[0].mxu0
    %v3686 = vadd.f32 %v3413, %v3685
    %v3687 = vpop.f32.mrb[0].mxu0
    %v3688 = vadd.f32 %v3415, %v3687
    %v3689 = vpop.f32.mrb[0].mxu0
    %v3690 = vadd.f32 %v3417, %v3689
    %3691 = vmatprep.mubr.bf16.mxu0 0
    %3692 = vmatmul.mubr.bf16.gmra.mrb[0].mxu0 %v2749
    %v3693 = vpop.f32.mrb[0].mxu0
    %v3694 = vadd.f32 %v3421, %v3693
    %v3695 = vpop.f32.mrb[0].mxu0
    %v3696 = vadd.f32 %v3423, %v3695
    %v3697 = vpop.f32.mrb[0].mxu0
    %v3698 = vadd.f32 %v3425, %v3697
    %v3699 = vpop.f32.mrb[0].mxu0
    %v3700 = vadd.f32 %v3427, %v3699
    %3701 = vmatprep.mubr.bf16.mxu0 0
    %3702 = vmatmul.mubr.bf16.gmra.mrb[0].mxu0 %v2752
    %v3703 = vpop.f32.mrb[0].mxu0
    %v3704 = vadd.f32 %v3431, %v3703
    %v3705 = vpop.f32.mrb[0].mxu0
    %v3706 = vadd.f32 %v3433, %v3705
    %v3707 = vpop.f32.mrb[0].mxu0
    %v3708 = vadd.f32 %v3435, %v3707
    %v3709 = vpop.f32.mrb[0].mxu0
    %v3710 = vadd.f32 %v3437, %v3709
    %3711 = vmatprep.mubr.bf16.mxu0 0
    %3712 = vmatmul.mubr.bf16.gmra.mrb[0].mxu0 %v2755
    %v3713 = vpop.f32.mrb[0].mxu0
    %v3714 = vadd.f32 %v3441, %v3713
    %v3715 = vpop.f32.mrb[0].mxu0
    %v3716 = vadd.f32 %v3443, %v3715
    %v3717 = vpop.f32.mrb[0].mxu0
    %v3718 = vadd.f32 %v3445, %v3717
    %v3719 = vpop.f32.mrb[0].mxu0
    %v3720 = vadd.f32 %v3447, %v3719
    %3721 = vmatprep.mubr.bf16.mxu0 0
    %3722 = vmatmul.mubr.bf16.gmra.mrb[0].mxu0 %v2758
    %v3723 = vpop.f32.mrb[0].mxu0
    %v3724 = vadd.f32 %v3451, %v3723
    %v3725 = vpop.f32.mrb[0].mxu0
    %v3726 = vadd.f32 %v3453, %v3725
    %v3727 = vpop.f32.mrb[0].mxu0
    %v3728 = vadd.f32 %v3455, %v3727
    %v3729 = vpop.f32.mrb[0].mxu0
    %v3730 = vadd.f32 %v3457, %v3729
    %3731 = vmatprep.mubr.bf16.mxu0 0
    %3732 = vmatmul.mubr.bf16.gmra.mrb[0].mxu0 %v2761
    %v3733 = vpop.f32.mrb[0].mxu0
    %v3734 = vadd.f32 %v3461, %v3733
    %v3735 = vpop.f32.mrb[0].mxu0
    %v3736 = vadd.f32 %v3463, %v3735
    %v3737 = vpop.f32.mrb[0].mxu0
    %v3738 = vadd.f32 %v3465, %v3737
    %v3739 = vpop.f32.mrb[0].mxu0
    %v3740 = vadd.f32 %v3467, %v3739
    %3741 = vmatprep.mubr.bf16.mxu0 0
    %3742 = vmatmul.mubr.bf16.gmra.mrb[0].mxu0 %v2764
    %v3743 = vpop.f32.mrb[0].mxu0
    %v3744 = vadd.f32 %v3471, %v3743
    %v3745 = vpop.f32.mrb[0].mxu0
    %v3746 = vadd.f32 %v3473, %v3745
    %v3747 = vpop.f32.mrb[0].mxu0
    %v3748 = vadd.f32 %v3475, %v3747
    %v3749 = vpop.f32.mrb[0].mxu0
    %v3750 = vadd.f32 %v3477, %v3749
    %3751 = vmatprep.mubr.bf16.mxu0 0
    %3752 = vmatmul.mubr.bf16.gmra.mrb[0].mxu0 %v2767
    %v3753 = vpop.f32.mrb[0].mxu0
    %v3754 = vadd.f32 %v3481, %v3753
    %v3755 = vpop.f32.mrb[0].mxu0
    %v3756 = vadd.f32 %v3483, %v3755
    %v3757 = vpop.f32.mrb[0].mxu0
    %v3758 = vadd.f32 %v3485, %v3757
    %v3759 = vpop.f32.mrb[0].mxu0
    %v3760 = vadd.f32 %v3487, %v3759
    %3761 = vmatprep.mubr.bf16.mxu0 0
    %3762 = vmatmul.mubr.bf16.gmra.mrb[0].mxu0 %v2770
    %v3763 = vpop.f32.mrb[0].mxu0
    %v3764 = vadd.f32 %v3491, %v3763
    %v3765 = vpop.f32.mrb[0].mxu0
    %v3766 = vadd.f32 %v3493, %v3765
    %v3767 = vpop.f32.mrb[0].mxu0
    %v3768 = vadd.f32 %v3495, %v3767
    %v3769 = vpop.f32.mrb[0].mxu0
    %v3770 = vadd.f32 %v3497, %v3769
    %3771 = vmatprep.mubr.bf16.mxu0 0
    %3772 = vmatmul.mubr.bf16.gmra.mrb[0].mxu0 %v2773
    %v3773 = vpop.f32.mrb[0].mxu0
    %v3774 = vadd.f32 %v3501, %v3773
    %v3775 = vpop.f32.mrb[0].mxu0
    %v3776 = vadd.f32 %v3503, %v3775
    %v3777 = vpop.f32.mrb[0].mxu0
    %v3778 = vadd.f32 %v3505, %v3777
    %v3779 = vpop.f32.mrb[0].mxu0
    %v3780 = vadd.f32 %v3507, %v3779
    %3781 = vmatprep.mubr.bf16.mxu0 0
    %3782 = vmatmul.mubr.bf16.gmra.mrb[0].mxu0 %v2776
    %v3783 = vpop.f32.mrb[0].mxu0
    %v3784 = vadd.f32 %v3511, %v3783
    %v3785 = vpop.f32.mrb[0].mxu0
    %v3786 = vadd.f32 %v3513, %v3785
    %v3787 = vpop.f32.mrb[0].mxu0
    %v3788 = vadd.f32 %v3515, %v3787
    %v3789 = vpop.f32.mrb[0].mxu0
    %v3790 = vadd.f32 %v3517, %v3789
    %3791 = vmatprep.mubr.bf16.mxu0 0
    %3792 = vmatmul.mubr.bf16.gmra.mrb[0].mxu0 %v2779
    %v3793 = vpop.f32.mrb[0].mxu0
    %v3794 = vadd.f32 %v3521, %v3793
    %v3795 = vpop.f32.mrb[0].mxu0
    %v3796 = vadd.f32 %v3523, %v3795
    %v3797 = vpop.f32.mrb[0].mxu0
    %v3798 = vadd.f32 %v3525, %v3797
    %v3799 = vpop.f32.mrb[0].mxu0
    %v3800 = vadd.f32 %v3527, %v3799
    %3801 = vmatprep.mubr.bf16.mxu0 0
    %3802 = vmatmul.mubr.bf16.gmra.mrb[0].mxu0 %v2782
    %v3803 = vpop.f32.mrb[0].mxu0
    %v3804 = vadd.f32 %v3531, %v3803
    %v3805 = vpop.f32.mrb[0].mxu0
    %v3806 = vadd.f32 %v3533, %v3805
    %v3807 = vpop.f32.mrb[0].mxu0
    %v3808 = vadd.f32 %v3535, %v3807
    %v3809 = vpop.f32.mrb[0].mxu0
    %v3810 = vadd.f32 %v3537, %v3809
    %3811 = vmatprep.mubr.bf16.mxu0 0
    %3812 = vmatmul.mubr.bf16.gmra.mrb[0].mxu0 %v2785
    %v3813 = vpop.f32.mrb[0].mxu0
    %v3814 = vadd.f32 %v3541, %v3813
    %v3815 = vpop.f32.mrb[0].mxu0
    %v3816 = vadd.f32 %v3543, %v3815
    %v3817 = vpop.f32.mrb[0].mxu0
    %v3818 = vadd.f32 %v3545, %v3817
    %v3819 = vpop.f32.mrb[0].mxu0
    %v3820 = vadd.f32 %v3547, %v3819
    %3821 = vmatprep.mubr.bf16.mxu0 0
    %3822 = vmatmul.mubr.bf16.gmra.mrb[0].mxu0 %v2788
    %v3823 = vpop.f32.mrb[0].mxu0
    %v3824 = vadd.f32 %v3551, %v3823
    %v3825 = vpop.f32.mrb[0].mxu0
    %v3826 = vadd.f32 %v3553, %v3825
    %v3827 = vpop.f32.mrb[0].mxu0
    %v3828 = vadd.f32 %v3555, %v3827
    %v3829 = vpop.f32.mrb[0].mxu0
    %v3830 = vadd.f32 %v3557, %v3829
    %3831 = vdwg.mxu0
    %3832 = vmatprep.subr.bf16.mxu0 0
    %3833 = vmatpush1.bf16.msra.mxu0 %v3144
    %3834 = vmatprep.subr.bf16.mxu0 0
    %3835 = vmatpush1.bf16.msra.mxu0 %v3147
    %3836 = vmatprep.subr.bf16.mxu0 0
    %3837 = vmatpush1.bf16.msra.mxu0 %v3150
    %3838 = vmatprep.subr.bf16.mxu0 0
    %3839 = vmatpush1.bf16.msra.mxu0 %v3153
    %3840 = vmatprep.subr.bf16.mxu0 0
    %3841 = vmatpush1.bf16.msra.mxu0 %v3156
    %3842 = vmatprep.subr.bf16.mxu0 0
    %3843 = vmatpush1.bf16.msra.mxu0 %v3159
    %3844 = vmatprep.subr.bf16.mxu0 0
    %3845 = vmatpush1.bf16.msra.mxu0 %v3162
    %3846 = vmatprep.subr.bf16.mxu0 0
    %3847 = vmatpush1.bf16.msra.mxu0 %v3165
    %3848 = vmatprep.subr.bf16.mxu0 0
    %3849 = vmatpush1.bf16.msra.mxu0 %v3168
    %3850 = vmatprep.subr.bf16.mxu0 0
    %3851 = vmatpush1.bf16.msra.mxu0 %v3171
    %3852 = vmatprep.subr.bf16.mxu0 0
    %3853 = vmatpush1.bf16.msra.mxu0 %v3174
    %3854 = vmatprep.subr.bf16.mxu0 0
    %3855 = vmatpush1.bf16.msra.mxu0 %v3177
    %3856 = vmatprep.subr.bf16.mxu0 0
    %3857 = vmatpush1.bf16.msra.mxu0 %v3180
    %3858 = vmatprep.subr.bf16.mxu0 0
    %3859 = vmatpush1.bf16.msra.mxu0 %v3183
    %3860 = vmatprep.subr.bf16.mxu0 0
    %3861 = vmatpush1.bf16.msra.mxu0 %v3186
    %3862 = vmatprep.subr.bf16.mxu0 0
    %3863 = vmatpush1.bf16.msra.mxu0 %v3189
    %3864 = vmatprep.mubr.bf16.mxu0 %v2718
    %3865 = vmatmul.mubr.bf16.gmra.mrb[0].mxu0 %v2717
    %v3866 = vpop.f32.mrb[0].mxu0
    %v3867 = vadd.f32 %v2898, %v3866
    %v3868 = vpop.f32.mrb[0].mxu0
    %v3869 = vpop.f32.mrb[0].mxu0
    %v3870 = vadd.f32 %v2898, %v3869
    %v3871 = vpop.f32.mrb[0].mxu0
    %3872 = vmatprep.mubr.bf16.mxu0 %v2721
    %3873 = vmatmul.mubr.bf16.gmra.mrb[0].mxu0 %v2720
    %v3874 = vpop.f32.mrb[0].mxu0
    %v3875 = vadd.f32 %v2898, %v3874
    %v3876 = vpop.f32.mrb[0].mxu0
    %v3877 = vpop.f32.mrb[0].mxu0
    %v3878 = vadd.f32 %v2898, %v3877
    %v3879 = vpop.f32.mrb[0].mxu0
    %3880 = vmatprep.mubr.bf16.mxu0 %v2724
    %3881 = vmatmul.mubr.bf16.gmra.mrb[0].mxu0 %v2723
    %v3882 = vpop.f32.mrb[0].mxu0
    %v3883 = vadd.f32 %v2898, %v3882
    %v3884 = vpop.f32.mrb[0].mxu0
    %v3885 = vpop.f32.mrb[0].mxu0
    %v3886 = vadd.f32 %v2898, %v3885
    %v3887 = vpop.f32.mrb[0].mxu0
    %3888 = vmatprep.mubr.bf16.mxu0 %v2727
    %3889 = vmatmul.mubr.bf16.gmra.mrb[0].mxu0 %v2726
    %v3890 = vpop.f32.mrb[0].mxu0
    %v3891 = vadd.f32 %v2898, %v3890
    %v3892 = vpop.f32.mrb[0].mxu0
    %v3893 = vpop.f32.mrb[0].mxu0
    %v3894 = vadd.f32 %v2898, %v3893
    %v3895 = vpop.f32.mrb[0].mxu0
    %3896 = vmatprep.mubr.bf16.mxu0 %v2730
    %3897 = vmatmul.mubr.bf16.gmra.mrb[0].mxu0 %v2729
    %v3898 = vpop.f32.mrb[0].mxu0
    %v3899 = vadd.f32 %v2898, %v3898
    %v3900 = vpop.f32.mrb[0].mxu0
    %v3901 = vpop.f32.mrb[0].mxu0
    %v3902 = vadd.f32 %v2898, %v3901
    %v3903 = vpop.f32.mrb[0].mxu0
    %3904 = vmatprep.mubr.bf16.mxu0 %v2733
    %3905 = vmatmul.mubr.bf16.gmra.mrb[0].mxu0 %v2732
    %v3906 = vpop.f32.mrb[0].mxu0
    %v3907 = vadd.f32 %v2898, %v3906
    %v3908 = vpop.f32.mrb[0].mxu0
    %v3909 = vpop.f32.mrb[0].mxu0
    %v3910 = vadd.f32 %v2898, %v3909
    %v3911 = vpop.f32.mrb[0].mxu0
    %3912 = vmatprep.mubr.bf16.mxu0 %v2736
    %3913 = vmatmul.mubr.bf16.gmra.mrb[0].mxu0 %v2735
    %v3914 = vpop.f32.mrb[0].mxu0
    %v3915 = vadd.f32 %v2898, %v3914
    %v3916 = vpop.f32.mrb[0].mxu0
    %v3917 = vpop.f32.mrb[0].mxu0
    %v3918 = vadd.f32 %v2898, %v3917
    %v3919 = vpop.f32.mrb[0].mxu0
    %3920 = vmatprep.mubr.bf16.mxu0 %v2739
    %3921 = vmatmul.mubr.bf16.gmra.mrb[0].mxu0 %v2738
    %v3922 = vpop.f32.mrb[0].mxu0
    %v3923 = vadd.f32 %v2898, %v3922
    %v3924 = vpop.f32.mrb[0].mxu0
    %v3925 = vpop.f32.mrb[0].mxu0
    %v3926 = vadd.f32 %v2898, %v3925
    %v3927 = vpop.f32.mrb[0].mxu0
    %3928 = vmatprep.mubr.bf16.mxu0 %v2742
    %3929 = vmatmul.mubr.bf16.gmra.mrb[0].mxu0 %v2741
    %v3930 = vpop.f32.mrb[0].mxu0
    %v3931 = vadd.f32 %v2898, %v3930
    %v3932 = vpop.f32.mrb[0].mxu0
    %v3933 = vpop.f32.mrb[0].mxu0
    %v3934 = vadd.f32 %v2898, %v3933
    %v3935 = vpop.f32.mrb[0].mxu0
    %3936 = vmatprep.mubr.bf16.mxu0 %v2745
    %3937 = vmatmul.mubr.bf16.gmra.mrb[0].mxu0 %v2744
    %v3938 = vpop.f32.mrb[0].mxu0
    %v3939 = vadd.f32 %v2898, %v3938
    %v3940 = vpop.f32.mrb[0].mxu0
    %v3941 = vpop.f32.mrb[0].mxu0
    %v3942 = vadd.f32 %v2898, %v3941
    %v3943 = vpop.f32.mrb[0].mxu0
    %3944 = vmatprep.mubr.bf16.mxu0 %v2748
    %3945 = vmatmul.mubr.bf16.gmra.mrb[0].mxu0 %v2747
    %v3946 = vpop.f32.mrb[0].mxu0
    %v3947 = vadd.f32 %v2898, %v3946
    %v3948 = vpop.f32.mrb[0].mxu0
    %v3949 = vpop.f32.mrb[0].mxu0
    %v3950 = vadd.f32 %v2898, %v3949
    %v3951 = vpop.f32.mrb[0].mxu0
    %3952 = vmatprep.mubr.bf16.mxu0 %v2751
    %3953 = vmatmul.mubr.bf16.gmra.mrb[0].mxu0 %v2750
    %v3954 = vpop.f32.mrb[0].mxu0
    %v3955 = vadd.f32 %v2898, %v3954
    %v3956 = vpop.f32.mrb[0].mxu0
    %v3957 = vpop.f32.mrb[0].mxu0
    %v3958 = vadd.f32 %v2898, %v3957
    %v3959 = vpop.f32.mrb[0].mxu0
    %3960 = vmatprep.mubr.bf16.mxu0 %v2754
    %3961 = vmatmul.mubr.bf16.gmra.mrb[0].mxu0 %v2753
    %v3962 = vpop.f32.mrb[0].mxu0
    %v3963 = vadd.f32 %v2898, %v3962
    %v3964 = vpop.f32.mrb[0].mxu0
    %v3965 = vpop.f32.mrb[0].mxu0
    %v3966 = vadd.f32 %v2898, %v3965
    %v3967 = vpop.f32.mrb[0].mxu0
    %3968 = vmatprep.mubr.bf16.mxu0 %v2757
    %3969 = vmatmul.mubr.bf16.gmra.mrb[0].mxu0 %v2756
    %v3970 = vpop.f32.mrb[0].mxu0
    %v3971 = vadd.f32 %v2898, %v3970
    %v3972 = vpop.f32.mrb[0].mxu0
    %v3973 = vpop.f32.mrb[0].mxu0
    %v3974 = vadd.f32 %v2898, %v3973
    %v3975 = vpop.f32.mrb[0].mxu0
    %3976 = vmatprep.mubr.bf16.mxu0 %v2760
    %3977 = vmatmul.mubr.bf16.gmra.mrb[0].mxu0 %v2759
    %v3978 = vpop.f32.mrb[0].mxu0
    %v3979 = vadd.f32 %v2898, %v3978
    %v3980 = vpop.f32.mrb[0].mxu0
    %v3981 = vpop.f32.mrb[0].mxu0
    %v3982 = vadd.f32 %v2898, %v3981
    %v3983 = vpop.f32.mrb[0].mxu0
    %3984 = vmatprep.mubr.bf16.mxu0 %v2763
    %3985 = vmatmul.mubr.bf16.gmra.mrb[0].mxu0 %v2762
    %v3986 = vpop.f32.mrb[0].mxu0
    %v3987 = vadd.f32 %v2898, %v3986
    %v3988 = vpop.f32.mrb[0].mxu0
    %v3989 = vpop.f32.mrb[0].mxu0
    %v3990 = vadd.f32 %v2898, %v3989
    %v3991 = vpop.f32.mrb[0].mxu0
    %3992 = vmatprep.mubr.bf16.mxu0 %v2766
    %3993 = vmatmul.mubr.bf16.gmra.mrb[0].mxu0 %v2765
    %v3994 = vpop.f32.mrb[0].mxu0
    %v3995 = vadd.f32 %v2898, %v3994
    %v3996 = vpop.f32.mrb[0].mxu0
    %v3997 = vpop.f32.mrb[0].mxu0
    %v3998 = vadd.f32 %v2898, %v3997
    %v3999 = vpop.f32.mrb[0].mxu0
    %4000 = vmatprep.mubr.bf16.mxu0 %v2769
    %4001 = vmatmul.mubr.bf16.gmra.mrb[0].mxu0 %v2768
    %v4002 = vpop.f32.mrb[0].mxu0
    %v4003 = vadd.f32 %v2898, %v4002
    %v4004 = vpop.f32.mrb[0].mxu0
    %v4005 = vpop.f32.mrb[0].mxu0
    %v4006 = vadd.f32 %v2898, %v4005
    %v4007 = vpop.f32.mrb[0].mxu0
    %4008 = vmatprep.mubr.bf16.mxu0 %v2772
    %4009 = vmatmul.mubr.bf16.gmra.mrb[0].mxu0 %v2771
    %v4010 = vpop.f32.mrb[0].mxu0
    %v4011 = vadd.f32 %v2898, %v4010
    %v4012 = vpop.f32.mrb[0].mxu0
    %v4013 = vpop.f32.mrb[0].mxu0
    %v4014 = vadd.f32 %v2898, %v4013
    %v4015 = vpop.f32.mrb[0].mxu0
    %4016 = vmatprep.mubr.bf16.mxu0 %v2775
    %4017 = vmatmul.mubr.bf16.gmra.mrb[0].mxu0 %v2774
    %v4018 = vpop.f32.mrb[0].mxu0
    %v4019 = vadd.f32 %v2898, %v4018
    %v4020 = vpop.f32.mrb[0].mxu0
    %v4021 = vpop.f32.mrb[0].mxu0
    %v4022 = vadd.f32 %v2898, %v4021
    %v4023 = vpop.f32.mrb[0].mxu0
    %4024 = vmatprep.mubr.bf16.mxu0 %v2778
    %4025 = vmatmul.mubr.bf16.gmra.mrb[0].mxu0 %v2777
    %v4026 = vpop.f32.mrb[0].mxu0
    %v4027 = vadd.f32 %v2898, %v4026
    %v4028 = vpop.f32.mrb[0].mxu0
    %v4029 = vpop.f32.mrb[0].mxu0
    %v4030 = vadd.f32 %v2898, %v4029
    %v4031 = vpop.f32.mrb[0].mxu0
    %4032 = vmatprep.mubr.bf16.mxu0 %v2781
    %4033 = vmatmul.mubr.bf16.gmra.mrb[0].mxu0 %v2780
    %v4034 = vpop.f32.mrb[0].mxu0
    %v4035 = vadd.f32 %v2898, %v4034
    %v4036 = vpop.f32.mrb[0].mxu0
    %v4037 = vpop.f32.mrb[0].mxu0
    %v4038 = vadd.f32 %v2898, %v4037
    %v4039 = vpop.f32.mrb[0].mxu0
    %4040 = vmatprep.mubr.bf16.mxu0 %v2784
    %4041 = vmatmul.mubr.bf16.gmra.mrb[0].mxu0 %v2783
    %v4042 = vpop.f32.mrb[0].mxu0
    %v4043 = vadd.f32 %v2898, %v4042
    %v4044 = vpop.f32.mrb[0].mxu0
    %v4045 = vpop.f32.mrb[0].mxu0
    %v4046 = vadd.f32 %v2898, %v4045
    %v4047 = vpop.f32.mrb[0].mxu0
    %4048 = vmatprep.mubr.bf16.mxu0 %v2787
    %4049 = vmatmul.mubr.bf16.gmra.mrb[0].mxu0 %v2786
    %v4050 = vpop.f32.mrb[0].mxu0
    %v4051 = vadd.f32 %v2898, %v4050
    %v4052 = vpop.f32.mrb[0].mxu0
    %v4053 = vpop.f32.mrb[0].mxu0
    %v4054 = vadd.f32 %v2898, %v4053
    %v4055 = vpop.f32.mrb[0].mxu0
    %4056 = vdwg.mxu0
    %4057 = vmatprep.subr.bf16.mxu0 0
    %4058 = vmatpush1.bf16.msra.mxu0 %v3192
    %4059 = vmatprep.subr.bf16.mxu0 0
    %4060 = vmatpush1.bf16.msra.mxu0 %v3195
    %4061 = vmatprep.subr.bf16.mxu0 0
    %4062 = vmatpush1.bf16.msra.mxu0 %v3198
    %4063 = vmatprep.subr.bf16.mxu0 0
    %4064 = vmatpush1.bf16.msra.mxu0 %v3201
    %4065 = vmatprep.subr.bf16.mxu0 0
    %4066 = vmatpush1.bf16.msra.mxu0 %v3204
    %4067 = vmatprep.subr.bf16.mxu0 0
    %4068 = vmatpush1.bf16.msra.mxu0 %v3207
    %4069 = vmatprep.subr.bf16.mxu0 0
    %4070 = vmatpush1.bf16.msra.mxu0 %v3210
    %4071 = vmatprep.subr.bf16.mxu0 0
    %4072 = vmatpush1.bf16.msra.mxu0 %v3213
    %4073 = vmatprep.subr.bf16.mxu0 0
    %4074 = vmatpush1.bf16.msra.mxu0 0
    %4075 = vmatprep.subr.bf16.mxu0 0
    %4076 = vmatpush1.bf16.msra.mxu0 0
    %4077 = vmatprep.subr.bf16.mxu0 0
    %4078 = vmatpush1.bf16.msra.mxu0 0
    %4079 = vmatprep.subr.bf16.mxu0 0
    %4080 = vmatpush1.bf16.msra.mxu0 0
    %4081 = vmatprep.subr.bf16.mxu0 0
    %4082 = vmatpush1.bf16.msra.mxu0 0
    %4083 = vmatprep.subr.bf16.mxu0 0
    %4084 = vmatpush1.bf16.msra.mxu0 0
    %4085 = vmatprep.subr.bf16.mxu0 0
    %4086 = vmatpush1.bf16.msra.mxu0 0
    %4087 = vmatprep.subr.bf16.mxu0 0
    %4088 = vmatpush1.bf16.msra.mxu0 0
    %4089 = vmatprep.mubr.bf16.mxu0 0
    %4090 = vmatmul.mubr.bf16.gmra.mrb[0].mxu0 %v2719
    %v4091 = vpop.f32.mrb[0].mxu0
    %v4092 = vadd.f32 %v3867, %v4091
    %v4093 = vpop.f32.mrb[0].mxu0
    %v4094 = vpop.f32.mrb[0].mxu0
    %v4095 = vadd.f32 %v3870, %v4094
    %v4096 = vpop.f32.mrb[0].mxu0
    %4097 = vmatprep.mubr.bf16.mxu0 0
    %4098 = vmatmul.mubr.bf16.gmra.mrb[0].mxu0 %v2722
    %v4099 = vpop.f32.mrb[0].mxu0
    %v4100 = vadd.f32 %v3875, %v4099
    %v4101 = vpop.f32.mrb[0].mxu0
    %v4102 = vpop.f32.mrb[0].mxu0
    %v4103 = vadd.f32 %v3878, %v4102
    %v4104 = vpop.f32.mrb[0].mxu0
    %4105 = vmatprep.mubr.bf16.mxu0 0
    %4106 = vmatmul.mubr.bf16.gmra.mrb[0].mxu0 %v2725
    %v4107 = vpop.f32.mrb[0].mxu0
    %v4108 = vadd.f32 %v3883, %v4107
    %v4109 = vpop.f32.mrb[0].mxu0
    %v4110 = vpop.f32.mrb[0].mxu0
    %v4111 = vadd.f32 %v3886, %v4110
    %v4112 = vpop.f32.mrb[0].mxu0
    %4113 = vmatprep.mubr.bf16.mxu0 0
    %4114 = vmatmul.mubr.bf16.gmra.mrb[0].mxu0 %v2728
    %v4115 = vpop.f32.mrb[0].mxu0
    %v4116 = vadd.f32 %v3891, %v4115
    %v4117 = vpop.f32.mrb[0].mxu0
    %v4118 = vpop.f32.mrb[0].mxu0
    %v4119 = vadd.f32 %v3894, %v4118
    %v4120 = vpop.f32.mrb[0].mxu0
    %4121 = vmatprep.mubr.bf16.mxu0 0
    %4122 = vmatmul.mubr.bf16.gmra.mrb[0].mxu0 %v2731
    %v4123 = vpop.f32.mrb[0].mxu0
    %v4124 = vadd.f32 %v3899, %v4123
    %v4125 = vpop.f32.mrb[0].mxu0
    %v4126 = vpop.f32.mrb[0].mxu0
    %v4127 = vadd.f32 %v3902, %v4126
    %v4128 = vpop.f32.mrb[0].mxu0
    %4129 = vmatprep.mubr.bf16.mxu0 0
    %4130 = vmatmul.mubr.bf16.gmra.mrb[0].mxu0 %v2734
    %v4131 = vpop.f32.mrb[0].mxu0
    %v4132 = vadd.f32 %v3907, %v4131
    %v4133 = vpop.f32.mrb[0].mxu0
    %v4134 = vpop.f32.mrb[0].mxu0
    %v4135 = vadd.f32 %v3910, %v4134
    %v4136 = vpop.f32.mrb[0].mxu0
    %4137 = vmatprep.mubr.bf16.mxu0 0
    %4138 = vmatmul.mubr.bf16.gmra.mrb[0].mxu0 %v2737
    %v4139 = vpop.f32.mrb[0].mxu0
    %v4140 = vadd.f32 %v3915, %v4139
    %v4141 = vpop.f32.mrb[0].mxu0
    %v4142 = vpop.f32.mrb[0].mxu0
    %v4143 = vadd.f32 %v3918, %v4142
    %v4144 = vpop.f32.mrb[0].mxu0
    %4145 = vmatprep.mubr.bf16.mxu0 0
    %4146 = vmatmul.mubr.bf16.gmra.mrb[0].mxu0 %v2740
    %v4147 = vpop.f32.mrb[0].mxu0
    %v4148 = vadd.f32 %v3923, %v4147
    %v4149 = vpop.f32.mrb[0].mxu0
    %v4150 = vpop.f32.mrb[0].mxu0
    %v4151 = vadd.f32 %v3926, %v4150
    %v4152 = vpop.f32.mrb[0].mxu0
    %4153 = vmatprep.mubr.bf16.mxu0 0
    %4154 = vmatmul.mubr.bf16.gmra.mrb[0].mxu0 %v2743
    %v4155 = vpop.f32.mrb[0].mxu0
    %v4156 = vadd.f32 %v3931, %v4155
    %v4157 = vpop.f32.mrb[0].mxu0
    %v4158 = vpop.f32.mrb[0].mxu0
    %v4159 = vadd.f32 %v3934, %v4158
    %v4160 = vpop.f32.mrb[0].mxu0
    %4161 = vmatprep.mubr.bf16.mxu0 0
    %4162 = vmatmul.mubr.bf16.gmra.mrb[0].mxu0 %v2746
    %v4163 = vpop.f32.mrb[0].mxu0
    %v4164 = vadd.f32 %v3939, %v4163
    %v4165 = vpop.f32.mrb[0].mxu0
    %v4166 = vpop.f32.mrb[0].mxu0
    %v4167 = vadd.f32 %v3942, %v4166
    %v4168 = vpop.f32.mrb[0].mxu0
    %4169 = vmatprep.mubr.bf16.mxu0 0
    %4170 = vmatmul.mubr.bf16.gmra.mrb[0].mxu0 %v2749
    %v4171 = vpop.f32.mrb[0].mxu0
    %v4172 = vadd.f32 %v3947, %v4171
    %v4173 = vpop.f32.mrb[0].mxu0
    %v4174 = vpop.f32.mrb[0].mxu0
    %v4175 = vadd.f32 %v3950, %v4174
    %v4176 = vpop.f32.mrb[0].mxu0
    %4177 = vmatprep.mubr.bf16.mxu0 0
    %4178 = vmatmul.mubr.bf16.gmra.mrb[0].mxu0 %v2752
    %v4179 = vpop.f32.mrb[0].mxu0
    %v4180 = vadd.f32 %v3955, %v4179
    %v4181 = vpop.f32.mrb[0].mxu0
    %v4182 = vpop.f32.mrb[0].mxu0
    %v4183 = vadd.f32 %v3958, %v4182
    %v4184 = vpop.f32.mrb[0].mxu0
    %4185 = vmatprep.mubr.bf16.mxu0 0
    %4186 = vmatmul.mubr.bf16.gmra.mrb[0].mxu0 %v2755
    %v4187 = vpop.f32.mrb[0].mxu0
    %v4188 = vadd.f32 %v3963, %v4187
    %v4189 = vpop.f32.mrb[0].mxu0
    %v4190 = vpop.f32.mrb[0].mxu0
    %v4191 = vadd.f32 %v3966, %v4190
    %v4192 = vpop.f32.mrb[0].mxu0
    %4193 = vmatprep.mubr.bf16.mxu0 0
    %4194 = vmatmul.mubr.bf16.gmra.mrb[0].mxu0 %v2758
    %v4195 = vpop.f32.mrb[0].mxu0
    %v4196 = vadd.f32 %v3971, %v4195
    %v4197 = vpop.f32.mrb[0].mxu0
    %v4198 = vpop.f32.mrb[0].mxu0
    %v4199 = vadd.f32 %v3974, %v4198
    %v4200 = vpop.f32.mrb[0].mxu0
    %4201 = vmatprep.mubr.bf16.mxu0 0
    %4202 = vmatmul.mubr.bf16.gmra.mrb[0].mxu0 %v2761
    %v4203 = vpop.f32.mrb[0].mxu0
    %v4204 = vadd.f32 %v3979, %v4203
    %v4205 = vpop.f32.mrb[0].mxu0
    %v4206 = vpop.f32.mrb[0].mxu0
    %v4207 = vadd.f32 %v3982, %v4206
    %v4208 = vpop.f32.mrb[0].mxu0
    %4209 = vmatprep.mubr.bf16.mxu0 0
    %4210 = vmatmul.mubr.bf16.gmra.mrb[0].mxu0 %v2764
    %v4211 = vpop.f32.mrb[0].mxu0
    %v4212 = vadd.f32 %v3987, %v4211
    %v4213 = vpop.f32.mrb[0].mxu0
    %v4214 = vpop.f32.mrb[0].mxu0
    %v4215 = vadd.f32 %v3990, %v4214
    %v4216 = vpop.f32.mrb[0].mxu0
    %4217 = vmatprep.mubr.bf16.mxu0 0
    %4218 = vmatmul.mubr.bf16.gmra.mrb[0].mxu0 %v2767
    %v4219 = vpop.f32.mrb[0].mxu0
    %v4220 = vadd.f32 %v3995, %v4219
    %v4221 = vpop.f32.mrb[0].mxu0
    %v4222 = vpop.f32.mrb[0].mxu0
    %v4223 = vadd.f32 %v3998, %v4222
    %v4224 = vpop.f32.mrb[0].mxu0
    %4225 = vmatprep.mubr.bf16.mxu0 0
    %4226 = vmatmul.mubr.bf16.gmra.mrb[0].mxu0 %v2770
    %v4227 = vpop.f32.mrb[0].mxu0
    %v4228 = vadd.f32 %v4003, %v4227
    %v4229 = vpop.f32.mrb[0].mxu0
    %v4230 = vpop.f32.mrb[0].mxu0
    %v4231 = vadd.f32 %v4006, %v4230
    %v4232 = vpop.f32.mrb[0].mxu0
    %4233 = vmatprep.mubr.bf16.mxu0 0
    %4234 = vmatmul.mubr.bf16.gmra.mrb[0].mxu0 %v2773
    %v4235 = vpop.f32.mrb[0].mxu0
    %v4236 = vadd.f32 %v4011, %v4235
    %v4237 = vpop.f32.mrb[0].mxu0
    %v4238 = vpop.f32.mrb[0].mxu0
    %v4239 = vadd.f32 %v4014, %v4238
    %v4240 = vpop.f32.mrb[0].mxu0
    %4241 = vmatprep.mubr.bf16.mxu0 0
    %4242 = vmatmul.mubr.bf16.gmra.mrb[0].mxu0 %v2776
    %v4243 = vpop.f32.mrb[0].mxu0
    %v4244 = vadd.f32 %v4019, %v4243
    %v4245 = vpop.f32.mrb[0].mxu0
    %v4246 = vpop.f32.mrb[0].mxu0
    %v4247 = vadd.f32 %v4022, %v4246
    %v4248 = vpop.f32.mrb[0].mxu0
    %4249 = vmatprep.mubr.bf16.mxu0 0
    %4250 = vmatmul.mubr.bf16.gmra.mrb[0].mxu0 %v2779
    %v4251 = vpop.f32.mrb[0].mxu0
    %v4252 = vadd.f32 %v4027, %v4251
    %v4253 = vpop.f32.mrb[0].mxu0
    %v4254 = vpop.f32.mrb[0].mxu0
    %v4255 = vadd.f32 %v4030, %v4254
    %v4256 = vpop.f32.mrb[0].mxu0
    %4257 = vmatprep.mubr.bf16.mxu0 0
    %4258 = vmatmul.mubr.bf16.gmra.mrb[0].mxu0 %v2782
    %v4259 = vpop.f32.mrb[0].mxu0
    %v4260 = vadd.f32 %v4035, %v4259
    %v4261 = vpop.f32.mrb[0].mxu0
    %v4262 = vpop.f32.mrb[0].mxu0
    %v4263 = vadd.f32 %v4038, %v4262
    %v4264 = vpop.f32.mrb[0].mxu0
    %4265 = vmatprep.mubr.bf16.mxu0 0
    %4266 = vmatmul.mubr.bf16.gmra.mrb[0].mxu0 %v2785
    %v4267 = vpop.f32.mrb[0].mxu0
    %v4268 = vadd.f32 %v4043, %v4267
    %v4269 = vpop.f32.mrb[0].mxu0
    %v4270 = vpop.f32.mrb[0].mxu0
    %v4271 = vadd.f32 %v4046, %v4270
    %v4272 = vpop.f32.mrb[0].mxu0
    %4273 = vmatprep.mubr.bf16.mxu0 0
    %4274 = vmatmul.mubr.bf16.gmra.mrb[0].mxu0 %v2788
    %v4275 = vpop.f32.mrb[0].mxu0
    %v4276 = vadd.f32 %v4051, %v4275
    %v4277 = vpop.f32.mrb[0].mxu0
    %v4278 = vpop.f32.mrb[0].mxu0
    %v4279 = vadd.f32 %v4054, %v4278
    %v4280 = vpop.f32.mrb[0].mxu0
    %4281 = vdwg.mxu0
    %4282 = vst [vmem:[#allocation4] sm:$0xff] %v3594
    %4283 = vst [vmem:[#allocation4 + $0x8] sm:$0xff] %v3596
    %4284 = vst [vmem:[#allocation4 + $0x10] sm:$0xff] %v4092
    %4285 = vst [vmem:[#allocation4 + $0x18] sm:$0xff] %v3598
    %4286 = vst [vmem:[#allocation4 + $0x20] sm:$0xff] %v3600
    %4287 = vst [vmem:[#allocation4 + $0x28] sm:$0xff] %v4095
    %4288 = vst [vmem:[#allocation4 + $0x30] sm:$0xff] %v3604
    %4289 = vst [vmem:[#allocation4 + $0x38] sm:$0xff] %v3606
    %4290 = vst [vmem:[#allocation4 + $0x40] sm:$0xff] %v4100
    %4291 = vst [vmem:[#allocation4 + $0x48] sm:$0xff] %v3608
    %4292 = vst [vmem:[#allocation4 + $0x50] sm:$0xff] %v3610
    %4293 = vst [vmem:[#allocation4 + $0x58] sm:$0xff] %v4103
    %4294 = vst [vmem:[#allocation4 + $0x60] sm:$0xff] %v3614
    %4295 = vst [vmem:[#allocation4 + $0x68] sm:$0xff] %v3616
    %4296 = vst [vmem:[#allocation4 + $0x70] sm:$0xff] %v4108
    %4297 = vst [vmem:[#allocation4 + $0x78] sm:$0xff] %v3618
    %4298 = vst [vmem:[#allocation4 + $0x80] sm:$0xff] %v3620
    %4299 = vst [vmem:[#allocation4 + $0x88] sm:$0xff] %v4111
    %4300 = vst [vmem:[#allocation4 + $0x90] sm:$0xff] %v3624
    %4301 = vst [vmem:[#allocation4 + $0x98] sm:$0xff] %v3626
    %4302 = vst [vmem:[#allocation4 + $0xa0] sm:$0xff] %v4116
    %4303 = vst [vmem:[#allocation4 + $0xa8] sm:$0xff] %v3628
    %4304 = vst [vmem:[#allocation4 + $0xb0] sm:$0xff] %v3630
    %4305 = vst [vmem:[#allocation4 + $0xb8] sm:$0xff] %v4119
    %4306 = vst [vmem:[#allocation4 + $0xc0] sm:$0xff] %v3634
    %4307 = vst [vmem:[#allocation4 + $0xc8] sm:$0xff] %v3636
    %4308 = vst [vmem:[#allocation4 + $0xd0] sm:$0xff] %v4124
    %4309 = vst [vmem:[#allocation4 + $0xd8] sm:$0xff] %v3638
    %4310 = vst [vmem:[#allocation4 + $0xe0] sm:$0xff] %v3640
    %4311 = vst [vmem:[#allocation4 + $0xe8] sm:$0xff] %v4127
    %4312 = vst [vmem:[#allocation4 + $0xf0] sm:$0xff] %v3644
    %4313 = vst [vmem:[#allocation4 + $0xf8] sm:$0xff] %v3646
    %4314 = vst [vmem:[#allocation4 + $0x100] sm:$0xff] %v4132
    %4315 = vst [vmem:[#allocation4 + $0x108] sm:$0xff] %v3648
    %4316 = vst [vmem:[#allocation4 + $0x110] sm:$0xff] %v3650
    %4317 = vst [vmem:[#allocation4 + $0x118] sm:$0xff] %v4135
    %4318 = vst [vmem:[#allocation4 + $0x120] sm:$0xff] %v3654
    %4319 = vst [vmem:[#allocation4 + $0x128] sm:$0xff] %v3656
    %4320 = vst [vmem:[#allocation4 + $0x130] sm:$0xff] %v4140
    %4321 = vst [vmem:[#allocation4 + $0x138] sm:$0xff] %v3658
    %4322 = vst [vmem:[#allocation4 + $0x140] sm:$0xff] %v3660
    %4323 = vst [vmem:[#allocation4 + $0x148] sm:$0xff] %v4143
    %4324 = vst [vmem:[#allocation4 + $0x150] sm:$0xff] %v3664
    %4325 = vst [vmem:[#allocation4 + $0x158] sm:$0xff] %v3666
    %4326 = vst [vmem:[#allocation4 + $0x160] sm:$0xff] %v4148
    %4327 = vst [vmem:[#allocation4 + $0x168] sm:$0xff] %v3668
    %4328 = vst [vmem:[#allocation4 + $0x170] sm:$0xff] %v3670
    %4329 = vst [vmem:[#allocation4 + $0x178] sm:$0xff] %v4151
    %4330 = vst [vmem:[#allocation4 + $0x180] sm:$0xff] %v3674
    %4331 = vst [vmem:[#allocation4 + $0x188] sm:$0xff] %v3676
    %4332 = vst [vmem:[#allocation4 + $0x190] sm:$0xff] %v4156
    %4333 = vst [vmem:[#allocation4 + $0x198] sm:$0xff] %v3678
    %4334 = vst [vmem:[#allocation4 + $0x1a0] sm:$0xff] %v3680
    %4335 = vst [vmem:[#allocation4 + $0x1a8] sm:$0xff] %v4159
    %4336 = vst [vmem:[#allocation4 + $0x1b0] sm:$0xff] %v3684
    %4337 = vst [vmem:[#allocation4 + $0x1b8] sm:$0xff] %v3686
    %4338 = vst [vmem:[#allocation4 + $0x1c0] sm:$0xff] %v4164
    %4339 = vst [vmem:[#allocation4 + $0x1c8] sm:$0xff] %v3688
    %4340 = vst [vmem:[#allocation4 + $0x1d0] sm:$0xff] %v3690
    %4341 = vst [vmem:[#allocation4 + $0x1d8] sm:$0xff] %v4167
    %4342 = vst [vmem:[#allocation4 + $0x1e0] sm:$0xff] %v3694
    %4343 = vst [vmem:[#allocation4 + $0x1e8] sm:$0xff] %v3696
    %4344 = vst [vmem:[#allocation4 + $0x1f0] sm:$0xff] %v4172
    %4345 = vst [vmem:[#allocation4 + $0x1f8] sm:$0xff] %v3698
    %4346 = vst [vmem:[#allocation4 + $0x200] sm:$0xff] %v3700
    %4347 = vst [vmem:[#allocation4 + $0x208] sm:$0xff] %v4175
    %4348 = vst [vmem:[#allocation4 + $0x210] sm:$0xff] %v3704
    %4349 = vst [vmem:[#allocation4 + $0x218] sm:$0xff] %v3706
    %4350 = vst [vmem:[#allocation4 + $0x220] sm:$0xff] %v4180
    %4351 = vst [vmem:[#allocation4 + $0x228] sm:$0xff] %v3708
    %4352 = vst [vmem:[#allocation4 + $0x230] sm:$0xff] %v3710
    %4353 = vst [vmem:[#allocation4 + $0x238] sm:$0xff] %v4183
    %4354 = vst [vmem:[#allocation4 + $0x240] sm:$0xff] %v3714
    %4355 = vst [vmem:[#allocation4 + $0x248] sm:$0xff] %v3716
    %4356 = vst [vmem:[#allocation4 + $0x250] sm:$0xff] %v4188
    %4357 = vst [vmem:[#allocation4 + $0x258] sm:$0xff] %v3718
    %4358 = vst [vmem:[#allocation4 + $0x260] sm:$0xff] %v3720
    %4359 = vst [vmem:[#allocation4 + $0x268] sm:$0xff] %v4191
    %4360 = vst [vmem:[#allocation4 + $0x270] sm:$0xff] %v3724
    %4361 = vst [vmem:[#allocation4 + $0x278] sm:$0xff] %v3726
    %4362 = vst [vmem:[#allocation4 + $0x280] sm:$0xff] %v4196
    %4363 = vst [vmem:[#allocation4 + $0x288] sm:$0xff] %v3728
    %4364 = vst [vmem:[#allocation4 + $0x290] sm:$0xff] %v3730
    %4365 = vst [vmem:[#allocation4 + $0x298] sm:$0xff] %v4199
    %4366 = vst [vmem:[#allocation4 + $0x2a0] sm:$0xff] %v3734
    %4367 = vst [vmem:[#allocation4 + $0x2a8] sm:$0xff] %v3736
    %4368 = vst [vmem:[#allocation4 + $0x2b0] sm:$0xff] %v4204
    %4369 = vst [vmem:[#allocation4 + $0x2b8] sm:$0xff] %v3738
    %4370 = vst [vmem:[#allocation4 + $0x2c0] sm:$0xff] %v3740
    %4371 = vst [vmem:[#allocation4 + $0x2c8] sm:$0xff] %v4207
    %4372 = vst [vmem:[#allocation4 + $0x2d0] sm:$0xff] %v3744
    %4373 = vst [vmem:[#allocation4 + $0x2d8] sm:$0xff] %v3746
    %4374 = vst [vmem:[#allocation4 + $0x2e0] sm:$0xff] %v4212
    %4375 = vst [vmem:[#allocation4 + $0x2e8] sm:$0xff] %v3748
    %4376 = vst [vmem:[#allocation4 + $0x2f0] sm:$0xff] %v3750
    %4377 = vst [vmem:[#allocation4 + $0x2f8] sm:$0xff] %v4215
    %4378 = vst [vmem:[#allocation4 + $0x300] sm:$0xff] %v3754
    %4379 = vst [vmem:[#allocation4 + $0x308] sm:$0xff] %v3756
    %4380 = vst [vmem:[#allocation4 + $0x310] sm:$0xff] %v4220
    %4381 = vst [vmem:[#allocation4 + $0x318] sm:$0xff] %v3758
    %4382 = vst [vmem:[#allocation4 + $0x320] sm:$0xff] %v3760
    %4383 = vst [vmem:[#allocation4 + $0x328] sm:$0xff] %v4223
    %4384 = vst [vmem:[#allocation4 + $0x330] sm:$0xff] %v3764
    %4385 = vst [vmem:[#allocation4 + $0x338] sm:$0xff] %v3766
    %4386 = vst [vmem:[#allocation4 + $0x340] sm:$0xff] %v4228
    %4387 = vst [vmem:[#allocation4 + $0x348] sm:$0xff] %v3768
    %4388 = vst [vmem:[#allocation4 + $0x350] sm:$0xff] %v3770
    %4389 = vst [vmem:[#allocation4 + $0x358] sm:$0xff] %v4231
    %4390 = vst [vmem:[#allocation4 + $0x360] sm:$0xff] %v3774
    %4391 = vst [vmem:[#allocation4 + $0x368] sm:$0xff] %v3776
    %4392 = vst [vmem:[#allocation4 + $0x370] sm:$0xff] %v4236
    %4393 = vst [vmem:[#allocation4 + $0x378] sm:$0xff] %v3778
    %4394 = vst [vmem:[#allocation4 + $0x380] sm:$0xff] %v3780
    %4395 = vst [vmem:[#allocation4 + $0x388] sm:$0xff] %v4239
    %4396 = vst [vmem:[#allocation4 + $0x390] sm:$0xff] %v3784
    %4397 = vst [vmem:[#allocation4 + $0x398] sm:$0xff] %v3786
    %4398 = vst [vmem:[#allocation4 + $0x3a0] sm:$0xff] %v4244
    %4399 = vst [vmem:[#allocation4 + $0x3a8] sm:$0xff] %v3788
    %4400 = vst [vmem:[#allocation4 + $0x3b0] sm:$0xff] %v3790
    %4401 = vst [vmem:[#allocation4 + $0x3b8] sm:$0xff] %v4247
    %4402 = vst [vmem:[#allocation4 + $0x3c0] sm:$0xff] %v3794
    %4403 = vst [vmem:[#allocation4 + $0x3c8] sm:$0xff] %v3796
    %4404 = vst [vmem:[#allocation4 + $0x3d0] sm:$0xff] %v4252
    %4405 = vst [vmem:[#allocation4 + $0x3d8] sm:$0xff] %v3798
    %4406 = vst [vmem:[#allocation4 + $0x3e0] sm:$0xff] %v3800
    %4407 = vst [vmem:[#allocation4 + $0x3e8] sm:$0xff] %v4255
    %4408 = vst [vmem:[#allocation4 + $0x3f0] sm:$0xff] %v3804
    %4409 = vst [vmem:[#allocation4 + $0x3f8] sm:$0xff] %v3806
    %4410 = vst [vmem:[#allocation4 + $0x400] sm:$0xff] %v4260
    %4411 = vst [vmem:[#allocation4 + $0x408] sm:$0xff] %v3808
    %4412 = vst [vmem:[#allocation4 + $0x410] sm:$0xff] %v3810
    %4413 = vst [vmem:[#allocation4 + $0x418] sm:$0xff] %v4263
    %4414 = vst [vmem:[#allocation4 + $0x420] sm:$0xff] %v3814
    %4415 = vst [vmem:[#allocation4 + $0x428] sm:$0xff] %v3816
    %4416 = vst [vmem:[#allocation4 + $0x430] sm:$0xff] %v4268
    %4417 = vst [vmem:[#allocation4 + $0x438] sm:$0xff] %v3818
    %4418 = vst [vmem:[#allocation4 + $0x440] sm:$0xff] %v3820
    %4419 = vst [vmem:[#allocation4 + $0x448] sm:$0xff] %v4271
    %4420 = vst [vmem:[#allocation4 + $0x450] sm:$0xff] %v3824
    %4421 = vst [vmem:[#allocation4 + $0x458] sm:$0xff] %v3826
    %4422 = vst [vmem:[#allocation4 + $0x460] sm:$0xff] %v4276
    %4423 = vst [vmem:[#allocation4 + $0x468] sm:$0xff] %v3828
    %4424 = vst [vmem:[#allocation4 + $0x470] sm:$0xff] %v3830
    %4425 = vst [vmem:[#allocation4 + $0x478] sm:$0xff] %v4279
    // Predicated region
    $region22: #{ait_mha_forward.1} parent=1 // pred_check
      _
    $region23: #{ait_mha_forward.1} parent=1 // pred_check_branch
      %4427 = sbr.rel (0) target = $region25
    $region24: #{ait_mha_forward.1} parent=1 // pred_region
      %s4429 = ssub.s32 18432, 18432
      %4430 = vsyncadd [#allocation5], %s4429
      %s4431 = sshll.u32 [#allocation4], 4
      %s4432 = int_to_ptr.vmem [resolvable:$true] %s4431
      %4437 = dma.vmem_to_hbm [thread:$0]  %s4432, 18432, %s5, [#allocation5], 384, 384, 24
    $region25: #{ait_mha_forward.1} parent=1 // pred_fallthru
      _
    // Predicated region
    $region26: #{ait_mha_forward.1} parent=1 // pred_check
      _
    $region27: #{ait_mha_forward.1} parent=1 // pred_check_branch
      %4439 = sbr.rel (0) target = $region29
    $region28: #{ait_mha_forward.1} parent=1 // pred_region
      %4440 = dma.done [#allocation5], 18432
    $region29: #{ait_mha_forward.1} parent=1 // pred_fallthru
      _
    %4441 = vsyncpa [#allocation5], 1

</llo_original>
